<compile_context>
chip_gen: v5e
topology: v5e:2x2
jax: 0.10.0
libtpu: 0.0.40
codegen_flags: <defaults>
</compile_context>

<pallas_src>
import functools

import jax
import jax.numpy as jnp
from jax import lax
from jax.experimental import pallas as pl
from jax.experimental.pallas import tpu as pltpu

HIDDEN = 768
NUM_CLASSES = 4
PAD_OUT = 128          # lane-dense padded class dimension (full vreg width)
VOCAB = 32             # stand-in vocabulary size
VOCAB_PAD = 128        # vocab padded to one lane width for the one-hot matmul
BN_EPS = 1e-5
NEG_BIG = -1e30        # bias for phantom logit lanes (exp underflows to 0)


def _head_kernel(ids_ref, emb_ref, wp_ref, bp_ref, w1_ref, b1_ref,
                 w3_ref, b3_ref, out_ref, *, tanh_in_bf16):
    tb = out_ref.shape[0]

    # ---- fused CLS-token gather: one-hot(ids) @ emb (MXU; no dynamic gather) ----
    ids = ids_ref[...]                                               # (tb, 1) int32
    onehot = (ids == lax.broadcasted_iota(jnp.int32, (tb, VOCAB_PAD), 1)
              ).astype(jnp.bfloat16)                                 # (tb, 128)
    cls = jnp.dot(onehot, emb_ref[...],
                  preferred_element_type=jnp.float32)                # (tb, 768)

    # ---- gilberto pooler stand-in: dense(768,768) + tanh ----
    pre = jnp.dot(cls.astype(jnp.bfloat16), wp_ref[...],
                  preferred_element_type=jnp.float32) + bp_ref[...]
    if tanh_in_bf16:
        pooled = jnp.tanh(pre.astype(jnp.bfloat16))                  # bf16 EUP (v6e/v7x)
    else:
        pooled = jnp.tanh(pre).astype(jnp.bfloat16)                  # f32 EUP (v5e)

    # ---- linear1 with BatchNorm1d (eval) folded in, then ReLU ----
    h = jnp.dot(pooled, w1_ref[...],
                preferred_element_type=jnp.float32) + b1_ref[...]
    # dropout(p=0.1) in eval mode == identity
    h = jnp.maximum(h, 0.0)

    # ---- linear3: real classes duplicated into lanes 0..3 and 4..7,
    #      phantom lanes 8..127 carry bias -1e30 ----
    logits = jnp.dot(h.astype(jnp.bfloat16), w3_ref[...],
                     preferred_element_type=jnp.float32) + b3_ref[...]  # (tb, 128)

    # ---- softmax over dim=1 (exact reciprocal; denominator over real lanes) ----
    lane = lax.broadcasted_iota(jnp.int32, logits.shape, 1)
    m = jnp.max(logits, axis=1, keepdims=True)
    e = jnp.exp(logits - m)                                          # phantom -> 0
    denom = jnp.sum(jnp.where(lane < NUM_CLASSES, e, 0.0),
                    axis=1, keepdims=True)
    probs = e / denom

    # Lanes 0..3 -> logits, lanes 4..7 -> probs (from the duplicated columns),
    # lanes 8..127 -> ~0.  Single unmasked 128-lane store.
    out_ref[...] = jnp.where(lane < NUM_CLASSES, logits, probs)


def _round_up(x, m):
    return (x + m - 1) // m * m


def _cdiv(a, b):
    return (a + b - 1) // b


def _device_traits():
    try:
        kind = jax.devices()[0].device_kind.lower()
    except Exception:
        kind = ""
    is_v5 = "v5" in kind
    is_v7 = "v7" in kind
    batch_tile = 256 if is_v5 else 512     # v5e: 16 MiB scoped VMEM default
    tanh_bf16 = not is_v5                  # v5e EUP has no bf16
    return batch_tile, tanh_bf16, is_v7


def gilberto_head(cls_ids, kparams, batch_tile=None):
    """cls_ids: [B] int32 token id of the first (CLS) position.

    Returns (logits [B,4], probs [B,4])."""
    B = cls_ids.shape[0]
    default_tile, tanh_bf16, two_cores = _device_traits()
    if batch_tile is None:
        batch_tile = default_tile

    # Balanced batch tiles, multiple of 16 (bf16 sublane packing); keep
    # grid >= 2 on v7x for large B so both TensorCores engage.
    n_tiles = max(1, _cdiv(B, batch_tile))
    if two_cores and n_tiles < 2 and B >= 32:
        n_tiles = 2
    tb = _round_up(_cdiv(B, n_tiles), 16)
    b_pad = _round_up(B, tb)
    grid = (b_pad // tb,)

    ids = jnp.zeros((b_pad, 1), jnp.int32).at[:B, 0].set(cls_ids.astype(jnp.int32))

    def wspec(shape):
        # Constant index_map -> weights / emb table stay VMEM-resident across
        # grid steps.
        # TODO(synk): pipeline_mode=pl.Buffered(1) would drop their dead second
        # pipeline buffer (~2.5 MiB VMEM) for extra headroom at bigger tiles.
        return pl.BlockSpec(shape, lambda i: (0, 0))

    kernel = functools.partial(_head_kernel, tanh_in_bf16=tanh_bf16)

    out = pl.pallas_call(
        kernel,
        out_shape=jax.ShapeDtypeStruct((b_pad, PAD_OUT), jnp.float32),
        grid=grid,
        in_specs=[
            pl.BlockSpec((tb, 1), lambda i: (i, 0)),        # CLS token ids (int32)
            wspec((VOCAB_PAD, HIDDEN)),                     # embedding table (bf16)
            wspec((HIDDEN, HIDDEN)),                        # pooler W (bf16)
            wspec((1, HIDDEN)),                             # pooler b (f32)
            wspec((HIDDEN, HIDDEN)),                        # linear1 W, BN folded (bf16)
            wspec((1, HIDDEN)),                             # linear1 b, BN folded (f32)
            wspec((HIDDEN, PAD_OUT)),                       # linear3 W dup+padded (bf16)
            wspec((1, PAD_OUT)),                            # linear3 b dup+padded (f32)
        ],
        out_specs=pl.BlockSpec((tb, PAD_OUT), lambda i: (i, 0)),
        compiler_params=pltpu.CompilerParams(
            dimension_semantics=("parallel",)),
    )(ids, kparams["emb_p"], kparams["wp"], kparams["bp"],
      kparams["w1f"], kparams["b1f"], kparams["w3p"], kparams["b3p"])

    logits = out[:B, :NUM_CLASSES]
    probs = out[:B, NUM_CLASSES:2 * NUM_CLASSES]
    return logits, probs


def make_params(key):
    ks = jax.random.split(key, 4)

    def lin(k, fan_in, fan_out):
        bound = 1.0 / jnp.sqrt(fan_in)
        kw, kb = jax.random.split(k)
        w = jax.random.uniform(kw, (fan_in, fan_out), jnp.float32, -bound, bound)
        b = jax.random.uniform(kb, (1, fan_out), jnp.float32, -bound, bound)
        return w, b

    wp, bp = lin(ks[0], HIDDEN, HIDDEN)       # pooler dense
    w1, b1 = lin(ks[1], HIDDEN, HIDDEN)       # linear1
    w3, b3 = lin(ks[2], HIDDEN, NUM_CLASSES)  # linear3

    return dict(
        wp=wp, bp=bp,
        w1=w1, b1=b1,
        bn_gamma=jnp.ones((1, HIDDEN), jnp.float32),
        bn_beta=jnp.zeros((1, HIDDEN), jnp.float32),
        bn_mean=jnp.zeros((1, HIDDEN), jnp.float32),
        bn_var=jnp.ones((1, HIDDEN), jnp.float32),
        w3=w3, b3=b3,
        # stand-in token embedding table (small synthetic vocab)
        emb=jax.random.normal(ks[3], (VOCAB, HIDDEN), jnp.float32) * 0.02,
    )


def prepare_kernel_params(params):
    """One-time param prep: fold eval-mode BN into linear1, duplicate + pad
    linear3 to 128 lanes, pad the emb table to 128 rows, cast big matrices to
    bf16."""
    s = params["bn_gamma"] * jax.lax.rsqrt(params["bn_var"] + BN_EPS)  # [1,768]
    w1f = params["w1"] * s                                    # scale output cols
    b1f = (params["b1"] - params["bn_mean"]) * s + params["bn_beta"]

    pad = PAD_OUT - 2 * NUM_CLASSES
    w3p = jnp.concatenate(
        [params["w3"], params["w3"], jnp.zeros((HIDDEN, pad), jnp.float32)], axis=1)
    b3p = jnp.concatenate(
        [params["b3"], params["b3"], jnp.full((1, pad), NEG_BIG, jnp.float32)], axis=1)

    emb_p = jnp.zeros((VOCAB_PAD, HIDDEN), jnp.float32).at[:VOCAB].set(params["emb"])

    return dict(
        emb_p=emb_p.astype(jnp.bfloat16),
        wp=params["wp"].astype(jnp.bfloat16),
        bp=params["bp"],
        w1f=w1f.astype(jnp.bfloat16),
        b1f=b1f,
        w3p=w3p.astype(jnp.bfloat16),
        b3p=b3p,
    )


def model_forward(input_ids, attention_mask, kparams):
    # TODO(synk): the pretrained gilberto (CamemBERT) encoder is replaced by a
    # CLS-token embedding lookup + pooler stand-in; attention_mask is consumed
    # by the real encoder only.
    del attention_mask
    return gilberto_head(input_ids[:, 0], kparams)


def reference_forward(input_ids, params):
    """Pure-JAX f32 reference of the same forward (for correctness check)."""
    cls = params["emb"][input_ids[:, 0]]
    pooled = jnp.tanh(cls @ params["wp"] + params["bp"])
    h = pooled @ params["w1"] + params["b1"]
    s = params["bn_gamma"] * jax.lax.rsqrt(params["bn_var"] + BN_EPS)
    h = (h - params["bn_mean"]) * s + params["bn_beta"]
    h = jnp.maximum(h, 0.0)                                   # dropout eval = identity
    logits = h @ params["w3"] + params["b3"]
    probs = jax.nn.softmax(logits, axis=1)
    return logits, probs


if __name__ == "__main__":
    key = jax.random.PRNGKey(0)
    kp, kid = jax.random.split(key)
    params = make_params(kp)
    kparams = prepare_kernel_params(params)

    B, SEQ = 2, 8
    input_ids = jax.random.randint(kid, (B, SEQ), 0, VOCAB, dtype=jnp.int32)
    attention_mask = jnp.ones((B, SEQ), dtype=jnp.int32)

    logits, probs = model_forward(input_ids, attention_mask, kparams)
    jax.block_until_ready((logits, probs))

    assert logits.shape == (B, NUM_CLASSES)
    assert probs.shape == (B, NUM_CLASSES)
    assert jnp.allclose(jnp.sum(probs, axis=1), 1.0, atol=1e-4)

    ref_logits, ref_probs = reference_forward(input_ids, params)
    assert jnp.allclose(logits, ref_logits, atol=1e-2)
    assert jnp.allclose(probs, ref_probs, atol=1e-2)

    print("KERNEL_OK")
</pallas_src>

<mosaic_0001>
module attributes {stable_mosaic.version = 11 : i64} {
  func.func @_head_kernel(%arg0: i32, %arg1: memref<16x1xi32, #tpu.memory_space<vmem>>, %arg2: memref<128x768xbf16, #tpu.memory_space<vmem>>, %arg3: memref<768x768xbf16, #tpu.memory_space<vmem>>, %arg4: memref<1x768xf32, #tpu.memory_space<vmem>>, %arg5: memref<768x768xbf16, #tpu.memory_space<vmem>>, %arg6: memref<1x768xf32, #tpu.memory_space<vmem>>, %arg7: memref<768x128xbf16, #tpu.memory_space<vmem>>, %arg8: memref<1x128xf32, #tpu.memory_space<vmem>>, %arg9: memref<16x128xf32, #tpu.memory_space<vmem>>) attributes {dimension_semantics = [#tpu.dimension_semantics<parallel>], iteration_bounds = array<i64: 1>, scalar_prefetch = 0 : i64, scratch_operands = 0 : i64, tpu.core_type = #tpu.core_type<tc>, window_params = [{transform_indices = @transform_0, window_bounds = array<i64: 16, 1>}, {pipeline_mode = #tpu.pipeline_mode<synchronous>, transform_indices = @transform_1, window_bounds = array<i64: 128, 768>}, {pipeline_mode = #tpu.pipeline_mode<synchronous>, transform_indices = @transform_2, window_bounds = array<i64: 768, 768>}, {pipeline_mode = #tpu.pipeline_mode<synchronous>, transform_indices = @transform_3, window_bounds = array<i64: 1, 768>}, {pipeline_mode = #tpu.pipeline_mode<synchronous>, transform_indices = @transform_4, window_bounds = array<i64: 768, 768>}, {pipeline_mode = #tpu.pipeline_mode<synchronous>, transform_indices = @transform_5, window_bounds = array<i64: 1, 768>}, {pipeline_mode = #tpu.pipeline_mode<synchronous>, transform_indices = @transform_6, window_bounds = array<i64: 768, 128>}, {pipeline_mode = #tpu.pipeline_mode<synchronous>, transform_indices = @transform_7, window_bounds = array<i64: 1, 128>}, {transform_indices = @transform_8, window_bounds = array<i64: 16, 128>}]} {
    %c0 = arith.constant 0 : index
    %c0_0 = arith.constant 0 : index
    %0 = vector.load %arg1[%c0, %c0_0] : memref<16x1xi32, #tpu.memory_space<vmem>>, vector<16x1xi32>
    %1 = tpu.iota {dimensions = array<i32: 1>} : vector<16x128xi32>
    %2 = vector.broadcast %0 : vector<16x1xi32> to vector<16x128xi32>
    %3 = arith.cmpi eq, %2, %1 : vector<16x128xi32>
    %4 = arith.extui %3 : vector<16x128xi1> to vector<16x128xi32>
    %5 = arith.sitofp %4 : vector<16x128xi32> to vector<16x128xf32>
    %6 = arith.truncf %5 : vector<16x128xf32> to vector<16x128xbf16>
    %c0_1 = arith.constant 0 : index
    %c0_2 = arith.constant 0 : index
    %7 = vector.load %arg2[%c0_1, %c0_2] : memref<128x768xbf16, #tpu.memory_space<vmem>>, vector<128x768xbf16>
    %cst = arith.constant dense<0.000000e+00> : vector<16x768xf32>
    %8 = tpu.matmul %6, %7, %cst {dimension_numbers = #tpu.dot_dimension_numbers<[1], [0], [0], [1], [0, 0, 1, 1], [], []>} : vector<16x128xbf16>, vector<128x768xbf16>, vector<16x768xf32> -> vector<16x768xf32>
    %9 = arith.truncf %8 : vector<16x768xf32> to vector<16x768xbf16>
    %c0_3 = arith.constant 0 : index
    %c0_4 = arith.constant 0 : index
    %10 = vector.load %arg3[%c0_3, %c0_4] : memref<768x768xbf16, #tpu.memory_space<vmem>>, vector<768x768xbf16>
    %cst_5 = arith.constant dense<0.000000e+00> : vector<16x768xf32>
    %11 = tpu.matmul %9, %10, %cst_5 {dimension_numbers = #tpu.dot_dimension_numbers<[1], [0], [0], [1], [0, 0, 1, 1], [], []>} : vector<16x768xbf16>, vector<768x768xbf16>, vector<16x768xf32> -> vector<16x768xf32>
    %c0_6 = arith.constant 0 : index
    %c0_7 = arith.constant 0 : index
    %12 = vector.load %arg4[%c0_6, %c0_7] : memref<1x768xf32, #tpu.memory_space<vmem>>, vector<1x768xf32>
    %13 = vector.broadcast %12 : vector<1x768xf32> to vector<16x768xf32>
    %14 = arith.addf %11, %13 : vector<16x768xf32>
    %15 = arith.truncf %14 : vector<16x768xf32> to vector<16x768xbf16>
    %16 = math.tanh %15 : vector<16x768xbf16>
    %c0_8 = arith.constant 0 : index
    %c0_9 = arith.constant 0 : index
    %17 = vector.load %arg5[%c0_8, %c0_9] : memref<768x768xbf16, #tpu.memory_space<vmem>>, vector<768x768xbf16>
    %cst_10 = arith.constant dense<0.000000e+00> : vector<16x768xf32>
    %18 = tpu.matmul %16, %17, %cst_10 {dimension_numbers = #tpu.dot_dimension_numbers<[1], [0], [0], [1], [0, 0, 1, 1], [], []>} : vector<16x768xbf16>, vector<768x768xbf16>, vector<16x768xf32> -> vector<16x768xf32>
    %c0_11 = arith.constant 0 : index
    %c0_12 = arith.constant 0 : index
    %19 = vector.load %arg6[%c0_11, %c0_12] : memref<1x768xf32, #tpu.memory_space<vmem>>, vector<1x768xf32>
    %20 = vector.broadcast %19 : vector<1x768xf32> to vector<16x768xf32>
    %21 = arith.addf %18, %20 : vector<16x768xf32>
    %cst_13 = arith.constant 0.000000e+00 : f32
    %22 = vector.broadcast %cst_13 : f32 to vector<16x768xf32>
    %23 = arith.maximumf %21, %22 : vector<16x768xf32>
    %24 = arith.truncf %23 : vector<16x768xf32> to vector<16x768xbf16>
    %c0_14 = arith.constant 0 : index
    %c0_15 = arith.constant 0 : index
    %25 = vector.load %arg7[%c0_14, %c0_15] : memref<768x128xbf16, #tpu.memory_space<vmem>>, vector<768x128xbf16>
    %cst_16 = arith.constant dense<0.000000e+00> : vector<16x128xf32>
    %26 = tpu.matmul %24, %25, %cst_16 {dimension_numbers = #tpu.dot_dimension_numbers<[1], [0], [0], [1], [0, 0, 1, 1], [], []>} : vector<16x768xbf16>, vector<768x128xbf16>, vector<16x128xf32> -> vector<16x128xf32>
    %c0_17 = arith.constant 0 : index
    %c0_18 = arith.constant 0 : index
    %27 = vector.load %arg8[%c0_17, %c0_18] : memref<1x128xf32, #tpu.memory_space<vmem>>, vector<1x128xf32>
    %28 = vector.broadcast %27 : vector<1x128xf32> to vector<16x128xf32>
    %29 = arith.addf %26, %28 : vector<16x128xf32>
    %30 = tpu.iota {dimensions = array<i32: 1>} : vector<16x128xi32>
    %cst_19 = arith.constant dense<0xFF800000> : vector<16xf32>
    %31 = vector.multi_reduction <maximumf>, %29, %cst_19 [1] : vector<16x128xf32> to vector<16xf32>
    %32 = vector.shape_cast %31 : vector<16xf32> to vector<16x1xf32>
    %33 = vector.broadcast %32 : vector<16x1xf32> to vector<16x128xf32>
    %34 = arith.subf %29, %33 : vector<16x128xf32>
    %35 = math.exp %34 : vector<16x128xf32>
    %c4_i32 = arith.constant 4 : i32
    %36 = vector.broadcast %c4_i32 : i32 to vector<16x128xi32>
    %37 = arith.cmpi slt, %30, %36 : vector<16x128xi32>
    %cst_20 = arith.constant 0.000000e+00 : f32
    %38 = vector.broadcast %cst_20 : f32 to vector<16x128xf32>
    %39 = arith.select %37, %35, %38 : vector<16x128xi1>, vector<16x128xf32>
    %cst_21 = arith.constant dense<0.000000e+00> : vector<16xf32>
    %40 = vector.multi_reduction <add>, %39, %cst_21 [1] : vector<16x128xf32> to vector<16xf32>
    %41 = vector.shape_cast %40 : vector<16xf32> to vector<16x1xf32>
    %42 = vector.broadcast %41 : vector<16x1xf32> to vector<16x128xf32>
    %43 = arith.divf %35, %42 : vector<16x128xf32>
    %c4_i32_22 = arith.constant 4 : i32
    %44 = vector.broadcast %c4_i32_22 : i32 to vector<16x128xi32>
    %45 = arith.cmpi slt, %30, %44 : vector<16x128xi32>
    %46 = arith.select %45, %29, %43 : vector<16x128xi1>, vector<16x128xf32>
    %c0_23 = arith.constant 0 : index
    %c0_24 = arith.constant 0 : index
    %47 = vector.load %arg9[%c0_23, %c0_24] : memref<16x128xf32, #tpu.memory_space<vmem>>, vector<16x128xf32>
    tpu.vector_store %arg9[%c0_23, %c0_24], %46 {strides = array<i32>} : memref<16x128xf32, #tpu.memory_space<vmem>>, vector<16x128xf32>,
    return
  }
  func.func @transform_0(%arg0: i32) -> (i32, i32) {
    %c0_i32 = arith.constant 0 : i32
    %c0_i32_0 = arith.constant 0 : i32
    return %arg0, %c0_i32 : i32, i32
  }
  func.func @transform_1(%arg0: i32) -> (i32, i32) {
    %c0_i32 = arith.constant 0 : i32
    %c0_i32_0 = arith.constant 0 : i32
    %c0_i32_1 = arith.constant 0 : i32
    return %c0_i32, %c0_i32_0 : i32, i32
  }
  func.func @transform_2(%arg0: i32) -> (i32, i32) {
    %c0_i32 = arith.constant 0 : i32
    %c0_i32_0 = arith.constant 0 : i32
    %c0_i32_1 = arith.constant 0 : i32
    return %c0_i32, %c0_i32_0 : i32, i32
  }
  func.func @transform_3(%arg0: i32) -> (i32, i32) {
    %c0_i32 = arith.constant 0 : i32
    %c0_i32_0 = arith.constant 0 : i32
    %c0_i32_1 = arith.constant 0 : i32
    return %c0_i32, %c0_i32_0 : i32, i32
  }
  func.func @transform_4(%arg0: i32) -> (i32, i32) {
    %c0_i32 = arith.constant 0 : i32
    %c0_i32_0 = arith.constant 0 : i32
    %c0_i32_1 = arith.constant 0 : i32
    return %c0_i32, %c0_i32_0 : i32, i32
  }
  func.func @transform_5(%arg0: i32) -> (i32, i32) {
    %c0_i32 = arith.constant 0 : i32
    %c0_i32_0 = arith.constant 0 : i32
    %c0_i32_1 = arith.constant 0 : i32
    return %c0_i32, %c0_i32_0 : i32, i32
  }
  func.func @transform_6(%arg0: i32) -> (i32, i32) {
    %c0_i32 = arith.constant 0 : i32
    %c0_i32_0 = arith.constant 0 : i32
    %c0_i32_1 = arith.constant 0 : i32
    return %c0_i32, %c0_i32_0 : i32, i32
  }
  func.func @transform_7(%arg0: i32) -> (i32, i32) {
    %c0_i32 = arith.constant 0 : i32
    %c0_i32_0 = arith.constant 0 : i32
    %c0_i32_1 = arith.constant 0 : i32
    return %c0_i32, %c0_i32_0 : i32, i32
  }
  func.func @transform_8(%arg0: i32) -> (i32, i32) {
    %c0_i32 = arith.constant 0 : i32
    %c0_i32_0 = arith.constant 0 : i32
    return %arg0, %c0_i32 : i32, i32
  }
}

</mosaic_0001>

<llo_original>
// kernel: tpu_custom_call.1
$region0: #{tpu_custom_call.1}
  #allocation0 [shape = 'u32[]', space=smem, size = 0x4, offset = 0x4, fixed_abs, tag = 'smem constant byte address 0x4 - core index']
  #allocation1 [shape = 'u32[72,128]{1,0:T(1,128)}', space=vmem, size = 0x9000, scoped, tag = 'internal scratch']
  %s0 = inlined_call_operand.vmem [shape: s32[16,1], index: 0, kind: input, shape index: {}]
  %s1 = inlined_call_operand.hbm [shape: bf16[128,768], index: 1, kind: input, shape index: {}]
  %s2 = inlined_call_operand.hbm [shape: bf16[768,768], index: 2, kind: input, shape index: {}]
  %s3 = inlined_call_operand.hbm [shape: f32[1,768], index: 3, kind: input, shape index: {}]
  %s4 = inlined_call_operand.hbm [shape: bf16[768,768], index: 4, kind: input, shape index: {}]
  %s5 = inlined_call_operand.hbm [shape: f32[1,768], index: 5, kind: input, shape index: {}]
  %s6 = inlined_call_operand.hbm [shape: bf16[768,128], index: 6, kind: input, shape index: {}]
  %s7 = inlined_call_operand.hbm [shape: f32[1,128], index: 7, kind: input, shape index: {}]
  %s8 = inlined_call_operand.hbm [shape: f32[16,128], index: 8, kind: output, shape index: {}]
  %s9 = sld [smem:[#allocation0]]
  $region70: #{tpu_custom_call.1} parent=0
    _
  %s11 = ssub.s32 1, %s9
  %s12 = scalar_select 0, %s11, %s9
  $region1: #{tpu_custom_call.1} parent=0
    #allocation2 [shape = 'u8[196608]{0}', space=vmem, size = 0x30000, scoped, tag = 'input window, operand 1, single buffered']
    #allocation3 [shape = 's32[1]{0}', space=sflag, size = 0x4, scoped, tag = 'scoped memory for tpu_custom_call.1']
    #allocation4 [shape = 's32[1]{0}', space=sflag, size = 0x4, scoped, tag = 'scoped memory for tpu_custom_call.1']
    #allocation5 [shape = 'u8[1179648]{0}', space=vmem, size = 0x120000, scoped, tag = 'input window, operand 2, single buffered']
    #allocation6 [shape = 's32[1]{0}', space=sflag, size = 0x4, scoped, tag = 'scoped memory for tpu_custom_call.1']
    #allocation7 [shape = 'u8[3072]{0}', space=vmem, size = 0xc00, scoped, tag = 'input window, operand 3, single buffered']
    #allocation8 [shape = 'u8[1179648]{0}', space=vmem, size = 0x120000, scoped, tag = 'input window, operand 4, single buffered']
    #allocation9 [shape = 's32[1]{0}', space=sflag, size = 0x4, scoped, tag = 'scoped memory for tpu_custom_call.1']
    #allocation10 [shape = 'u8[3072]{0}', space=vmem, size = 0xc00, scoped, tag = 'input window, operand 5, single buffered']
    #allocation11 [shape = 'u8[196608]{0}', space=vmem, size = 0x30000, scoped, tag = 'input window, operand 6, single buffered']
    #allocation12 [shape = 's32[1]{0}', space=sflag, size = 0x4, scoped, tag = 'scoped memory for tpu_custom_call.1']
    #allocation13 [shape = 'u8[512]{0}', space=vmem, size = 0x400, scoped, tag = 'input window, operand 7, single buffered']
    #allocation14 [shape = 'u8[8192]{0}', space=vmem, size = 0x2000, scoped, tag = 'output window, operand 0, single buffered']
    %13 = vsyncpa [#allocation3], 0
    %14 = vsyncpa [#allocation6], 0
    %15 = vsyncpa [#allocation9], 0
    %16 = vsyncpa [#allocation12], 0
    %17 = vsyncpa [#allocation4], 0
    // Predicated region
    $region2: #{tpu_custom_call.1} parent=1 // pred_check
      _
    $region3: #{tpu_custom_call.1} parent=1 // pred_check_branch
      %19 = sbr.rel (0) target = $region5
    $region4: #{tpu_custom_call.1} parent=1 // pred_region
      _
    $region5: #{tpu_custom_call.1} parent=1 // pred_fallthru
      _
    // Predicated region
    $region6: #{tpu_custom_call.1} parent=1 // pred_check
      _
    $region7: #{tpu_custom_call.1} parent=1 // pred_check_branch
      %21 = sbr.rel (0) target = $region9
    $region8: #{tpu_custom_call.1} parent=1 // pred_region
      %23 = vsyncadd [#allocation3], 0
      %s24 = sshll.u32 %s1, 4
      %s25 = int_to_ptr.hbm [resolvable:$true] %s24
      %s26 = sshll.u32 [#allocation2], 4
      %s27 = int_to_ptr.vmem [resolvable:$true] %s26
      %32 = dma.hbm_to_vmem [thread:$0]  %s25, 6144, %s27, [#allocation3], 384, 384, 24
    $region9: #{tpu_custom_call.1} parent=1 // pred_fallthru
      _
    // Predicated region
    $region10: #{tpu_custom_call.1} parent=1 // pred_check
      _
    $region11: #{tpu_custom_call.1} parent=1 // pred_check_branch
      %34 = sbr.rel (0) target = $region13
    $region12: #{tpu_custom_call.1} parent=1 // pred_region
      %36 = vsyncadd [#allocation6], 0
      %s37 = sshll.u32 %s2, 4
      %s38 = int_to_ptr.hbm [resolvable:$true] %s37
      %s39 = sshll.u32 [#allocation5], 4
      %s40 = int_to_ptr.vmem [resolvable:$true] %s39
      %45 = dma.hbm_to_vmem [thread:$0]  %s38, 36864, %s40, [#allocation6], 384, 384, 24
    $region13: #{tpu_custom_call.1} parent=1 // pred_fallthru
      _
    // Predicated region
    $region14: #{tpu_custom_call.1} parent=1 // pred_check
      _
    $region15: #{tpu_custom_call.1} parent=1 // pred_check_branch
      %47 = sbr.rel (0) target = $region17
    $region16: #{tpu_custom_call.1} parent=1 // pred_region
      %49 = vsyncadd [#allocation6], 0
      %s51 = sshll.u32 %s3, 4
      %s52 = int_to_ptr.hbm [resolvable:$true] %s51
      %s53 = sshll.u32 [#allocation7], 4
      %s54 = int_to_ptr.vmem [resolvable:$true] %s53
      %56 = dma.hbm_to_vmem [thread:$0]  %s52, 96, %s54, [#allocation6]
    $region17: #{tpu_custom_call.1} parent=1 // pred_fallthru
      _
    // Predicated region
    $region18: #{tpu_custom_call.1} parent=1 // pred_check
      _
    $region19: #{tpu_custom_call.1} parent=1 // pred_check_branch
      %58 = sbr.rel (0) target = $region21
    $region20: #{tpu_custom_call.1} parent=1 // pred_region
      %60 = vsyncadd [#allocation9], 0
      %s61 = sshll.u32 %s4, 4
      %s62 = int_to_ptr.hbm [resolvable:$true] %s61
      %s63 = sshll.u32 [#allocation8], 4
      %s64 = int_to_ptr.vmem [resolvable:$true] %s63
      %69 = dma.hbm_to_vmem [thread:$0]  %s62, 36864, %s64, [#allocation9], 384, 384, 24
    $region21: #{tpu_custom_call.1} parent=1 // pred_fallthru
      _
    // Predicated region
    $region22: #{tpu_custom_call.1} parent=1 // pred_check
      _
    $region23: #{tpu_custom_call.1} parent=1 // pred_check_branch
      %71 = sbr.rel (0) target = $region25
    $region24: #{tpu_custom_call.1} parent=1 // pred_region
      %73 = vsyncadd [#allocation9], 0
      %s75 = sshll.u32 %s5, 4
      %s76 = int_to_ptr.hbm [resolvable:$true] %s75
      %s77 = sshll.u32 [#allocation10], 4
      %s78 = int_to_ptr.vmem [resolvable:$true] %s77
      %80 = dma.hbm_to_vmem [thread:$0]  %s76, 96, %s78, [#allocation9]
    $region25: #{tpu_custom_call.1} parent=1 // pred_fallthru
      _
    // Predicated region
    $region26: #{tpu_custom_call.1} parent=1 // pred_check
      _
    $region27: #{tpu_custom_call.1} parent=1 // pred_check_branch
      %82 = sbr.rel (0) target = $region29
    $region28: #{tpu_custom_call.1} parent=1 // pred_region
      %84 = vsyncadd [#allocation12], 0
      %s85 = sshll.u32 %s6, 4
      %s86 = int_to_ptr.hbm [resolvable:$true] %s85
      %s87 = sshll.u32 [#allocation11], 4
      %s88 = int_to_ptr.vmem [resolvable:$true] %s87
      %93 = dma.hbm_to_vmem [thread:$0]  %s86, 6144, %s88, [#allocation12], 64, 64, 4
    $region29: #{tpu_custom_call.1} parent=1 // pred_fallthru
      _
    // Predicated region
    $region30: #{tpu_custom_call.1} parent=1 // pred_check
      _
    $region31: #{tpu_custom_call.1} parent=1 // pred_check_branch
      %95 = sbr.rel (0) target = $region33
    $region32: #{tpu_custom_call.1} parent=1 // pred_region
      %97 = vsyncadd [#allocation12], 0
      %s99 = sshll.u32 %s7, 4
      %s100 = int_to_ptr.hbm [resolvable:$true] %s99
      %s101 = sshll.u32 [#allocation13], 4
      %s102 = int_to_ptr.vmem [resolvable:$true] %s101
      %104 = dma.hbm_to_vmem [thread:$0]  %s100, 16, %s102, [#allocation12]
    $region33: #{tpu_custom_call.1} parent=1 // pred_fallthru
      _
    // Predicated region
    $region34: #{tpu_custom_call.1} parent=1 // pred_check
      _
    $region35: #{tpu_custom_call.1} parent=1 // pred_check_branch
      %106 = sbr.rel (0) target = $region37
    $region36: #{tpu_custom_call.1} parent=1 // pred_region
      %108 = dma.done [#allocation3], 6144
    $region37: #{tpu_custom_call.1} parent=1 // pred_fallthru
      _
    // Predicated region
    $region38: #{tpu_custom_call.1} parent=1 // pred_check
      _
    $region39: #{tpu_custom_call.1} parent=1 // pred_check_branch
      %110 = sbr.rel (0) target = $region41
    $region40: #{tpu_custom_call.1} parent=1 // pred_region
      %112 = dma.done [#allocation6], 36864
    $region41: #{tpu_custom_call.1} parent=1 // pred_fallthru
      _
    // Predicated region
    $region42: #{tpu_custom_call.1} parent=1 // pred_check
      _
    $region43: #{tpu_custom_call.1} parent=1 // pred_check_branch
      %114 = sbr.rel (0) target = $region45
    $region44: #{tpu_custom_call.1} parent=1 // pred_region
      %116 = dma.done [#allocation6], 96
    $region45: #{tpu_custom_call.1} parent=1 // pred_fallthru
      _
    // Predicated region
    $region46: #{tpu_custom_call.1} parent=1 // pred_check
      _
    $region47: #{tpu_custom_call.1} parent=1 // pred_check_branch
      %118 = sbr.rel (0) target = $region49
    $region48: #{tpu_custom_call.1} parent=1 // pred_region
      %120 = dma.done [#allocation9], 36864
    $region49: #{tpu_custom_call.1} parent=1 // pred_fallthru
      _
    // Predicated region
    $region50: #{tpu_custom_call.1} parent=1 // pred_check
      _
    $region51: #{tpu_custom_call.1} parent=1 // pred_check_branch
      %122 = sbr.rel (0) target = $region53
    $region52: #{tpu_custom_call.1} parent=1 // pred_region
      %124 = dma.done [#allocation9], 96
    $region53: #{tpu_custom_call.1} parent=1 // pred_fallthru
      _
    // Predicated region
    $region54: #{tpu_custom_call.1} parent=1 // pred_check
      _
    $region55: #{tpu_custom_call.1} parent=1 // pred_check_branch
      %126 = sbr.rel (0) target = $region57
    $region56: #{tpu_custom_call.1} parent=1 // pred_region
      %128 = dma.done [#allocation12], 6144
    $region57: #{tpu_custom_call.1} parent=1 // pred_fallthru
      _
    // Predicated region
    $region58: #{tpu_custom_call.1} parent=1 // pred_check
      _
    $region59: #{tpu_custom_call.1} parent=1 // pred_check_branch
      %130 = sbr.rel (0) target = $region61
    $region60: #{tpu_custom_call.1} parent=1 // pred_region
      %132 = dma.done [#allocation12], 16
    $region61: #{tpu_custom_call.1} parent=1 // pred_fallthru
      _
    %v133 = vld [vmem:[%s0] sm:$0xff]
    %v134 = vld [vmem:[%s0 + $0x8] sm:$0xff]
    %v135 = vlaneseq
    %v136 = vand.u32 %v135, 127
    %137 = vset.pattern.permute.xlu0 0
    %138 = vperm.xlu0 %137, %v133
    %v139 = vpop.permute.xlu0 %138
    %140 = vset.pattern.permute.xlu0 0
    %141 = vperm.xlu0 %140, %v134
    %v142 = vpop.permute.xlu0 %141
    %vm143 = vcmp.eq.s32.totalorder %v139, %v136
    %vm144 = vcmp.eq.s32.totalorder %v142, %v136
    %v145 = vsel %vm143, 1, 0
    %v146 = vsel %vm144, 1, 0
    %v147 = vcvt.s32.f32 %v145
    %v148 = vcvt.s32.f32 %v146
    %v149 = vpack.c.bf16 %v148, %v147
    %v150 = vld [vmem:[#allocation2] sm:$0xff]
    %v151 = vld [vmem:[#allocation2 + $0x8] sm:$0xff]
    %v152 = vld [vmem:[#allocation2 + $0x10] sm:$0xff]
    %v153 = vld [vmem:[#allocation2 + $0x18] sm:$0xff]
    %v154 = vld [vmem:[#allocation2 + $0x20] sm:$0xff]
    %v155 = vld [vmem:[#allocation2 + $0x28] sm:$0xff]
    %v156 = vld [vmem:[#allocation2 + $0x30] sm:$0xff]
    %v157 = vld [vmem:[#allocation2 + $0x38] sm:$0xff]
    %v158 = vld [vmem:[#allocation2 + $0x40] sm:$0xff]
    %v159 = vld [vmem:[#allocation2 + $0x48] sm:$0xff]
    %v160 = vld [vmem:[#allocation2 + $0x50] sm:$0xff]
    %v161 = vld [vmem:[#allocation2 + $0x58] sm:$0xff]
    %v162 = vld [vmem:[#allocation2 + $0x60] sm:$0xff]
    %v163 = vld [vmem:[#allocation2 + $0x68] sm:$0xff]
    %v164 = vld [vmem:[#allocation2 + $0x70] sm:$0xff]
    %v165 = vld [vmem:[#allocation2 + $0x78] sm:$0xff]
    %v166 = vld [vmem:[#allocation2 + $0x80] sm:$0xff]
    %v167 = vld [vmem:[#allocation2 + $0x88] sm:$0xff]
    %v168 = vld [vmem:[#allocation2 + $0x90] sm:$0xff]
    %v169 = vld [vmem:[#allocation2 + $0x98] sm:$0xff]
    %v170 = vld [vmem:[#allocation2 + $0xa0] sm:$0xff]
    %v171 = vld [vmem:[#allocation2 + $0xa8] sm:$0xff]
    %v172 = vld [vmem:[#allocation2 + $0xb0] sm:$0xff]
    %v173 = vld [vmem:[#allocation2 + $0xb8] sm:$0xff]
    %v174 = vld [vmem:[#allocation2 + $0xc0] sm:$0xff]
    %v175 = vld [vmem:[#allocation2 + $0xc8] sm:$0xff]
    %v176 = vld [vmem:[#allocation2 + $0xd0] sm:$0xff]
    %v177 = vld [vmem:[#allocation2 + $0xd8] sm:$0xff]
    %v178 = vld [vmem:[#allocation2 + $0xe0] sm:$0xff]
    %v179 = vld [vmem:[#allocation2 + $0xe8] sm:$0xff]
    %v180 = vld [vmem:[#allocation2 + $0xf0] sm:$0xff]
    %v181 = vld [vmem:[#allocation2 + $0xf8] sm:$0xff]
    %v182 = vld [vmem:[#allocation2 + $0x100] sm:$0xff]
    %v183 = vld [vmem:[#allocation2 + $0x108] sm:$0xff]
    %v184 = vld [vmem:[#allocation2 + $0x110] sm:$0xff]
    %v185 = vld [vmem:[#allocation2 + $0x118] sm:$0xff]
    %v186 = vld [vmem:[#allocation2 + $0x120] sm:$0xff]
    %v187 = vld [vmem:[#allocation2 + $0x128] sm:$0xff]
    %v188 = vld [vmem:[#allocation2 + $0x130] sm:$0xff]
    %v189 = vld [vmem:[#allocation2 + $0x138] sm:$0xff]
    %v190 = vld [vmem:[#allocation2 + $0x140] sm:$0xff]
    %v191 = vld [vmem:[#allocation2 + $0x148] sm:$0xff]
    %v192 = vld [vmem:[#allocation2 + $0x150] sm:$0xff]
    %v193 = vld [vmem:[#allocation2 + $0x158] sm:$0xff]
    %v194 = vld [vmem:[#allocation2 + $0x160] sm:$0xff]
    %v195 = vld [vmem:[#allocation2 + $0x168] sm:$0xff]
    %v196 = vld [vmem:[#allocation2 + $0x170] sm:$0xff]
    %v197 = vld [vmem:[#allocation2 + $0x178] sm:$0xff]
    %v246 = vunpack.c.l.b16 %v150
    %v247 = vunpack.c.h.b16 %v150
    %v248 = vunpack.c.l.b16 %v151
    %v249 = vunpack.c.h.b16 %v151
    %v250 = vunpack.c.l.b16 %v152
    %v251 = vunpack.c.h.b16 %v152
    %v252 = vunpack.c.l.b16 %v153
    %v253 = vunpack.c.h.b16 %v153
    %v254 = vunpack.c.l.b16 %v154
    %v255 = vunpack.c.h.b16 %v154
    %v256 = vunpack.c.l.b16 %v155
    %v257 = vunpack.c.h.b16 %v155
    %v258 = vunpack.c.l.b16 %v156
    %v259 = vunpack.c.h.b16 %v156
    %v260 = vunpack.c.l.b16 %v157
    %v261 = vunpack.c.h.b16 %v157
    %v262 = vunpack.c.l.b16 %v158
    %v263 = vunpack.c.h.b16 %v158
    %v264 = vunpack.c.l.b16 %v159
    %v265 = vunpack.c.h.b16 %v159
    %v266 = vunpack.c.l.b16 %v160
    %v267 = vunpack.c.h.b16 %v160
    %v268 = vunpack.c.l.b16 %v161
    %v269 = vunpack.c.h.b16 %v161
    %v270 = vunpack.c.l.b16 %v162
    %v271 = vunpack.c.h.b16 %v162
    %v272 = vunpack.c.l.b16 %v163
    %v273 = vunpack.c.h.b16 %v163
    %v274 = vunpack.c.l.b16 %v164
    %v275 = vunpack.c.h.b16 %v164
    %v276 = vunpack.c.l.b16 %v165
    %v277 = vunpack.c.h.b16 %v165
    %v278 = vunpack.c.l.b16 %v166
    %v279 = vunpack.c.h.b16 %v166
    %v280 = vunpack.c.l.b16 %v167
    %v281 = vunpack.c.h.b16 %v167
    %v282 = vunpack.c.l.b16 %v168
    %v283 = vunpack.c.h.b16 %v168
    %v284 = vunpack.c.l.b16 %v169
    %v285 = vunpack.c.h.b16 %v169
    %v286 = vunpack.c.l.b16 %v170
    %v287 = vunpack.c.h.b16 %v170
    %v288 = vunpack.c.l.b16 %v171
    %v289 = vunpack.c.h.b16 %v171
    %v290 = vunpack.c.l.b16 %v172
    %v291 = vunpack.c.h.b16 %v172
    %v292 = vunpack.c.l.b16 %v173
    %v293 = vunpack.c.h.b16 %v173
    %v294 = vunpack.c.l.b16 %v174
    %v295 = vunpack.c.h.b16 %v174
    %v296 = vunpack.c.l.b16 %v175
    %v297 = vunpack.c.h.b16 %v175
    %v298 = vunpack.c.l.b16 %v176
    %v299 = vunpack.c.h.b16 %v176
    %v300 = vunpack.c.l.b16 %v177
    %v301 = vunpack.c.h.b16 %v177
    %v302 = vunpack.c.l.b16 %v178
    %v303 = vunpack.c.h.b16 %v178
    %v304 = vunpack.c.l.b16 %v179
    %v305 = vunpack.c.h.b16 %v179
    %v306 = vunpack.c.l.b16 %v180
    %v307 = vunpack.c.h.b16 %v180
    %v308 = vunpack.c.l.b16 %v181
    %v309 = vunpack.c.h.b16 %v181
    %v310 = vunpack.c.l.b16 %v182
    %v311 = vunpack.c.h.b16 %v182
    %v312 = vunpack.c.l.b16 %v183
    %v313 = vunpack.c.h.b16 %v183
    %v314 = vunpack.c.l.b16 %v184
    %v315 = vunpack.c.h.b16 %v184
    %v316 = vunpack.c.l.b16 %v185
    %v317 = vunpack.c.h.b16 %v185
    %v318 = vunpack.c.l.b16 %v186
    %v319 = vunpack.c.h.b16 %v186
    %v320 = vunpack.c.l.b16 %v187
    %v321 = vunpack.c.h.b16 %v187
    %v322 = vunpack.c.l.b16 %v188
    %v323 = vunpack.c.h.b16 %v188
    %v324 = vunpack.c.l.b16 %v189
    %v325 = vunpack.c.h.b16 %v189
    %v326 = vunpack.c.l.b16 %v190
    %v327 = vunpack.c.h.b16 %v190
    %v328 = vunpack.c.l.b16 %v191
    %v329 = vunpack.c.h.b16 %v191
    %v330 = vunpack.c.l.b16 %v192
    %v331 = vunpack.c.h.b16 %v192
    %v332 = vunpack.c.l.b16 %v193
    %v333 = vunpack.c.h.b16 %v193
    %v334 = vunpack.c.l.b16 %v194
    %v335 = vunpack.c.h.b16 %v194
    %v336 = vunpack.c.l.b16 %v195
    %v337 = vunpack.c.h.b16 %v195
    %v338 = vunpack.c.l.b16 %v196
    %v339 = vunpack.c.h.b16 %v196
    %v340 = vunpack.c.l.b16 %v197
    %v341 = vunpack.c.h.b16 %v197
    %v342 = vpack.c.b16 %v252, %v246
    %v343 = vpack.c.b16 %v253, %v247
    %v344 = vpack.c.b16 %v254, %v248
    %v345 = vpack.c.b16 %v255, %v249
    %v346 = vpack.c.b16 %v256, %v250
    %v347 = vpack.c.b16 %v257, %v251
    %v348 = vpack.c.b16 %v264, %v258
    %v349 = vpack.c.b16 %v265, %v259
    %v350 = vpack.c.b16 %v266, %v260
    %v351 = vpack.c.b16 %v267, %v261
    %v352 = vpack.c.b16 %v268, %v262
    %v353 = vpack.c.b16 %v269, %v263
    %v354 = vpack.c.b16 %v276, %v270
    %v355 = vpack.c.b16 %v277, %v271
    %v356 = vpack.c.b16 %v278, %v272
    %v357 = vpack.c.b16 %v279, %v273
    %v358 = vpack.c.b16 %v280, %v274
    %v359 = vpack.c.b16 %v281, %v275
    %v360 = vpack.c.b16 %v288, %v282
    %v361 = vpack.c.b16 %v289, %v283
    %v362 = vpack.c.b16 %v290, %v284
    %v363 = vpack.c.b16 %v291, %v285
    %v364 = vpack.c.b16 %v292, %v286
    %v365 = vpack.c.b16 %v293, %v287
    %v366 = vpack.c.b16 %v300, %v294
    %v367 = vpack.c.b16 %v301, %v295
    %v368 = vpack.c.b16 %v302, %v296
    %v369 = vpack.c.b16 %v303, %v297
    %v370 = vpack.c.b16 %v304, %v298
    %v371 = vpack.c.b16 %v305, %v299
    %v372 = vpack.c.b16 %v312, %v306
    %v373 = vpack.c.b16 %v313, %v307
    %v374 = vpack.c.b16 %v314, %v308
    %v375 = vpack.c.b16 %v315, %v309
    %v376 = vpack.c.b16 %v316, %v310
    %v377 = vpack.c.b16 %v317, %v311
    %v378 = vpack.c.b16 %v324, %v318
    %v379 = vpack.c.b16 %v325, %v319
    %v380 = vpack.c.b16 %v326, %v320
    %v381 = vpack.c.b16 %v327, %v321
    %v382 = vpack.c.b16 %v328, %v322
    %v383 = vpack.c.b16 %v329, %v323
    %v384 = vpack.c.b16 %v336, %v330
    %v385 = vpack.c.b16 %v337, %v331
    %v386 = vpack.c.b16 %v338, %v332
    %v387 = vpack.c.b16 %v339, %v333
    %v388 = vpack.c.b16 %v340, %v334
    %v389 = vpack.c.b16 %v341, %v335
    %438 = vmatpush.bf16.msra.mxu0 %v384
    %439 = vmatpush.bf16.msra.mxu0 %v378
    %440 = vmatpush.bf16.msra.mxu0 %v372
    %441 = vmatpush.bf16.msra.mxu0 %v366
    %442 = vmatpush.bf16.msra.mxu0 %v360
    %443 = vmatpush.bf16.msra.mxu0 %v354
    %444 = vmatpush.bf16.msra.mxu0 %v348
    %445 = vmatpush.bf16.msra.mxu0 %v342
    %446 = vmatmul.bf16.gmra.mxu0 %v149
    %v447 = vpop.f32.mrf.mxu0
    %v448 = vadd.f32 0.0, %v447
    %v449 = vpop.f32.mrf.mxu0
    %v450 = vadd.f32 0.0, %v449
    %451 = vdwg.mxu0
    %452 = vmatpush.bf16.msra.mxu0 %v385
    %453 = vmatpush.bf16.msra.mxu0 %v379
    %454 = vmatpush.bf16.msra.mxu0 %v373
    %455 = vmatpush.bf16.msra.mxu0 %v367
    %456 = vmatpush.bf16.msra.mxu0 %v361
    %457 = vmatpush.bf16.msra.mxu0 %v355
    %458 = vmatpush.bf16.msra.mxu0 %v349
    %459 = vmatpush.bf16.msra.mxu0 %v343
    %460 = vmatmul.bf16.gmra.mxu0 %v149
    %v461 = vpop.f32.mrf.mxu0
    %v462 = vadd.f32 0.0, %v461
    %v463 = vpop.f32.mrf.mxu0
    %v464 = vadd.f32 0.0, %v463
    %465 = vdwg.mxu0
    %466 = vmatpush.bf16.msra.mxu0 %v386
    %467 = vmatpush.bf16.msra.mxu0 %v380
    %468 = vmatpush.bf16.msra.mxu0 %v374
    %469 = vmatpush.bf16.msra.mxu0 %v368
    %470 = vmatpush.bf16.msra.mxu0 %v362
    %471 = vmatpush.bf16.msra.mxu0 %v356
    %472 = vmatpush.bf16.msra.mxu0 %v350
    %473 = vmatpush.bf16.msra.mxu0 %v344
    %474 = vmatmul.bf16.gmra.mxu0 %v149
    %v475 = vpop.f32.mrf.mxu0
    %v476 = vadd.f32 0.0, %v475
    %v477 = vpop.f32.mrf.mxu0
    %v478 = vadd.f32 0.0, %v477
    %479 = vdwg.mxu0
    %480 = vmatpush.bf16.msra.mxu0 %v387
    %481 = vmatpush.bf16.msra.mxu0 %v381
    %482 = vmatpush.bf16.msra.mxu0 %v375
    %483 = vmatpush.bf16.msra.mxu0 %v369
    %484 = vmatpush.bf16.msra.mxu0 %v363
    %485 = vmatpush.bf16.msra.mxu0 %v357
    %486 = vmatpush.bf16.msra.mxu0 %v351
    %487 = vmatpush.bf16.msra.mxu0 %v345
    %488 = vmatmul.bf16.gmra.mxu0 %v149
    %v489 = vpop.f32.mrf.mxu0
    %v490 = vadd.f32 0.0, %v489
    %v491 = vpop.f32.mrf.mxu0
    %v492 = vadd.f32 0.0, %v491
    %493 = vdwg.mxu0
    %494 = vmatpush.bf16.msra.mxu0 %v388
    %495 = vmatpush.bf16.msra.mxu0 %v382
    %496 = vmatpush.bf16.msra.mxu0 %v376
    %497 = vmatpush.bf16.msra.mxu0 %v370
    %498 = vmatpush.bf16.msra.mxu0 %v364
    %499 = vmatpush.bf16.msra.mxu0 %v358
    %500 = vmatpush.bf16.msra.mxu0 %v352
    %501 = vmatpush.bf16.msra.mxu0 %v346
    %502 = vmatmul.bf16.gmra.mxu0 %v149
    %v503 = vpop.f32.mrf.mxu0
    %v504 = vadd.f32 0.0, %v503
    %v505 = vpop.f32.mrf.mxu0
    %v506 = vadd.f32 0.0, %v505
    %507 = vdwg.mxu0
    %508 = vmatpush.bf16.msra.mxu0 %v389
    %509 = vmatpush.bf16.msra.mxu0 %v383
    %510 = vmatpush.bf16.msra.mxu0 %v377
    %511 = vmatpush.bf16.msra.mxu0 %v371
    %512 = vmatpush.bf16.msra.mxu0 %v365
    %513 = vmatpush.bf16.msra.mxu0 %v359
    %514 = vmatpush.bf16.msra.mxu0 %v353
    %515 = vmatpush.bf16.msra.mxu0 %v347
    %516 = vmatmul.bf16.gmra.mxu0 %v149
    %v517 = vpop.f32.mrf.mxu0
    %v518 = vadd.f32 0.0, %v517
    %v519 = vpop.f32.mrf.mxu0
    %v520 = vadd.f32 0.0, %v519
    %521 = vdwg.mxu0
    %v522 = vpack.c.bf16 %v450, %v448
    %v523 = vpack.c.bf16 %v464, %v462
    %v524 = vpack.c.bf16 %v478, %v476
    %v525 = vpack.c.bf16 %v492, %v490
    %v526 = vpack.c.bf16 %v506, %v504
    %v527 = vpack.c.bf16 %v520, %v518
    %v528 = vld [vmem:[#allocation5] sm:$0xff]
    %v529 = vld [vmem:[#allocation5 + $0x8] sm:$0xff]
    %v530 = vld [vmem:[#allocation5 + $0x10] sm:$0xff]
    %v531 = vld [vmem:[#allocation5 + $0x18] sm:$0xff]
    %v532 = vld [vmem:[#allocation5 + $0x20] sm:$0xff]
    %v533 = vld [vmem:[#allocation5 + $0x28] sm:$0xff]
    %v534 = vld [vmem:[#allocation5 + $0x30] sm:$0xff]
    %v535 = vld [vmem:[#allocation5 + $0x38] sm:$0xff]
    %v536 = vld [vmem:[#allocation5 + $0x40] sm:$0xff]
    %v537 = vld [vmem:[#allocation5 + $0x48] sm:$0xff]
    %v538 = vld [vmem:[#allocation5 + $0x50] sm:$0xff]
    %v539 = vld [vmem:[#allocation5 + $0x58] sm:$0xff]
    %v540 = vld [vmem:[#allocation5 + $0x60] sm:$0xff]
    %v541 = vld [vmem:[#allocation5 + $0x68] sm:$0xff]
    %v542 = vld [vmem:[#allocation5 + $0x70] sm:$0xff]
    %v543 = vld [vmem:[#allocation5 + $0x78] sm:$0xff]
    %v544 = vld [vmem:[#allocation5 + $0x80] sm:$0xff]
    %v545 = vld [vmem:[#allocation5 + $0x88] sm:$0xff]
    %v546 = vld [vmem:[#allocation5 + $0x90] sm:$0xff]
    %v547 = vld [vmem:[#allocation5 + $0x98] sm:$0xff]
    %v548 = vld [vmem:[#allocation5 + $0xa0] sm:$0xff]
    %v549 = vld [vmem:[#allocation5 + $0xa8] sm:$0xff]
    %v550 = vld [vmem:[#allocation5 + $0xb0] sm:$0xff]
    %v551 = vld [vmem:[#allocation5 + $0xb8] sm:$0xff]
    %v552 = vld [vmem:[#allocation5 + $0xc0] sm:$0xff]
    %v553 = vld [vmem:[#allocation5 + $0xc8] sm:$0xff]
    %v554 = vld [vmem:[#allocation5 + $0xd0] sm:$0xff]
    %v555 = vld [vmem:[#allocation5 + $0xd8] sm:$0xff]
    %v556 = vld [vmem:[#allocation5 + $0xe0] sm:$0xff]
    %v557 = vld [vmem:[#allocation5 + $0xe8] sm:$0xff]
    %v558 = vld [vmem:[#allocation5 + $0xf0] sm:$0xff]
    %v559 = vld [vmem:[#allocation5 + $0xf8] sm:$0xff]
    %v560 = vld [vmem:[#allocation5 + $0x100] sm:$0xff]
    %v561 = vld [vmem:[#allocation5 + $0x108] sm:$0xff]
    %v562 = vld [vmem:[#allocation5 + $0x110] sm:$0xff]
    %v563 = vld [vmem:[#allocation5 + $0x118] sm:$0xff]
    %v564 = vld [vmem:[#allocation5 + $0x120] sm:$0xff]
    %v565 = vld [vmem:[#allocation5 + $0x128] sm:$0xff]
    %v566 = vld [vmem:[#allocation5 + $0x130] sm:$0xff]
    %v567 = vld [vmem:[#allocation5 + $0x138] sm:$0xff]
    %v568 = vld [vmem:[#allocation5 + $0x140] sm:$0xff]
    %v569 = vld [vmem:[#allocation5 + $0x148] sm:$0xff]
    %v570 = vld [vmem:[#allocation5 + $0x150] sm:$0xff]
    %v571 = vld [vmem:[#allocation5 + $0x158] sm:$0xff]
    %v572 = vld [vmem:[#allocation5 + $0x160] sm:$0xff]
    %v573 = vld [vmem:[#allocation5 + $0x168] sm:$0xff]
    %v574 = vld [vmem:[#allocation5 + $0x170] sm:$0xff]
    %v575 = vld [vmem:[#allocation5 + $0x178] sm:$0xff]
    %v576 = vld [vmem:[#allocation5 + $0x180] sm:$0xff]
    %v577 = vld [vmem:[#allocation5 + $0x188] sm:$0xff]
    %v578 = vld [vmem:[#allocation5 + $0x190] sm:$0xff]
    %v579 = vld [vmem:[#allocation5 + $0x198] sm:$0xff]
    %v580 = vld [vmem:[#allocation5 + $0x1a0] sm:$0xff]
    %v581 = vld [vmem:[#allocation5 + $0x1a8] sm:$0xff]
    %v582 = vld [vmem:[#allocation5 + $0x1b0] sm:$0xff]
    %v583 = vld [vmem:[#allocation5 + $0x1b8] sm:$0xff]
    %v584 = vld [vmem:[#allocation5 + $0x1c0] sm:$0xff]
    %v585 = vld [vmem:[#allocation5 + $0x1c8] sm:$0xff]
    %v586 = vld [vmem:[#allocation5 + $0x1d0] sm:$0xff]
    %v587 = vld [vmem:[#allocation5 + $0x1d8] sm:$0xff]
    %v588 = vld [vmem:[#allocation5 + $0x1e0] sm:$0xff]
    %v589 = vld [vmem:[#allocation5 + $0x1e8] sm:$0xff]
    %v590 = vld [vmem:[#allocation5 + $0x1f0] sm:$0xff]
    %v591 = vld [vmem:[#allocation5 + $0x1f8] sm:$0xff]
    %v592 = vld [vmem:[#allocation5 + $0x200] sm:$0xff]
    %v593 = vld [vmem:[#allocation5 + $0x208] sm:$0xff]
    %v594 = vld [vmem:[#allocation5 + $0x210] sm:$0xff]
    %v595 = vld [vmem:[#allocation5 + $0x218] sm:$0xff]
    %v596 = vld [vmem:[#allocation5 + $0x220] sm:$0xff]
    %v597 = vld [vmem:[#allocation5 + $0x228] sm:$0xff]
    %v598 = vld [vmem:[#allocation5 + $0x230] sm:$0xff]
    %v599 = vld [vmem:[#allocation5 + $0x238] sm:$0xff]
    %v600 = vld [vmem:[#allocation5 + $0x240] sm:$0xff]
    %v601 = vld [vmem:[#allocation5 + $0x248] sm:$0xff]
    %v602 = vld [vmem:[#allocation5 + $0x250] sm:$0xff]
    %v603 = vld [vmem:[#allocation5 + $0x258] sm:$0xff]
    %v604 = vld [vmem:[#allocation5 + $0x260] sm:$0xff]
    %v605 = vld [vmem:[#allocation5 + $0x268] sm:$0xff]
    %v606 = vld [vmem:[#allocation5 + $0x270] sm:$0xff]
    %v607 = vld [vmem:[#allocation5 + $0x278] sm:$0xff]
    %v608 = vld [vmem:[#allocation5 + $0x280] sm:$0xff]
    %v609 = vld [vmem:[#allocation5 + $0x288] sm:$0xff]
    %v610 = vld [vmem:[#allocation5 + $0x290] sm:$0xff]
    %v611 = vld [vmem:[#allocation5 + $0x298] sm:$0xff]
    %v612 = vld [vmem:[#allocation5 + $0x2a0] sm:$0xff]
    %v613 = vld [vmem:[#allocation5 + $0x2a8] sm:$0xff]
    %v614 = vld [vmem:[#allocation5 + $0x2b0] sm:$0xff]
    %v615 = vld [vmem:[#allocation5 + $0x2b8] sm:$0xff]
    %v616 = vld [vmem:[#allocation5 + $0x2c0] sm:$0xff]
    %v617 = vld [vmem:[#allocation5 + $0x2c8] sm:$0xff]
    %v618 = vld [vmem:[#allocation5 + $0x2d0] sm:$0xff]
    %v619 = vld [vmem:[#allocation5 + $0x2d8] sm:$0xff]
    %v620 = vld [vmem:[#allocation5 + $0x2e0] sm:$0xff]
    %v621 = vld [vmem:[#allocation5 + $0x2e8] sm:$0xff]
    %v622 = vld [vmem:[#allocation5 + $0x2f0] sm:$0xff]
    %v623 = vld [vmem:[#allocation5 + $0x2f8] sm:$0xff]
    %v624 = vld [vmem:[#allocation5 + $0x300] sm:$0xff]
    %v625 = vld [vmem:[#allocation5 + $0x308] sm:$0xff]
    %v626 = vld [vmem:[#allocation5 + $0x310] sm:$0xff]
    %v627 = vld [vmem:[#allocation5 + $0x318] sm:$0xff]
    %v628 = vld [vmem:[#allocation5 + $0x320] sm:$0xff]
    %v629 = vld [vmem:[#allocation5 + $0x328] sm:$0xff]
    %v630 = vld [vmem:[#allocation5 + $0x330] sm:$0xff]
    %v631 = vld [vmem:[#allocation5 + $0x338] sm:$0xff]
    %v632 = vld [vmem:[#allocation5 + $0x340] sm:$0xff]
    %v633 = vld [vmem:[#allocation5 + $0x348] sm:$0xff]
    %v634 = vld [vmem:[#allocation5 + $0x350] sm:$0xff]
    %v635 = vld [vmem:[#allocation5 + $0x358] sm:$0xff]
    %v636 = vld [vmem:[#allocation5 + $0x360] sm:$0xff]
    %v637 = vld [vmem:[#allocation5 + $0x368] sm:$0xff]
    %v638 = vld [vmem:[#allocation5 + $0x370] sm:$0xff]
    %v639 = vld [vmem:[#allocation5 + $0x378] sm:$0xff]
    %v640 = vld [vmem:[#allocation5 + $0x380] sm:$0xff]
    %v641 = vld [vmem:[#allocation5 + $0x388] sm:$0xff]
    %v642 = vld [vmem:[#allocation5 + $0x390] sm:$0xff]
    %v643 = vld [vmem:[#allocation5 + $0x398] sm:$0xff]
    %v644 = vld [vmem:[#allocation5 + $0x3a0] sm:$0xff]
    %v645 = vld [vmem:[#allocation5 + $0x3a8] sm:$0xff]
    %v646 = vld [vmem:[#allocation5 + $0x3b0] sm:$0xff]
    %v647 = vld [vmem:[#allocation5 + $0x3b8] sm:$0xff]
    %v648 = vld [vmem:[#allocation5 + $0x3c0] sm:$0xff]
    %v649 = vld [vmem:[#allocation5 + $0x3c8] sm:$0xff]
    %v650 = vld [vmem:[#allocation5 + $0x3d0] sm:$0xff]
    %v651 = vld [vmem:[#allocation5 + $0x3d8] sm:$0xff]
    %v652 = vld [vmem:[#allocation5 + $0x3e0] sm:$0xff]
    %v653 = vld [vmem:[#allocation5 + $0x3e8] sm:$0xff]
    %v654 = vld [vmem:[#allocation5 + $0x3f0] sm:$0xff]
    %v655 = vld [vmem:[#allocation5 + $0x3f8] sm:$0xff]
    %v656 = vld [vmem:[#allocation5 + $0x400] sm:$0xff]
    %v657 = vld [vmem:[#allocation5 + $0x408] sm:$0xff]
    %v658 = vld [vmem:[#allocation5 + $0x410] sm:$0xff]
    %v659 = vld [vmem:[#allocation5 + $0x418] sm:$0xff]
    %v660 = vld [vmem:[#allocation5 + $0x420] sm:$0xff]
    %v661 = vld [vmem:[#allocation5 + $0x428] sm:$0xff]
    %v662 = vld [vmem:[#allocation5 + $0x430] sm:$0xff]
    %v663 = vld [vmem:[#allocation5 + $0x438] sm:$0xff]
    %v664 = vld [vmem:[#allocation5 + $0x440] sm:$0xff]
    %v665 = vld [vmem:[#allocation5 + $0x448] sm:$0xff]
    %v666 = vld [vmem:[#allocation5 + $0x450] sm:$0xff]
    %v667 = vld [vmem:[#allocation5 + $0x458] sm:$0xff]
    %v668 = vld [vmem:[#allocation5 + $0x460] sm:$0xff]
    %v669 = vld [vmem:[#allocation5 + $0x468] sm:$0xff]
    %v670 = vld [vmem:[#allocation5 + $0x470] sm:$0xff]
    %v671 = vld [vmem:[#allocation5 + $0x478] sm:$0xff]
    %v672 = vld [vmem:[#allocation5 + $0x480] sm:$0xff]
    %v673 = vld [vmem:[#allocation5 + $0x488] sm:$0xff]
    %v674 = vld [vmem:[#allocation5 + $0x490] sm:$0xff]
    %v675 = vld [vmem:[#allocation5 + $0x498] sm:$0xff]
    %v676 = vld [vmem:[#allocation5 + $0x4a0] sm:$0xff]
    %v677 = vld [vmem:[#allocation5 + $0x4a8] sm:$0xff]
    %v678 = vld [vmem:[#allocation5 + $0x4b0] sm:$0xff]
    %v679 = vld [vmem:[#allocation5 + $0x4b8] sm:$0xff]
    %v680 = vld [vmem:[#allocation5 + $0x4c0] sm:$0xff]
    %v681 = vld [vmem:[#allocation5 + $0x4c8] sm:$0xff]
    %v682 = vld [vmem:[#allocation5 + $0x4d0] sm:$0xff]
    %v683 = vld [vmem:[#allocation5 + $0x4d8] sm:$0xff]
    %v684 = vld [vmem:[#allocation5 + $0x4e0] sm:$0xff]
    %v685 = vld [vmem:[#allocation5 + $0x4e8] sm:$0xff]
    %v686 = vld [vmem:[#allocation5 + $0x4f0] sm:$0xff]
    %v687 = vld [vmem:[#allocation5 + $0x4f8] sm:$0xff]
    %v688 = vld [vmem:[#allocation5 + $0x500] sm:$0xff]
    %v689 = vld [vmem:[#allocation5 + $0x508] sm:$0xff]
    %v690 = vld [vmem:[#allocation5 + $0x510] sm:$0xff]
    %v691 = vld [vmem:[#allocation5 + $0x518] sm:$0xff]
    %v692 = vld [vmem:[#allocation5 + $0x520] sm:$0xff]
    %v693 = vld [vmem:[#allocation5 + $0x528] sm:$0xff]
    %v694 = vld [vmem:[#allocation5 + $0x530] sm:$0xff]
    %v695 = vld [vmem:[#allocation5 + $0x538] sm:$0xff]
    %v696 = vld [vmem:[#allocation5 + $0x540] sm:$0xff]
    %v697 = vld [vmem:[#allocation5 + $0x548] sm:$0xff]
    %v698 = vld [vmem:[#allocation5 + $0x550] sm:$0xff]
    %v699 = vld [vmem:[#allocation5 + $0x558] sm:$0xff]
    %v700 = vld [vmem:[#allocation5 + $0x560] sm:$0xff]
    %v701 = vld [vmem:[#allocation5 + $0x568] sm:$0xff]
    %v702 = vld [vmem:[#allocation5 + $0x570] sm:$0xff]
    %v703 = vld [vmem:[#allocation5 + $0x578] sm:$0xff]
    %v704 = vld [vmem:[#allocation5 + $0x580] sm:$0xff]
    %v705 = vld [vmem:[#allocation5 + $0x588] sm:$0xff]
    %v706 = vld [vmem:[#allocation5 + $0x590] sm:$0xff]
    %v707 = vld [vmem:[#allocation5 + $0x598] sm:$0xff]
    %v708 = vld [vmem:[#allocation5 + $0x5a0] sm:$0xff]
    %v709 = vld [vmem:[#allocation5 + $0x5a8] sm:$0xff]
    %v710 = vld [vmem:[#allocation5 + $0x5b0] sm:$0xff]
    %v711 = vld [vmem:[#allocation5 + $0x5b8] sm:$0xff]
    %v712 = vld [vmem:[#allocation5 + $0x5c0] sm:$0xff]
    %v713 = vld [vmem:[#allocation5 + $0x5c8] sm:$0xff]
    %v714 = vld [vmem:[#allocation5 + $0x5d0] sm:$0xff]
    %v715 = vld [vmem:[#allocation5 + $0x5d8] sm:$0xff]
    %v716 = vld [vmem:[#allocation5 + $0x5e0] sm:$0xff]
    %v717 = vld [vmem:[#allocation5 + $0x5e8] sm:$0xff]
    %v718 = vld [vmem:[#allocation5 + $0x5f0] sm:$0xff]
    %v719 = vld [vmem:[#allocation5 + $0x5f8] sm:$0xff]
    %v720 = vld [vmem:[#allocation5 + $0x600] sm:$0xff]
    %v721 = vld [vmem:[#allocation5 + $0x608] sm:$0xff]
    %v722 = vld [vmem:[#allocation5 + $0x610] sm:$0xff]
    %v723 = vld [vmem:[#allocation5 + $0x618] sm:$0xff]
    %v724 = vld [vmem:[#allocation5 + $0x620] sm:$0xff]
    %v725 = vld [vmem:[#allocation5 + $0x628] sm:$0xff]
    %v726 = vld [vmem:[#allocation5 + $0x630] sm:$0xff]
    %v727 = vld [vmem:[#allocation5 + $0x638] sm:$0xff]
    %v728 = vld [vmem:[#allocation5 + $0x640] sm:$0xff]
    %v729 = vld [vmem:[#allocation5 + $0x648] sm:$0xff]
    %v730 = vld [vmem:[#allocation5 + $0x650] sm:$0xff]
    %v731 = vld [vmem:[#allocation5 + $0x658] sm:$0xff]
    %v732 = vld [vmem:[#allocation5 + $0x660] sm:$0xff]
    %v733 = vld [vmem:[#allocation5 + $0x668] sm:$0xff]
    %v734 = vld [vmem:[#allocation5 + $0x670] sm:$0xff]
    %v735 = vld [vmem:[#allocation5 + $0x678] sm:$0xff]
    %v736 = vld [vmem:[#allocation5 + $0x680] sm:$0xff]
    %v737 = vld [vmem:[#allocation5 + $0x688] sm:$0xff]
    %v738 = vld [vmem:[#allocation5 + $0x690] sm:$0xff]
    %v739 = vld [vmem:[#allocation5 + $0x698] sm:$0xff]
    %v740 = vld [vmem:[#allocation5 + $0x6a0] sm:$0xff]
    %v741 = vld [vmem:[#allocation5 + $0x6a8] sm:$0xff]
    %v742 = vld [vmem:[#allocation5 + $0x6b0] sm:$0xff]
    %v743 = vld [vmem:[#allocation5 + $0x6b8] sm:$0xff]
    %v744 = vld [vmem:[#allocation5 + $0x6c0] sm:$0xff]
    %v745 = vld [vmem:[#allocation5 + $0x6c8] sm:$0xff]
    %v746 = vld [vmem:[#allocation5 + $0x6d0] sm:$0xff]
    %v747 = vld [vmem:[#allocation5 + $0x6d8] sm:$0xff]
    %v748 = vld [vmem:[#allocation5 + $0x6e0] sm:$0xff]
    %v749 = vld [vmem:[#allocation5 + $0x6e8] sm:$0xff]
    %v750 = vld [vmem:[#allocation5 + $0x6f0] sm:$0xff]
    %v751 = vld [vmem:[#allocation5 + $0x6f8] sm:$0xff]
    %v752 = vld [vmem:[#allocation5 + $0x700] sm:$0xff]
    %v753 = vld [vmem:[#allocation5 + $0x708] sm:$0xff]
    %v754 = vld [vmem:[#allocation5 + $0x710] sm:$0xff]
    %v755 = vld [vmem:[#allocation5 + $0x718] sm:$0xff]
    %v756 = vld [vmem:[#allocation5 + $0x720] sm:$0xff]
    %v757 = vld [vmem:[#allocation5 + $0x728] sm:$0xff]
    %v758 = vld [vmem:[#allocation5 + $0x730] sm:$0xff]
    %v759 = vld [vmem:[#allocation5 + $0x738] sm:$0xff]
    %v760 = vld [vmem:[#allocation5 + $0x740] sm:$0xff]
    %v761 = vld [vmem:[#allocation5 + $0x748] sm:$0xff]
    %v762 = vld [vmem:[#allocation5 + $0x750] sm:$0xff]
    %v763 = vld [vmem:[#allocation5 + $0x758] sm:$0xff]
    %v764 = vld [vmem:[#allocation5 + $0x760] sm:$0xff]
    %v765 = vld [vmem:[#allocation5 + $0x768] sm:$0xff]
    %v766 = vld [vmem:[#allocation5 + $0x770] sm:$0xff]
    %v767 = vld [vmem:[#allocation5 + $0x778] sm:$0xff]
    %v768 = vld [vmem:[#allocation5 + $0x780] sm:$0xff]
    %v769 = vld [vmem:[#allocation5 + $0x788] sm:$0xff]
    %v770 = vld [vmem:[#allocation5 + $0x790] sm:$0xff]
    %v771 = vld [vmem:[#allocation5 + $0x798] sm:$0xff]
    %v772 = vld [vmem:[#allocation5 + $0x7a0] sm:$0xff]
    %v773 = vld [vmem:[#allocation5 + $0x7a8] sm:$0xff]
    %v774 = vld [vmem:[#allocation5 + $0x7b0] sm:$0xff]
    %v775 = vld [vmem:[#allocation5 + $0x7b8] sm:$0xff]
    %v776 = vld [vmem:[#allocation5 + $0x7c0] sm:$0xff]
    %v777 = vld [vmem:[#allocation5 + $0x7c8] sm:$0xff]
    %v778 = vld [vmem:[#allocation5 + $0x7d0] sm:$0xff]
    %v779 = vld [vmem:[#allocation5 + $0x7d8] sm:$0xff]
    %v780 = vld [vmem:[#allocation5 + $0x7e0] sm:$0xff]
    %v781 = vld [vmem:[#allocation5 + $0x7e8] sm:$0xff]
    %v782 = vld [vmem:[#allocation5 + $0x7f0] sm:$0xff]
    %v783 = vld [vmem:[#allocation5 + $0x7f8] sm:$0xff]
    %v784 = vld [vmem:[#allocation5 + $0x800] sm:$0xff]
    %v785 = vld [vmem:[#allocation5 + $0x808] sm:$0xff]
    %v786 = vld [vmem:[#allocation5 + $0x810] sm:$0xff]
    %v787 = vld [vmem:[#allocation5 + $0x818] sm:$0xff]
    %v788 = vld [vmem:[#allocation5 + $0x820] sm:$0xff]
    %v789 = vld [vmem:[#allocation5 + $0x828] sm:$0xff]
    %v790 = vld [vmem:[#allocation5 + $0x830] sm:$0xff]
    %v791 = vld [vmem:[#allocation5 + $0x838] sm:$0xff]
    %v792 = vld [vmem:[#allocation5 + $0x840] sm:$0xff]
    %v793 = vld [vmem:[#allocation5 + $0x848] sm:$0xff]
    %v794 = vld [vmem:[#allocation5 + $0x850] sm:$0xff]
    %v795 = vld [vmem:[#allocation5 + $0x858] sm:$0xff]
    %v796 = vld [vmem:[#allocation5 + $0x860] sm:$0xff]
    %v797 = vld [vmem:[#allocation5 + $0x868] sm:$0xff]
    %v798 = vld [vmem:[#allocation5 + $0x870] sm:$0xff]
    %v799 = vld [vmem:[#allocation5 + $0x878] sm:$0xff]
    %v800 = vld [vmem:[#allocation5 + $0x880] sm:$0xff]
    %v801 = vld [vmem:[#allocation5 + $0x888] sm:$0xff]
    %v802 = vld [vmem:[#allocation5 + $0x890] sm:$0xff]
    %v803 = vld [vmem:[#allocation5 + $0x898] sm:$0xff]
    %v804 = vld [vmem:[#allocation5 + $0x8a0] sm:$0xff]
    %v805 = vld [vmem:[#allocation5 + $0x8a8] sm:$0xff]
    %v806 = vld [vmem:[#allocation5 + $0x8b0] sm:$0xff]
    %v807 = vld [vmem:[#allocation5 + $0x8b8] sm:$0xff]
    %v808 = vld [vmem:[#allocation5 + $0x8c0] sm:$0xff]
    %v809 = vld [vmem:[#allocation5 + $0x8c8] sm:$0xff]
    %v810 = vld [vmem:[#allocation5 + $0x8d0] sm:$0xff]
    %v811 = vld [vmem:[#allocation5 + $0x8d8] sm:$0xff]
    %v812 = vld [vmem:[#allocation5 + $0x8e0] sm:$0xff]
    %v813 = vld [vmem:[#allocation5 + $0x8e8] sm:$0xff]
    %v814 = vld [vmem:[#allocation5 + $0x8f0] sm:$0xff]
    %v815 = vld [vmem:[#allocation5 + $0x8f8] sm:$0xff]
    %v816 = vld [vmem:[#allocation7] sm:$0x3f]
    %v818 = vperm.slane %v816, 0
    %v819 = vperm.slane %v816, 1
    %v820 = vperm.slane %v816, 2
    %v821 = vperm.slane %v816, 3
    %v822 = vperm.slane %v816, 4
    %v823 = vperm.slane %v816, 5
    %v1118 = vunpack.c.l.b16 %v528
    %v1119 = vunpack.c.h.b16 %v528
    %v1120 = vunpack.c.l.b16 %v529
    %v1121 = vunpack.c.h.b16 %v529
    %v1122 = vunpack.c.l.b16 %v530
    %v1123 = vunpack.c.h.b16 %v530
    %v1124 = vunpack.c.l.b16 %v531
    %v1125 = vunpack.c.h.b16 %v531
    %v1126 = vunpack.c.l.b16 %v532
    %v1127 = vunpack.c.h.b16 %v532
    %v1128 = vunpack.c.l.b16 %v533
    %v1129 = vunpack.c.h.b16 %v533
    %v1130 = vunpack.c.l.b16 %v534
    %v1131 = vunpack.c.h.b16 %v534
    %v1132 = vunpack.c.l.b16 %v535
    %v1133 = vunpack.c.h.b16 %v535
    %v1134 = vunpack.c.l.b16 %v536
    %v1135 = vunpack.c.h.b16 %v536
    %v1136 = vunpack.c.l.b16 %v537
    %v1137 = vunpack.c.h.b16 %v537
    %v1138 = vunpack.c.l.b16 %v538
    %v1139 = vunpack.c.h.b16 %v538
    %v1140 = vunpack.c.l.b16 %v539
    %v1141 = vunpack.c.h.b16 %v539
    %v1142 = vunpack.c.l.b16 %v540
    %v1143 = vunpack.c.h.b16 %v540
    %v1144 = vunpack.c.l.b16 %v541
    %v1145 = vunpack.c.h.b16 %v541
    %v1146 = vunpack.c.l.b16 %v542
    %v1147 = vunpack.c.h.b16 %v542
    %v1148 = vunpack.c.l.b16 %v543
    %v1149 = vunpack.c.h.b16 %v543
    %v1150 = vunpack.c.l.b16 %v544
    %v1151 = vunpack.c.h.b16 %v544
    %v1152 = vunpack.c.l.b16 %v545
    %v1153 = vunpack.c.h.b16 %v545
    %v1154 = vunpack.c.l.b16 %v546
    %v1155 = vunpack.c.h.b16 %v546
    %v1156 = vunpack.c.l.b16 %v547
    %v1157 = vunpack.c.h.b16 %v547
    %v1158 = vunpack.c.l.b16 %v548
    %v1159 = vunpack.c.h.b16 %v548
    %v1160 = vunpack.c.l.b16 %v549
    %v1161 = vunpack.c.h.b16 %v549
    %v1162 = vunpack.c.l.b16 %v550
    %v1163 = vunpack.c.h.b16 %v550
    %v1164 = vunpack.c.l.b16 %v551
    %v1165 = vunpack.c.h.b16 %v551
    %v1166 = vunpack.c.l.b16 %v552
    %v1167 = vunpack.c.h.b16 %v552
    %v1168 = vunpack.c.l.b16 %v553
    %v1169 = vunpack.c.h.b16 %v553
    %v1170 = vunpack.c.l.b16 %v554
    %v1171 = vunpack.c.h.b16 %v554
    %v1172 = vunpack.c.l.b16 %v555
    %v1173 = vunpack.c.h.b16 %v555
    %v1174 = vunpack.c.l.b16 %v556
    %v1175 = vunpack.c.h.b16 %v556
    %v1176 = vunpack.c.l.b16 %v557
    %v1177 = vunpack.c.h.b16 %v557
    %v1178 = vunpack.c.l.b16 %v558
    %v1179 = vunpack.c.h.b16 %v558
    %v1180 = vunpack.c.l.b16 %v559
    %v1181 = vunpack.c.h.b16 %v559
    %v1182 = vunpack.c.l.b16 %v560
    %v1183 = vunpack.c.h.b16 %v560
    %v1184 = vunpack.c.l.b16 %v561
    %v1185 = vunpack.c.h.b16 %v561
    %v1186 = vunpack.c.l.b16 %v562
    %v1187 = vunpack.c.h.b16 %v562
    %v1188 = vunpack.c.l.b16 %v563
    %v1189 = vunpack.c.h.b16 %v563
    %v1190 = vunpack.c.l.b16 %v564
    %v1191 = vunpack.c.h.b16 %v564
    %v1192 = vunpack.c.l.b16 %v565
    %v1193 = vunpack.c.h.b16 %v565
    %v1194 = vunpack.c.l.b16 %v566
    %v1195 = vunpack.c.h.b16 %v566
    %v1196 = vunpack.c.l.b16 %v567
    %v1197 = vunpack.c.h.b16 %v567
    %v1198 = vunpack.c.l.b16 %v568
    %v1199 = vunpack.c.h.b16 %v568
    %v1200 = vunpack.c.l.b16 %v569
    %v1201 = vunpack.c.h.b16 %v569
    %v1202 = vunpack.c.l.b16 %v570
    %v1203 = vunpack.c.h.b16 %v570
    %v1204 = vunpack.c.l.b16 %v571
    %v1205 = vunpack.c.h.b16 %v571
    %v1206 = vunpack.c.l.b16 %v572
    %v1207 = vunpack.c.h.b16 %v572
    %v1208 = vunpack.c.l.b16 %v573
    %v1209 = vunpack.c.h.b16 %v573
    %v1210 = vunpack.c.l.b16 %v574
    %v1211 = vunpack.c.h.b16 %v574
    %v1212 = vunpack.c.l.b16 %v575
    %v1213 = vunpack.c.h.b16 %v575
    %v1214 = vunpack.c.l.b16 %v576
    %v1215 = vunpack.c.h.b16 %v576
    %v1216 = vunpack.c.l.b16 %v577
    %v1217 = vunpack.c.h.b16 %v577
    %v1218 = vunpack.c.l.b16 %v578
    %v1219 = vunpack.c.h.b16 %v578
    %v1220 = vunpack.c.l.b16 %v579
    %v1221 = vunpack.c.h.b16 %v579
    %v1222 = vunpack.c.l.b16 %v580
    %v1223 = vunpack.c.h.b16 %v580
    %v1224 = vunpack.c.l.b16 %v581
    %v1225 = vunpack.c.h.b16 %v581
    %v1226 = vunpack.c.l.b16 %v582
    %v1227 = vunpack.c.h.b16 %v582
    %v1228 = vunpack.c.l.b16 %v583
    %v1229 = vunpack.c.h.b16 %v583
    %v1230 = vunpack.c.l.b16 %v584
    %v1231 = vunpack.c.h.b16 %v584
    %v1232 = vunpack.c.l.b16 %v585
    %v1233 = vunpack.c.h.b16 %v585
    %v1234 = vunpack.c.l.b16 %v586
    %v1235 = vunpack.c.h.b16 %v586
    %v1236 = vunpack.c.l.b16 %v587
    %v1237 = vunpack.c.h.b16 %v587
    %v1238 = vunpack.c.l.b16 %v588
    %v1239 = vunpack.c.h.b16 %v588
    %v1240 = vunpack.c.l.b16 %v589
    %v1241 = vunpack.c.h.b16 %v589
    %v1242 = vunpack.c.l.b16 %v590
    %v1243 = vunpack.c.h.b16 %v590
    %v1244 = vunpack.c.l.b16 %v591
    %v1245 = vunpack.c.h.b16 %v591
    %v1246 = vunpack.c.l.b16 %v592
    %v1247 = vunpack.c.h.b16 %v592
    %v1248 = vunpack.c.l.b16 %v593
    %v1249 = vunpack.c.h.b16 %v593
    %v1250 = vunpack.c.l.b16 %v594
    %v1251 = vunpack.c.h.b16 %v594
    %v1252 = vunpack.c.l.b16 %v595
    %v1253 = vunpack.c.h.b16 %v595
    %v1254 = vunpack.c.l.b16 %v596
    %v1255 = vunpack.c.h.b16 %v596
    %v1256 = vunpack.c.l.b16 %v597
    %v1257 = vunpack.c.h.b16 %v597
    %v1258 = vunpack.c.l.b16 %v598
    %v1259 = vunpack.c.h.b16 %v598
    %v1260 = vunpack.c.l.b16 %v599
    %v1261 = vunpack.c.h.b16 %v599
    %v1262 = vunpack.c.l.b16 %v600
    %v1263 = vunpack.c.h.b16 %v600
    %v1264 = vunpack.c.l.b16 %v601
    %v1265 = vunpack.c.h.b16 %v601
    %v1266 = vunpack.c.l.b16 %v602
    %v1267 = vunpack.c.h.b16 %v602
    %v1268 = vunpack.c.l.b16 %v603
    %v1269 = vunpack.c.h.b16 %v603
    %v1270 = vunpack.c.l.b16 %v604
    %v1271 = vunpack.c.h.b16 %v604
    %v1272 = vunpack.c.l.b16 %v605
    %v1273 = vunpack.c.h.b16 %v605
    %v1274 = vunpack.c.l.b16 %v606
    %v1275 = vunpack.c.h.b16 %v606
    %v1276 = vunpack.c.l.b16 %v607
    %v1277 = vunpack.c.h.b16 %v607
    %v1278 = vunpack.c.l.b16 %v608
    %v1279 = vunpack.c.h.b16 %v608
    %v1280 = vunpack.c.l.b16 %v609
    %v1281 = vunpack.c.h.b16 %v609
    %v1282 = vunpack.c.l.b16 %v610
    %v1283 = vunpack.c.h.b16 %v610
    %v1284 = vunpack.c.l.b16 %v611
    %v1285 = vunpack.c.h.b16 %v611
    %v1286 = vunpack.c.l.b16 %v612
    %v1287 = vunpack.c.h.b16 %v612
    %v1288 = vunpack.c.l.b16 %v613
    %v1289 = vunpack.c.h.b16 %v613
    %v1290 = vunpack.c.l.b16 %v614
    %v1291 = vunpack.c.h.b16 %v614
    %v1292 = vunpack.c.l.b16 %v615
    %v1293 = vunpack.c.h.b16 %v615
    %v1294 = vunpack.c.l.b16 %v616
    %v1295 = vunpack.c.h.b16 %v616
    %v1296 = vunpack.c.l.b16 %v617
    %v1297 = vunpack.c.h.b16 %v617
    %v1298 = vunpack.c.l.b16 %v618
    %v1299 = vunpack.c.h.b16 %v618
    %v1300 = vunpack.c.l.b16 %v619
    %v1301 = vunpack.c.h.b16 %v619
    %v1302 = vunpack.c.l.b16 %v620
    %v1303 = vunpack.c.h.b16 %v620
    %v1304 = vunpack.c.l.b16 %v621
    %v1305 = vunpack.c.h.b16 %v621
    %v1306 = vunpack.c.l.b16 %v622
    %v1307 = vunpack.c.h.b16 %v622
    %v1308 = vunpack.c.l.b16 %v623
    %v1309 = vunpack.c.h.b16 %v623
    %v1310 = vunpack.c.l.b16 %v624
    %v1311 = vunpack.c.h.b16 %v624
    %v1312 = vunpack.c.l.b16 %v625
    %v1313 = vunpack.c.h.b16 %v625
    %v1314 = vunpack.c.l.b16 %v626
    %v1315 = vunpack.c.h.b16 %v626
    %v1316 = vunpack.c.l.b16 %v627
    %v1317 = vunpack.c.h.b16 %v627
    %v1318 = vunpack.c.l.b16 %v628
    %v1319 = vunpack.c.h.b16 %v628
    %v1320 = vunpack.c.l.b16 %v629
    %v1321 = vunpack.c.h.b16 %v629
    %v1322 = vunpack.c.l.b16 %v630
    %v1323 = vunpack.c.h.b16 %v630
    %v1324 = vunpack.c.l.b16 %v631
    %v1325 = vunpack.c.h.b16 %v631
    %v1326 = vunpack.c.l.b16 %v632
    %v1327 = vunpack.c.h.b16 %v632
    %v1328 = vunpack.c.l.b16 %v633
    %v1329 = vunpack.c.h.b16 %v633
    %v1330 = vunpack.c.l.b16 %v634
    %v1331 = vunpack.c.h.b16 %v634
    %v1332 = vunpack.c.l.b16 %v635
    %v1333 = vunpack.c.h.b16 %v635
    %v1334 = vunpack.c.l.b16 %v636
    %v1335 = vunpack.c.h.b16 %v636
    %v1336 = vunpack.c.l.b16 %v637
    %v1337 = vunpack.c.h.b16 %v637
    %v1338 = vunpack.c.l.b16 %v638
    %v1339 = vunpack.c.h.b16 %v638
    %v1340 = vunpack.c.l.b16 %v639
    %v1341 = vunpack.c.h.b16 %v639
    %v1342 = vunpack.c.l.b16 %v640
    %v1343 = vunpack.c.h.b16 %v640
    %v1344 = vunpack.c.l.b16 %v641
    %v1345 = vunpack.c.h.b16 %v641
    %v1346 = vunpack.c.l.b16 %v642
    %v1347 = vunpack.c.h.b16 %v642
    %v1348 = vunpack.c.l.b16 %v643
    %v1349 = vunpack.c.h.b16 %v643
    %v1350 = vunpack.c.l.b16 %v644
    %v1351 = vunpack.c.h.b16 %v644
    %v1352 = vunpack.c.l.b16 %v645
    %v1353 = vunpack.c.h.b16 %v645
    %v1354 = vunpack.c.l.b16 %v646
    %v1355 = vunpack.c.h.b16 %v646
    %v1356 = vunpack.c.l.b16 %v647
    %v1357 = vunpack.c.h.b16 %v647
    %v1358 = vunpack.c.l.b16 %v648
    %v1359 = vunpack.c.h.b16 %v648
    %v1360 = vunpack.c.l.b16 %v649
    %v1361 = vunpack.c.h.b16 %v649
    %v1362 = vunpack.c.l.b16 %v650
    %v1363 = vunpack.c.h.b16 %v650
    %v1364 = vunpack.c.l.b16 %v651
    %v1365 = vunpack.c.h.b16 %v651
    %v1366 = vunpack.c.l.b16 %v652
    %v1367 = vunpack.c.h.b16 %v652
    %v1368 = vunpack.c.l.b16 %v653
    %v1369 = vunpack.c.h.b16 %v653
    %v1370 = vunpack.c.l.b16 %v654
    %v1371 = vunpack.c.h.b16 %v654
    %v1372 = vunpack.c.l.b16 %v655
    %v1373 = vunpack.c.h.b16 %v655
    %v1374 = vunpack.c.l.b16 %v656
    %v1375 = vunpack.c.h.b16 %v656
    %v1376 = vunpack.c.l.b16 %v657
    %v1377 = vunpack.c.h.b16 %v657
    %v1378 = vunpack.c.l.b16 %v658
    %v1379 = vunpack.c.h.b16 %v658
    %v1380 = vunpack.c.l.b16 %v659
    %v1381 = vunpack.c.h.b16 %v659
    %v1382 = vunpack.c.l.b16 %v660
    %v1383 = vunpack.c.h.b16 %v660
    %v1384 = vunpack.c.l.b16 %v661
    %v1385 = vunpack.c.h.b16 %v661
    %v1386 = vunpack.c.l.b16 %v662
    %v1387 = vunpack.c.h.b16 %v662
    %v1388 = vunpack.c.l.b16 %v663
    %v1389 = vunpack.c.h.b16 %v663
    %v1390 = vunpack.c.l.b16 %v664
    %v1391 = vunpack.c.h.b16 %v664
    %v1392 = vunpack.c.l.b16 %v665
    %v1393 = vunpack.c.h.b16 %v665
    %v1394 = vunpack.c.l.b16 %v666
    %v1395 = vunpack.c.h.b16 %v666
    %v1396 = vunpack.c.l.b16 %v667
    %v1397 = vunpack.c.h.b16 %v667
    %v1398 = vunpack.c.l.b16 %v668
    %v1399 = vunpack.c.h.b16 %v668
    %v1400 = vunpack.c.l.b16 %v669
    %v1401 = vunpack.c.h.b16 %v669
    %v1402 = vunpack.c.l.b16 %v670
    %v1403 = vunpack.c.h.b16 %v670
    %v1404 = vunpack.c.l.b16 %v671
    %v1405 = vunpack.c.h.b16 %v671
    %v1406 = vunpack.c.l.b16 %v672
    %v1407 = vunpack.c.h.b16 %v672
    %v1408 = vunpack.c.l.b16 %v673
    %v1409 = vunpack.c.h.b16 %v673
    %v1410 = vunpack.c.l.b16 %v674
    %v1411 = vunpack.c.h.b16 %v674
    %v1412 = vunpack.c.l.b16 %v675
    %v1413 = vunpack.c.h.b16 %v675
    %v1414 = vunpack.c.l.b16 %v676
    %v1415 = vunpack.c.h.b16 %v676
    %v1416 = vunpack.c.l.b16 %v677
    %v1417 = vunpack.c.h.b16 %v677
    %v1418 = vunpack.c.l.b16 %v678
    %v1419 = vunpack.c.h.b16 %v678
    %v1420 = vunpack.c.l.b16 %v679
    %v1421 = vunpack.c.h.b16 %v679
    %v1422 = vunpack.c.l.b16 %v680
    %v1423 = vunpack.c.h.b16 %v680
    %v1424 = vunpack.c.l.b16 %v681
    %v1425 = vunpack.c.h.b16 %v681
    %v1426 = vunpack.c.l.b16 %v682
    %v1427 = vunpack.c.h.b16 %v682
    %v1428 = vunpack.c.l.b16 %v683
    %v1429 = vunpack.c.h.b16 %v683
    %v1430 = vunpack.c.l.b16 %v684
    %v1431 = vunpack.c.h.b16 %v684
    %v1432 = vunpack.c.l.b16 %v685
    %v1433 = vunpack.c.h.b16 %v685
    %v1434 = vunpack.c.l.b16 %v686
    %v1435 = vunpack.c.h.b16 %v686
    %v1436 = vunpack.c.l.b16 %v687
    %v1437 = vunpack.c.h.b16 %v687
    %v1438 = vunpack.c.l.b16 %v688
    %v1439 = vunpack.c.h.b16 %v688
    %v1440 = vunpack.c.l.b16 %v689
    %v1441 = vunpack.c.h.b16 %v689
    %v1442 = vunpack.c.l.b16 %v690
    %v1443 = vunpack.c.h.b16 %v690
    %v1444 = vunpack.c.l.b16 %v691
    %v1445 = vunpack.c.h.b16 %v691
    %v1446 = vunpack.c.l.b16 %v692
    %v1447 = vunpack.c.h.b16 %v692
    %v1448 = vunpack.c.l.b16 %v693
    %v1449 = vunpack.c.h.b16 %v693
    %v1450 = vunpack.c.l.b16 %v694
    %v1451 = vunpack.c.h.b16 %v694
    %v1452 = vunpack.c.l.b16 %v695
    %v1453 = vunpack.c.h.b16 %v695
    %v1454 = vunpack.c.l.b16 %v696
    %v1455 = vunpack.c.h.b16 %v696
    %v1456 = vunpack.c.l.b16 %v697
    %v1457 = vunpack.c.h.b16 %v697
    %v1458 = vunpack.c.l.b16 %v698
    %v1459 = vunpack.c.h.b16 %v698
    %v1460 = vunpack.c.l.b16 %v699
    %v1461 = vunpack.c.h.b16 %v699
    %v1462 = vunpack.c.l.b16 %v700
    %v1463 = vunpack.c.h.b16 %v700
    %v1464 = vunpack.c.l.b16 %v701
    %v1465 = vunpack.c.h.b16 %v701
    %v1466 = vunpack.c.l.b16 %v702
    %v1467 = vunpack.c.h.b16 %v702
    %v1468 = vunpack.c.l.b16 %v703
    %v1469 = vunpack.c.h.b16 %v703
    %v1470 = vunpack.c.l.b16 %v704
    %v1471 = vunpack.c.h.b16 %v704
    %v1472 = vunpack.c.l.b16 %v705
    %v1473 = vunpack.c.h.b16 %v705
    %v1474 = vunpack.c.l.b16 %v706
    %v1475 = vunpack.c.h.b16 %v706
    %v1476 = vunpack.c.l.b16 %v707
    %v1477 = vunpack.c.h.b16 %v707
    %v1478 = vunpack.c.l.b16 %v708
    %v1479 = vunpack.c.h.b16 %v708
    %v1480 = vunpack.c.l.b16 %v709
    %v1481 = vunpack.c.h.b16 %v709
    %v1482 = vunpack.c.l.b16 %v710
    %v1483 = vunpack.c.h.b16 %v710
    %v1484 = vunpack.c.l.b16 %v711
    %v1485 = vunpack.c.h.b16 %v711
    %v1486 = vunpack.c.l.b16 %v712
    %v1487 = vunpack.c.h.b16 %v712
    %v1488 = vunpack.c.l.b16 %v713
    %v1489 = vunpack.c.h.b16 %v713
    %v1490 = vunpack.c.l.b16 %v714
    %v1491 = vunpack.c.h.b16 %v714
    %v1492 = vunpack.c.l.b16 %v715
    %v1493 = vunpack.c.h.b16 %v715
    %v1494 = vunpack.c.l.b16 %v716
    %v1495 = vunpack.c.h.b16 %v716
    %v1496 = vunpack.c.l.b16 %v717
    %v1497 = vunpack.c.h.b16 %v717
    %v1498 = vunpack.c.l.b16 %v718
    %v1499 = vunpack.c.h.b16 %v718
    %v1500 = vunpack.c.l.b16 %v719
    %v1501 = vunpack.c.h.b16 %v719
    %v1502 = vunpack.c.l.b16 %v720
    %v1503 = vunpack.c.h.b16 %v720
    %v1504 = vunpack.c.l.b16 %v721
    %v1505 = vunpack.c.h.b16 %v721
    %v1506 = vunpack.c.l.b16 %v722
    %v1507 = vunpack.c.h.b16 %v722
    %v1508 = vunpack.c.l.b16 %v723
    %v1509 = vunpack.c.h.b16 %v723
    %v1510 = vunpack.c.l.b16 %v724
    %v1511 = vunpack.c.h.b16 %v724
    %v1512 = vunpack.c.l.b16 %v725
    %v1513 = vunpack.c.h.b16 %v725
    %v1514 = vunpack.c.l.b16 %v726
    %v1515 = vunpack.c.h.b16 %v726
    %v1516 = vunpack.c.l.b16 %v727
    %v1517 = vunpack.c.h.b16 %v727
    %v1518 = vunpack.c.l.b16 %v728
    %v1519 = vunpack.c.h.b16 %v728
    %v1520 = vunpack.c.l.b16 %v729
    %v1521 = vunpack.c.h.b16 %v729
    %v1522 = vunpack.c.l.b16 %v730
    %v1523 = vunpack.c.h.b16 %v730
    %v1524 = vunpack.c.l.b16 %v731
    %v1525 = vunpack.c.h.b16 %v731
    %v1526 = vunpack.c.l.b16 %v732
    %v1527 = vunpack.c.h.b16 %v732
    %v1528 = vunpack.c.l.b16 %v733
    %v1529 = vunpack.c.h.b16 %v733
    %v1530 = vunpack.c.l.b16 %v734
    %v1531 = vunpack.c.h.b16 %v734
    %v1532 = vunpack.c.l.b16 %v735
    %v1533 = vunpack.c.h.b16 %v735
    %v1534 = vunpack.c.l.b16 %v736
    %v1535 = vunpack.c.h.b16 %v736
    %v1536 = vunpack.c.l.b16 %v737
    %v1537 = vunpack.c.h.b16 %v737
    %v1538 = vunpack.c.l.b16 %v738
    %v1539 = vunpack.c.h.b16 %v738
    %v1540 = vunpack.c.l.b16 %v739
    %v1541 = vunpack.c.h.b16 %v739
    %v1542 = vunpack.c.l.b16 %v740
    %v1543 = vunpack.c.h.b16 %v740
    %v1544 = vunpack.c.l.b16 %v741
    %v1545 = vunpack.c.h.b16 %v741
    %v1546 = vunpack.c.l.b16 %v742
    %v1547 = vunpack.c.h.b16 %v742
    %v1548 = vunpack.c.l.b16 %v743
    %v1549 = vunpack.c.h.b16 %v743
    %v1550 = vunpack.c.l.b16 %v744
    %v1551 = vunpack.c.h.b16 %v744
    %v1552 = vunpack.c.l.b16 %v745
    %v1553 = vunpack.c.h.b16 %v745
    %v1554 = vunpack.c.l.b16 %v746
    %v1555 = vunpack.c.h.b16 %v746
    %v1556 = vunpack.c.l.b16 %v747
    %v1557 = vunpack.c.h.b16 %v747
    %v1558 = vunpack.c.l.b16 %v748
    %v1559 = vunpack.c.h.b16 %v748
    %v1560 = vunpack.c.l.b16 %v749
    %v1561 = vunpack.c.h.b16 %v749
    %v1562 = vunpack.c.l.b16 %v750
    %v1563 = vunpack.c.h.b16 %v750
    %v1564 = vunpack.c.l.b16 %v751
    %v1565 = vunpack.c.h.b16 %v751
    %v1566 = vunpack.c.l.b16 %v752
    %v1567 = vunpack.c.h.b16 %v752
    %v1568 = vunpack.c.l.b16 %v753
    %v1569 = vunpack.c.h.b16 %v753
    %v1570 = vunpack.c.l.b16 %v754
    %v1571 = vunpack.c.h.b16 %v754
    %v1572 = vunpack.c.l.b16 %v755
    %v1573 = vunpack.c.h.b16 %v755
    %v1574 = vunpack.c.l.b16 %v756
    %v1575 = vunpack.c.h.b16 %v756
    %v1576 = vunpack.c.l.b16 %v757
    %v1577 = vunpack.c.h.b16 %v757
    %v1578 = vunpack.c.l.b16 %v758
    %v1579 = vunpack.c.h.b16 %v758
    %v1580 = vunpack.c.l.b16 %v759
    %v1581 = vunpack.c.h.b16 %v759
    %v1582 = vunpack.c.l.b16 %v760
    %v1583 = vunpack.c.h.b16 %v760
    %v1584 = vunpack.c.l.b16 %v761
    %v1585 = vunpack.c.h.b16 %v761
    %v1586 = vunpack.c.l.b16 %v762
    %v1587 = vunpack.c.h.b16 %v762
    %v1588 = vunpack.c.l.b16 %v763
    %v1589 = vunpack.c.h.b16 %v763
    %v1590 = vunpack.c.l.b16 %v764
    %v1591 = vunpack.c.h.b16 %v764
    %v1592 = vunpack.c.l.b16 %v765
    %v1593 = vunpack.c.h.b16 %v765
    %v1594 = vunpack.c.l.b16 %v766
    %v1595 = vunpack.c.h.b16 %v766
    %v1596 = vunpack.c.l.b16 %v767
    %v1597 = vunpack.c.h.b16 %v767
    %v1598 = vunpack.c.l.b16 %v768
    %v1599 = vunpack.c.h.b16 %v768
    %v1600 = vunpack.c.l.b16 %v769
    %v1601 = vunpack.c.h.b16 %v769
    %v1602 = vunpack.c.l.b16 %v770
    %v1603 = vunpack.c.h.b16 %v770
    %v1604 = vunpack.c.l.b16 %v771
    %v1605 = vunpack.c.h.b16 %v771
    %v1606 = vunpack.c.l.b16 %v772
    %v1607 = vunpack.c.h.b16 %v772
    %v1608 = vunpack.c.l.b16 %v773
    %v1609 = vunpack.c.h.b16 %v773
    %v1610 = vunpack.c.l.b16 %v774
    %v1611 = vunpack.c.h.b16 %v774
    %v1612 = vunpack.c.l.b16 %v775
    %v1613 = vunpack.c.h.b16 %v775
    %v1614 = vunpack.c.l.b16 %v776
    %v1615 = vunpack.c.h.b16 %v776
    %v1616 = vunpack.c.l.b16 %v777
    %v1617 = vunpack.c.h.b16 %v777
    %v1618 = vunpack.c.l.b16 %v778
    %v1619 = vunpack.c.h.b16 %v778
    %v1620 = vunpack.c.l.b16 %v779
    %v1621 = vunpack.c.h.b16 %v779
    %v1622 = vunpack.c.l.b16 %v780
    %v1623 = vunpack.c.h.b16 %v780
    %v1624 = vunpack.c.l.b16 %v781
    %v1625 = vunpack.c.h.b16 %v781
    %v1626 = vunpack.c.l.b16 %v782
    %v1627 = vunpack.c.h.b16 %v782
    %v1628 = vunpack.c.l.b16 %v783
    %v1629 = vunpack.c.h.b16 %v783
    %v1630 = vunpack.c.l.b16 %v784
    %v1631 = vunpack.c.h.b16 %v784
    %v1632 = vunpack.c.l.b16 %v785
    %v1633 = vunpack.c.h.b16 %v785
    %v1634 = vunpack.c.l.b16 %v786
    %v1635 = vunpack.c.h.b16 %v786
    %v1636 = vunpack.c.l.b16 %v787
    %v1637 = vunpack.c.h.b16 %v787
    %v1638 = vunpack.c.l.b16 %v788
    %v1639 = vunpack.c.h.b16 %v788
    %v1640 = vunpack.c.l.b16 %v789
    %v1641 = vunpack.c.h.b16 %v789
    %v1642 = vunpack.c.l.b16 %v790
    %v1643 = vunpack.c.h.b16 %v790
    %v1644 = vunpack.c.l.b16 %v791
    %v1645 = vunpack.c.h.b16 %v791
    %v1646 = vunpack.c.l.b16 %v792
    %v1647 = vunpack.c.h.b16 %v792
    %v1648 = vunpack.c.l.b16 %v793
    %v1649 = vunpack.c.h.b16 %v793
    %v1650 = vunpack.c.l.b16 %v794
    %v1651 = vunpack.c.h.b16 %v794
    %v1652 = vunpack.c.l.b16 %v795
    %v1653 = vunpack.c.h.b16 %v795
    %v1654 = vunpack.c.l.b16 %v796
    %v1655 = vunpack.c.h.b16 %v796
    %v1656 = vunpack.c.l.b16 %v797
    %v1657 = vunpack.c.h.b16 %v797
    %v1658 = vunpack.c.l.b16 %v798
    %v1659 = vunpack.c.h.b16 %v798
    %v1660 = vunpack.c.l.b16 %v799
    %v1661 = vunpack.c.h.b16 %v799
    %v1662 = vunpack.c.l.b16 %v800
    %v1663 = vunpack.c.h.b16 %v800
    %v1664 = vunpack.c.l.b16 %v801
    %v1665 = vunpack.c.h.b16 %v801
    %v1666 = vunpack.c.l.b16 %v802
    %v1667 = vunpack.c.h.b16 %v802
    %v1668 = vunpack.c.l.b16 %v803
    %v1669 = vunpack.c.h.b16 %v803
    %v1670 = vunpack.c.l.b16 %v804
    %v1671 = vunpack.c.h.b16 %v804
    %v1672 = vunpack.c.l.b16 %v805
    %v1673 = vunpack.c.h.b16 %v805
    %v1674 = vunpack.c.l.b16 %v806
    %v1675 = vunpack.c.h.b16 %v806
    %v1676 = vunpack.c.l.b16 %v807
    %v1677 = vunpack.c.h.b16 %v807
    %v1678 = vunpack.c.l.b16 %v808
    %v1679 = vunpack.c.h.b16 %v808
    %v1680 = vunpack.c.l.b16 %v809
    %v1681 = vunpack.c.h.b16 %v809
    %v1682 = vunpack.c.l.b16 %v810
    %v1683 = vunpack.c.h.b16 %v810
    %v1684 = vunpack.c.l.b16 %v811
    %v1685 = vunpack.c.h.b16 %v811
    %v1686 = vunpack.c.l.b16 %v812
    %v1687 = vunpack.c.h.b16 %v812
    %v1688 = vunpack.c.l.b16 %v813
    %v1689 = vunpack.c.h.b16 %v813
    %v1690 = vunpack.c.l.b16 %v814
    %v1691 = vunpack.c.h.b16 %v814
    %v1692 = vunpack.c.l.b16 %v815
    %v1693 = vunpack.c.h.b16 %v815
    %v1694 = vpack.c.b16 %v1124, %v1118
    %v1695 = vpack.c.b16 %v1125, %v1119
    %v1696 = vpack.c.b16 %v1126, %v1120
    %v1697 = vpack.c.b16 %v1127, %v1121
    %v1698 = vpack.c.b16 %v1128, %v1122
    %v1699 = vpack.c.b16 %v1129, %v1123
    %v1700 = vpack.c.b16 %v1136, %v1130
    %v1701 = vpack.c.b16 %v1137, %v1131
    %v1702 = vpack.c.b16 %v1138, %v1132
    %v1703 = vpack.c.b16 %v1139, %v1133
    %v1704 = vpack.c.b16 %v1140, %v1134
    %v1705 = vpack.c.b16 %v1141, %v1135
    %v1706 = vpack.c.b16 %v1148, %v1142
    %v1707 = vpack.c.b16 %v1149, %v1143
    %v1708 = vpack.c.b16 %v1150, %v1144
    %v1709 = vpack.c.b16 %v1151, %v1145
    %v1710 = vpack.c.b16 %v1152, %v1146
    %v1711 = vpack.c.b16 %v1153, %v1147
    %v1712 = vpack.c.b16 %v1160, %v1154
    %v1713 = vpack.c.b16 %v1161, %v1155
    %v1714 = vpack.c.b16 %v1162, %v1156
    %v1715 = vpack.c.b16 %v1163, %v1157
    %v1716 = vpack.c.b16 %v1164, %v1158
    %v1717 = vpack.c.b16 %v1165, %v1159
    %v1718 = vpack.c.b16 %v1172, %v1166
    %v1719 = vpack.c.b16 %v1173, %v1167
    %v1720 = vpack.c.b16 %v1174, %v1168
    %v1721 = vpack.c.b16 %v1175, %v1169
    %v1722 = vpack.c.b16 %v1176, %v1170
    %v1723 = vpack.c.b16 %v1177, %v1171
    %v1724 = vpack.c.b16 %v1184, %v1178
    %v1725 = vpack.c.b16 %v1185, %v1179
    %v1726 = vpack.c.b16 %v1186, %v1180
    %v1727 = vpack.c.b16 %v1187, %v1181
    %v1728 = vpack.c.b16 %v1188, %v1182
    %v1729 = vpack.c.b16 %v1189, %v1183
    %v1730 = vpack.c.b16 %v1196, %v1190
    %v1731 = vpack.c.b16 %v1197, %v1191
    %v1732 = vpack.c.b16 %v1198, %v1192
    %v1733 = vpack.c.b16 %v1199, %v1193
    %v1734 = vpack.c.b16 %v1200, %v1194
    %v1735 = vpack.c.b16 %v1201, %v1195
    %v1736 = vpack.c.b16 %v1208, %v1202
    %v1737 = vpack.c.b16 %v1209, %v1203
    %v1738 = vpack.c.b16 %v1210, %v1204
    %v1739 = vpack.c.b16 %v1211, %v1205
    %v1740 = vpack.c.b16 %v1212, %v1206
    %v1741 = vpack.c.b16 %v1213, %v1207
    %v1742 = vpack.c.b16 %v1220, %v1214
    %v1743 = vpack.c.b16 %v1221, %v1215
    %v1744 = vpack.c.b16 %v1222, %v1216
    %v1745 = vpack.c.b16 %v1223, %v1217
    %v1746 = vpack.c.b16 %v1224, %v1218
    %v1747 = vpack.c.b16 %v1225, %v1219
    %v1748 = vpack.c.b16 %v1232, %v1226
    %v1749 = vpack.c.b16 %v1233, %v1227
    %v1750 = vpack.c.b16 %v1234, %v1228
    %v1751 = vpack.c.b16 %v1235, %v1229
    %v1752 = vpack.c.b16 %v1236, %v1230
    %v1753 = vpack.c.b16 %v1237, %v1231
    %v1754 = vpack.c.b16 %v1244, %v1238
    %v1755 = vpack.c.b16 %v1245, %v1239
    %v1756 = vpack.c.b16 %v1246, %v1240
    %v1757 = vpack.c.b16 %v1247, %v1241
    %v1758 = vpack.c.b16 %v1248, %v1242
    %v1759 = vpack.c.b16 %v1249, %v1243
    %v1760 = vpack.c.b16 %v1256, %v1250
    %v1761 = vpack.c.b16 %v1257, %v1251
    %v1762 = vpack.c.b16 %v1258, %v1252
    %v1763 = vpack.c.b16 %v1259, %v1253
    %v1764 = vpack.c.b16 %v1260, %v1254
    %v1765 = vpack.c.b16 %v1261, %v1255
    %v1766 = vpack.c.b16 %v1268, %v1262
    %v1767 = vpack.c.b16 %v1269, %v1263
    %v1768 = vpack.c.b16 %v1270, %v1264
    %v1769 = vpack.c.b16 %v1271, %v1265
    %v1770 = vpack.c.b16 %v1272, %v1266
    %v1771 = vpack.c.b16 %v1273, %v1267
    %v1772 = vpack.c.b16 %v1280, %v1274
    %v1773 = vpack.c.b16 %v1281, %v1275
    %v1774 = vpack.c.b16 %v1282, %v1276
    %v1775 = vpack.c.b16 %v1283, %v1277
    %v1776 = vpack.c.b16 %v1284, %v1278
    %v1777 = vpack.c.b16 %v1285, %v1279
    %v1778 = vpack.c.b16 %v1292, %v1286
    %v1779 = vpack.c.b16 %v1293, %v1287
    %v1780 = vpack.c.b16 %v1294, %v1288
    %v1781 = vpack.c.b16 %v1295, %v1289
    %v1782 = vpack.c.b16 %v1296, %v1290
    %v1783 = vpack.c.b16 %v1297, %v1291
    %v1784 = vpack.c.b16 %v1304, %v1298
    %v1785 = vpack.c.b16 %v1305, %v1299
    %v1786 = vpack.c.b16 %v1306, %v1300
    %v1787 = vpack.c.b16 %v1307, %v1301
    %v1788 = vpack.c.b16 %v1308, %v1302
    %v1789 = vpack.c.b16 %v1309, %v1303
    %v1790 = vpack.c.b16 %v1316, %v1310
    %v1791 = vpack.c.b16 %v1317, %v1311
    %v1792 = vpack.c.b16 %v1318, %v1312
    %v1793 = vpack.c.b16 %v1319, %v1313
    %v1794 = vpack.c.b16 %v1320, %v1314
    %v1795 = vpack.c.b16 %v1321, %v1315
    %v1796 = vpack.c.b16 %v1328, %v1322
    %v1797 = vpack.c.b16 %v1329, %v1323
    %v1798 = vpack.c.b16 %v1330, %v1324
    %v1799 = vpack.c.b16 %v1331, %v1325
    %v1800 = vpack.c.b16 %v1332, %v1326
    %v1801 = vpack.c.b16 %v1333, %v1327
    %v1802 = vpack.c.b16 %v1340, %v1334
    %v1803 = vpack.c.b16 %v1341, %v1335
    %v1804 = vpack.c.b16 %v1342, %v1336
    %v1805 = vpack.c.b16 %v1343, %v1337
    %v1806 = vpack.c.b16 %v1344, %v1338
    %v1807 = vpack.c.b16 %v1345, %v1339
    %v1808 = vpack.c.b16 %v1352, %v1346
    %v1809 = vpack.c.b16 %v1353, %v1347
    %v1810 = vpack.c.b16 %v1354, %v1348
    %v1811 = vpack.c.b16 %v1355, %v1349
    %v1812 = vpack.c.b16 %v1356, %v1350
    %v1813 = vpack.c.b16 %v1357, %v1351
    %v1814 = vpack.c.b16 %v1364, %v1358
    %v1815 = vpack.c.b16 %v1365, %v1359
    %v1816 = vpack.c.b16 %v1366, %v1360
    %v1817 = vpack.c.b16 %v1367, %v1361
    %v1818 = vpack.c.b16 %v1368, %v1362
    %v1819 = vpack.c.b16 %v1369, %v1363
    %v1820 = vpack.c.b16 %v1376, %v1370
    %v1821 = vpack.c.b16 %v1377, %v1371
    %v1822 = vpack.c.b16 %v1378, %v1372
    %v1823 = vpack.c.b16 %v1379, %v1373
    %v1824 = vpack.c.b16 %v1380, %v1374
    %v1825 = vpack.c.b16 %v1381, %v1375
    %v1826 = vpack.c.b16 %v1388, %v1382
    %v1827 = vpack.c.b16 %v1389, %v1383
    %v1828 = vpack.c.b16 %v1390, %v1384
    %v1829 = vpack.c.b16 %v1391, %v1385
    %v1830 = vpack.c.b16 %v1392, %v1386
    %v1831 = vpack.c.b16 %v1393, %v1387
    %v1832 = vpack.c.b16 %v1400, %v1394
    %v1833 = vpack.c.b16 %v1401, %v1395
    %v1834 = vpack.c.b16 %v1402, %v1396
    %v1835 = vpack.c.b16 %v1403, %v1397
    %v1836 = vpack.c.b16 %v1404, %v1398
    %v1837 = vpack.c.b16 %v1405, %v1399
    %v1838 = vpack.c.b16 %v1412, %v1406
    %v1839 = vpack.c.b16 %v1413, %v1407
    %v1840 = vpack.c.b16 %v1414, %v1408
    %v1841 = vpack.c.b16 %v1415, %v1409
    %v1842 = vpack.c.b16 %v1416, %v1410
    %v1843 = vpack.c.b16 %v1417, %v1411
    %v1844 = vpack.c.b16 %v1424, %v1418
    %v1845 = vpack.c.b16 %v1425, %v1419
    %v1846 = vpack.c.b16 %v1426, %v1420
    %v1847 = vpack.c.b16 %v1427, %v1421
    %v1848 = vpack.c.b16 %v1428, %v1422
    %v1849 = vpack.c.b16 %v1429, %v1423
    %v1850 = vpack.c.b16 %v1436, %v1430
    %v1851 = vpack.c.b16 %v1437, %v1431
    %v1852 = vpack.c.b16 %v1438, %v1432
    %v1853 = vpack.c.b16 %v1439, %v1433
    %v1854 = vpack.c.b16 %v1440, %v1434
    %v1855 = vpack.c.b16 %v1441, %v1435
    %v1856 = vpack.c.b16 %v1448, %v1442
    %v1857 = vpack.c.b16 %v1449, %v1443
    %v1858 = vpack.c.b16 %v1450, %v1444
    %v1859 = vpack.c.b16 %v1451, %v1445
    %v1860 = vpack.c.b16 %v1452, %v1446
    %v1861 = vpack.c.b16 %v1453, %v1447
    %v1862 = vpack.c.b16 %v1460, %v1454
    %v1863 = vpack.c.b16 %v1461, %v1455
    %v1864 = vpack.c.b16 %v1462, %v1456
    %v1865 = vpack.c.b16 %v1463, %v1457
    %v1866 = vpack.c.b16 %v1464, %v1458
    %v1867 = vpack.c.b16 %v1465, %v1459
    %v1868 = vpack.c.b16 %v1472, %v1466
    %v1869 = vpack.c.b16 %v1473, %v1467
    %v1870 = vpack.c.b16 %v1474, %v1468
    %v1871 = vpack.c.b16 %v1475, %v1469
    %v1872 = vpack.c.b16 %v1476, %v1470
    %v1873 = vpack.c.b16 %v1477, %v1471
    %v1874 = vpack.c.b16 %v1484, %v1478
    %v1875 = vpack.c.b16 %v1485, %v1479
    %v1876 = vpack.c.b16 %v1486, %v1480
    %v1877 = vpack.c.b16 %v1487, %v1481
    %v1878 = vpack.c.b16 %v1488, %v1482
    %v1879 = vpack.c.b16 %v1489, %v1483
    %v1880 = vpack.c.b16 %v1496, %v1490
    %v1881 = vpack.c.b16 %v1497, %v1491
    %v1882 = vpack.c.b16 %v1498, %v1492
    %v1883 = vpack.c.b16 %v1499, %v1493
    %v1884 = vpack.c.b16 %v1500, %v1494
    %v1885 = vpack.c.b16 %v1501, %v1495
    %v1886 = vpack.c.b16 %v1508, %v1502
    %v1887 = vpack.c.b16 %v1509, %v1503
    %v1888 = vpack.c.b16 %v1510, %v1504
    %v1889 = vpack.c.b16 %v1511, %v1505
    %v1890 = vpack.c.b16 %v1512, %v1506
    %v1891 = vpack.c.b16 %v1513, %v1507
    %v1892 = vpack.c.b16 %v1520, %v1514
    %v1893 = vpack.c.b16 %v1521, %v1515
    %v1894 = vpack.c.b16 %v1522, %v1516
    %v1895 = vpack.c.b16 %v1523, %v1517
    %v1896 = vpack.c.b16 %v1524, %v1518
    %v1897 = vpack.c.b16 %v1525, %v1519
    %v1898 = vpack.c.b16 %v1532, %v1526
    %v1899 = vpack.c.b16 %v1533, %v1527
    %v1900 = vpack.c.b16 %v1534, %v1528
    %v1901 = vpack.c.b16 %v1535, %v1529
    %v1902 = vpack.c.b16 %v1536, %v1530
    %v1903 = vpack.c.b16 %v1537, %v1531
    %v1904 = vpack.c.b16 %v1544, %v1538
    %v1905 = vpack.c.b16 %v1545, %v1539
    %v1906 = vpack.c.b16 %v1546, %v1540
    %v1907 = vpack.c.b16 %v1547, %v1541
    %v1908 = vpack.c.b16 %v1548, %v1542
    %v1909 = vpack.c.b16 %v1549, %v1543
    %v1910 = vpack.c.b16 %v1556, %v1550
    %v1911 = vpack.c.b16 %v1557, %v1551
    %v1912 = vpack.c.b16 %v1558, %v1552
    %v1913 = vpack.c.b16 %v1559, %v1553
    %v1914 = vpack.c.b16 %v1560, %v1554
    %v1915 = vpack.c.b16 %v1561, %v1555
    %v1916 = vpack.c.b16 %v1568, %v1562
    %v1917 = vpack.c.b16 %v1569, %v1563
    %v1918 = vpack.c.b16 %v1570, %v1564
    %v1919 = vpack.c.b16 %v1571, %v1565
    %v1920 = vpack.c.b16 %v1572, %v1566
    %v1921 = vpack.c.b16 %v1573, %v1567
    %v1922 = vpack.c.b16 %v1580, %v1574
    %v1923 = vpack.c.b16 %v1581, %v1575
    %v1924 = vpack.c.b16 %v1582, %v1576
    %v1925 = vpack.c.b16 %v1583, %v1577
    %v1926 = vpack.c.b16 %v1584, %v1578
    %v1927 = vpack.c.b16 %v1585, %v1579
    %v1928 = vpack.c.b16 %v1592, %v1586
    %v1929 = vpack.c.b16 %v1593, %v1587
    %v1930 = vpack.c.b16 %v1594, %v1588
    %v1931 = vpack.c.b16 %v1595, %v1589
    %v1932 = vpack.c.b16 %v1596, %v1590
    %v1933 = vpack.c.b16 %v1597, %v1591
    %v1934 = vpack.c.b16 %v1604, %v1598
    %v1935 = vpack.c.b16 %v1605, %v1599
    %v1936 = vpack.c.b16 %v1606, %v1600
    %v1937 = vpack.c.b16 %v1607, %v1601
    %v1938 = vpack.c.b16 %v1608, %v1602
    %v1939 = vpack.c.b16 %v1609, %v1603
    %v1940 = vpack.c.b16 %v1616, %v1610
    %v1941 = vpack.c.b16 %v1617, %v1611
    %v1942 = vpack.c.b16 %v1618, %v1612
    %v1943 = vpack.c.b16 %v1619, %v1613
    %v1944 = vpack.c.b16 %v1620, %v1614
    %v1945 = vpack.c.b16 %v1621, %v1615
    %v1946 = vpack.c.b16 %v1628, %v1622
    %v1947 = vpack.c.b16 %v1629, %v1623
    %v1948 = vpack.c.b16 %v1630, %v1624
    %v1949 = vpack.c.b16 %v1631, %v1625
    %v1950 = vpack.c.b16 %v1632, %v1626
    %v1951 = vpack.c.b16 %v1633, %v1627
    %v1952 = vpack.c.b16 %v1640, %v1634
    %v1953 = vpack.c.b16 %v1641, %v1635
    %v1954 = vpack.c.b16 %v1642, %v1636
    %v1955 = vpack.c.b16 %v1643, %v1637
    %v1956 = vpack.c.b16 %v1644, %v1638
    %v1957 = vpack.c.b16 %v1645, %v1639
    %v1958 = vpack.c.b16 %v1652, %v1646
    %v1959 = vpack.c.b16 %v1653, %v1647
    %v1960 = vpack.c.b16 %v1654, %v1648
    %v1961 = vpack.c.b16 %v1655, %v1649
    %v1962 = vpack.c.b16 %v1656, %v1650
    %v1963 = vpack.c.b16 %v1657, %v1651
    %v1964 = vpack.c.b16 %v1664, %v1658
    %v1965 = vpack.c.b16 %v1665, %v1659
    %v1966 = vpack.c.b16 %v1666, %v1660
    %v1967 = vpack.c.b16 %v1667, %v1661
    %v1968 = vpack.c.b16 %v1668, %v1662
    %v1969 = vpack.c.b16 %v1669, %v1663
    %v1970 = vpack.c.b16 %v1676, %v1670
    %v1971 = vpack.c.b16 %v1677, %v1671
    %v1972 = vpack.c.b16 %v1678, %v1672
    %v1973 = vpack.c.b16 %v1679, %v1673
    %v1974 = vpack.c.b16 %v1680, %v1674
    %v1975 = vpack.c.b16 %v1681, %v1675
    %v1976 = vpack.c.b16 %v1688, %v1682
    %v1977 = vpack.c.b16 %v1689, %v1683
    %v1978 = vpack.c.b16 %v1690, %v1684
    %v1979 = vpack.c.b16 %v1691, %v1685
    %v1980 = vpack.c.b16 %v1692, %v1686
    %v1981 = vpack.c.b16 %v1693, %v1687
    %2270 = vmatpush.bf16.msra.mxu0 %v1736
    %2271 = vmatpush.bf16.msra.mxu0 %v1730
    %2272 = vmatpush.bf16.msra.mxu0 %v1724
    %2273 = vmatpush.bf16.msra.mxu0 %v1718
    %2274 = vmatpush.bf16.msra.mxu0 %v1712
    %2275 = vmatpush.bf16.msra.mxu0 %v1706
    %2276 = vmatpush.bf16.msra.mxu0 %v1700
    %2277 = vmatpush.bf16.msra.mxu0 %v1694
    %2278 = vmatmul.bf16.gmra.mxu0 %v522
    %v2279 = vpop.f32.mrf.mxu0
    %v2280 = vadd.f32 %v818, %v2279
    %v2281 = vpop.f32.mrf.mxu0
    %v2282 = vadd.f32 %v818, %v2281
    %2283 = vdwg.mxu0
    %2284 = vmatpush.bf16.msra.mxu0 %v1784
    %2285 = vmatpush.bf16.msra.mxu0 %v1778
    %2286 = vmatpush.bf16.msra.mxu0 %v1772
    %2287 = vmatpush.bf16.msra.mxu0 %v1766
    %2288 = vmatpush.bf16.msra.mxu0 %v1760
    %2289 = vmatpush.bf16.msra.mxu0 %v1754
    %2290 = vmatpush.bf16.msra.mxu0 %v1748
    %2291 = vmatpush.bf16.msra.mxu0 %v1742
    %2292 = vmatmul.bf16.gmra.mxu0 %v523
    %v2293 = vpop.f32.mrf.mxu0
    %v2294 = vadd.f32 %v2280, %v2293
    %v2295 = vpop.f32.mrf.mxu0
    %v2296 = vadd.f32 %v2282, %v2295
    %2297 = vdwg.mxu0
    %2298 = vmatpush.bf16.msra.mxu0 %v1832
    %2299 = vmatpush.bf16.msra.mxu0 %v1826
    %2300 = vmatpush.bf16.msra.mxu0 %v1820
    %2301 = vmatpush.bf16.msra.mxu0 %v1814
    %2302 = vmatpush.bf16.msra.mxu0 %v1808
    %2303 = vmatpush.bf16.msra.mxu0 %v1802
    %2304 = vmatpush.bf16.msra.mxu0 %v1796
    %2305 = vmatpush.bf16.msra.mxu0 %v1790
    %2306 = vmatmul.bf16.gmra.mxu0 %v524
    %v2307 = vpop.f32.mrf.mxu0
    %v2308 = vadd.f32 %v2294, %v2307
    %v2309 = vpop.f32.mrf.mxu0
    %v2310 = vadd.f32 %v2296, %v2309
    %2311 = vdwg.mxu0
    %2312 = vmatpush.bf16.msra.mxu0 %v1880
    %2313 = vmatpush.bf16.msra.mxu0 %v1874
    %2314 = vmatpush.bf16.msra.mxu0 %v1868
    %2315 = vmatpush.bf16.msra.mxu0 %v1862
    %2316 = vmatpush.bf16.msra.mxu0 %v1856
    %2317 = vmatpush.bf16.msra.mxu0 %v1850
    %2318 = vmatpush.bf16.msra.mxu0 %v1844
    %2319 = vmatpush.bf16.msra.mxu0 %v1838
    %2320 = vmatmul.bf16.gmra.mxu0 %v525
    %v2321 = vpop.f32.mrf.mxu0
    %v2322 = vadd.f32 %v2308, %v2321
    %v2323 = vpop.f32.mrf.mxu0
    %v2324 = vadd.f32 %v2310, %v2323
    %2325 = vdwg.mxu0
    %2326 = vmatpush.bf16.msra.mxu0 %v1928
    %2327 = vmatpush.bf16.msra.mxu0 %v1922
    %2328 = vmatpush.bf16.msra.mxu0 %v1916
    %2329 = vmatpush.bf16.msra.mxu0 %v1910
    %2330 = vmatpush.bf16.msra.mxu0 %v1904
    %2331 = vmatpush.bf16.msra.mxu0 %v1898
    %2332 = vmatpush.bf16.msra.mxu0 %v1892
    %2333 = vmatpush.bf16.msra.mxu0 %v1886
    %2334 = vmatmul.bf16.gmra.mxu0 %v526
    %v2335 = vpop.f32.mrf.mxu0
    %v2336 = vadd.f32 %v2322, %v2335
    %v2337 = vpop.f32.mrf.mxu0
    %v2338 = vadd.f32 %v2324, %v2337
    %2339 = vdwg.mxu0
    %2340 = vmatpush.bf16.msra.mxu0 %v1976
    %2341 = vmatpush.bf16.msra.mxu0 %v1970
    %2342 = vmatpush.bf16.msra.mxu0 %v1964
    %2343 = vmatpush.bf16.msra.mxu0 %v1958
    %2344 = vmatpush.bf16.msra.mxu0 %v1952
    %2345 = vmatpush.bf16.msra.mxu0 %v1946
    %2346 = vmatpush.bf16.msra.mxu0 %v1940
    %2347 = vmatpush.bf16.msra.mxu0 %v1934
    %2348 = vmatmul.bf16.gmra.mxu0 %v527
    %v2349 = vpop.f32.mrf.mxu0
    %v2350 = vadd.f32 %v2336, %v2349
    %v2351 = vpop.f32.mrf.mxu0
    %v2352 = vadd.f32 %v2338, %v2351
    %2353 = vdwg.mxu0
    %2354 = vmatpush.bf16.msra.mxu0 %v1737
    %2355 = vmatpush.bf16.msra.mxu0 %v1731
    %2356 = vmatpush.bf16.msra.mxu0 %v1725
    %2357 = vmatpush.bf16.msra.mxu0 %v1719
    %2358 = vmatpush.bf16.msra.mxu0 %v1713
    %2359 = vmatpush.bf16.msra.mxu0 %v1707
    %2360 = vmatpush.bf16.msra.mxu0 %v1701
    %2361 = vmatpush.bf16.msra.mxu0 %v1695
    %2362 = vmatmul.bf16.gmra.mxu0 %v522
    %v2363 = vpop.f32.mrf.mxu0
    %v2364 = vadd.f32 %v819, %v2363
    %v2365 = vpop.f32.mrf.mxu0
    %v2366 = vadd.f32 %v819, %v2365
    %2367 = vdwg.mxu0
    %2368 = vmatpush.bf16.msra.mxu0 %v1785
    %2369 = vmatpush.bf16.msra.mxu0 %v1779
    %2370 = vmatpush.bf16.msra.mxu0 %v1773
    %2371 = vmatpush.bf16.msra.mxu0 %v1767
    %2372 = vmatpush.bf16.msra.mxu0 %v1761
    %2373 = vmatpush.bf16.msra.mxu0 %v1755
    %2374 = vmatpush.bf16.msra.mxu0 %v1749
    %2375 = vmatpush.bf16.msra.mxu0 %v1743
    %2376 = vmatmul.bf16.gmra.mxu0 %v523
    %v2377 = vpop.f32.mrf.mxu0
    %v2378 = vadd.f32 %v2364, %v2377
    %v2379 = vpop.f32.mrf.mxu0
    %v2380 = vadd.f32 %v2366, %v2379
    %2381 = vdwg.mxu0
    %2382 = vmatpush.bf16.msra.mxu0 %v1833
    %2383 = vmatpush.bf16.msra.mxu0 %v1827
    %2384 = vmatpush.bf16.msra.mxu0 %v1821
    %2385 = vmatpush.bf16.msra.mxu0 %v1815
    %2386 = vmatpush.bf16.msra.mxu0 %v1809
    %2387 = vmatpush.bf16.msra.mxu0 %v1803
    %2388 = vmatpush.bf16.msra.mxu0 %v1797
    %2389 = vmatpush.bf16.msra.mxu0 %v1791
    %2390 = vmatmul.bf16.gmra.mxu0 %v524
    %v2391 = vpop.f32.mrf.mxu0
    %v2392 = vadd.f32 %v2378, %v2391
    %v2393 = vpop.f32.mrf.mxu0
    %v2394 = vadd.f32 %v2380, %v2393
    %2395 = vdwg.mxu0
    %2396 = vmatpush.bf16.msra.mxu0 %v1881
    %2397 = vmatpush.bf16.msra.mxu0 %v1875
    %2398 = vmatpush.bf16.msra.mxu0 %v1869
    %2399 = vmatpush.bf16.msra.mxu0 %v1863
    %2400 = vmatpush.bf16.msra.mxu0 %v1857
    %2401 = vmatpush.bf16.msra.mxu0 %v1851
    %2402 = vmatpush.bf16.msra.mxu0 %v1845
    %2403 = vmatpush.bf16.msra.mxu0 %v1839
    %2404 = vmatmul.bf16.gmra.mxu0 %v525
    %v2405 = vpop.f32.mrf.mxu0
    %v2406 = vadd.f32 %v2392, %v2405
    %v2407 = vpop.f32.mrf.mxu0
    %v2408 = vadd.f32 %v2394, %v2407
    %2409 = vdwg.mxu0
    %2410 = vmatpush.bf16.msra.mxu0 %v1929
    %2411 = vmatpush.bf16.msra.mxu0 %v1923
    %2412 = vmatpush.bf16.msra.mxu0 %v1917
    %2413 = vmatpush.bf16.msra.mxu0 %v1911
    %2414 = vmatpush.bf16.msra.mxu0 %v1905
    %2415 = vmatpush.bf16.msra.mxu0 %v1899
    %2416 = vmatpush.bf16.msra.mxu0 %v1893
    %2417 = vmatpush.bf16.msra.mxu0 %v1887
    %2418 = vmatmul.bf16.gmra.mxu0 %v526
    %v2419 = vpop.f32.mrf.mxu0
    %v2420 = vadd.f32 %v2406, %v2419
    %v2421 = vpop.f32.mrf.mxu0
    %v2422 = vadd.f32 %v2408, %v2421
    %2423 = vdwg.mxu0
    %2424 = vmatpush.bf16.msra.mxu0 %v1977
    %2425 = vmatpush.bf16.msra.mxu0 %v1971
    %2426 = vmatpush.bf16.msra.mxu0 %v1965
    %2427 = vmatpush.bf16.msra.mxu0 %v1959
    %2428 = vmatpush.bf16.msra.mxu0 %v1953
    %2429 = vmatpush.bf16.msra.mxu0 %v1947
    %2430 = vmatpush.bf16.msra.mxu0 %v1941
    %2431 = vmatpush.bf16.msra.mxu0 %v1935
    %2432 = vmatmul.bf16.gmra.mxu0 %v527
    %v2433 = vpop.f32.mrf.mxu0
    %v2434 = vadd.f32 %v2420, %v2433
    %v2435 = vpop.f32.mrf.mxu0
    %v2436 = vadd.f32 %v2422, %v2435
    %2437 = vdwg.mxu0
    %2438 = vmatpush.bf16.msra.mxu0 %v1738
    %2439 = vmatpush.bf16.msra.mxu0 %v1732
    %2440 = vmatpush.bf16.msra.mxu0 %v1726
    %2441 = vmatpush.bf16.msra.mxu0 %v1720
    %2442 = vmatpush.bf16.msra.mxu0 %v1714
    %2443 = vmatpush.bf16.msra.mxu0 %v1708
    %2444 = vmatpush.bf16.msra.mxu0 %v1702
    %2445 = vmatpush.bf16.msra.mxu0 %v1696
    %2446 = vmatmul.bf16.gmra.mxu0 %v522
    %v2447 = vpop.f32.mrf.mxu0
    %v2448 = vadd.f32 %v820, %v2447
    %v2449 = vpop.f32.mrf.mxu0
    %v2450 = vadd.f32 %v820, %v2449
    %2451 = vdwg.mxu0
    %2452 = vmatpush.bf16.msra.mxu0 %v1786
    %2453 = vmatpush.bf16.msra.mxu0 %v1780
    %2454 = vmatpush.bf16.msra.mxu0 %v1774
    %2455 = vmatpush.bf16.msra.mxu0 %v1768
    %2456 = vmatpush.bf16.msra.mxu0 %v1762
    %2457 = vmatpush.bf16.msra.mxu0 %v1756
    %2458 = vmatpush.bf16.msra.mxu0 %v1750
    %2459 = vmatpush.bf16.msra.mxu0 %v1744
    %2460 = vmatmul.bf16.gmra.mxu0 %v523
    %v2461 = vpop.f32.mrf.mxu0
    %v2462 = vadd.f32 %v2448, %v2461
    %v2463 = vpop.f32.mrf.mxu0
    %v2464 = vadd.f32 %v2450, %v2463
    %2465 = vdwg.mxu0
    %2466 = vmatpush.bf16.msra.mxu0 %v1834
    %2467 = vmatpush.bf16.msra.mxu0 %v1828
    %2468 = vmatpush.bf16.msra.mxu0 %v1822
    %2469 = vmatpush.bf16.msra.mxu0 %v1816
    %2470 = vmatpush.bf16.msra.mxu0 %v1810
    %2471 = vmatpush.bf16.msra.mxu0 %v1804
    %2472 = vmatpush.bf16.msra.mxu0 %v1798
    %2473 = vmatpush.bf16.msra.mxu0 %v1792
    %2474 = vmatmul.bf16.gmra.mxu0 %v524
    %v2475 = vpop.f32.mrf.mxu0
    %v2476 = vadd.f32 %v2462, %v2475
    %v2477 = vpop.f32.mrf.mxu0
    %v2478 = vadd.f32 %v2464, %v2477
    %2479 = vdwg.mxu0
    %2480 = vmatpush.bf16.msra.mxu0 %v1882
    %2481 = vmatpush.bf16.msra.mxu0 %v1876
    %2482 = vmatpush.bf16.msra.mxu0 %v1870
    %2483 = vmatpush.bf16.msra.mxu0 %v1864
    %2484 = vmatpush.bf16.msra.mxu0 %v1858
    %2485 = vmatpush.bf16.msra.mxu0 %v1852
    %2486 = vmatpush.bf16.msra.mxu0 %v1846
    %2487 = vmatpush.bf16.msra.mxu0 %v1840
    %2488 = vmatmul.bf16.gmra.mxu0 %v525
    %v2489 = vpop.f32.mrf.mxu0
    %v2490 = vadd.f32 %v2476, %v2489
    %v2491 = vpop.f32.mrf.mxu0
    %v2492 = vadd.f32 %v2478, %v2491
    %2493 = vdwg.mxu0
    %2494 = vmatpush.bf16.msra.mxu0 %v1930
    %2495 = vmatpush.bf16.msra.mxu0 %v1924
    %2496 = vmatpush.bf16.msra.mxu0 %v1918
    %2497 = vmatpush.bf16.msra.mxu0 %v1912
    %2498 = vmatpush.bf16.msra.mxu0 %v1906
    %2499 = vmatpush.bf16.msra.mxu0 %v1900
    %2500 = vmatpush.bf16.msra.mxu0 %v1894
    %2501 = vmatpush.bf16.msra.mxu0 %v1888
    %2502 = vmatmul.bf16.gmra.mxu0 %v526
    %v2503 = vpop.f32.mrf.mxu0
    %v2504 = vadd.f32 %v2490, %v2503
    %v2505 = vpop.f32.mrf.mxu0
    %v2506 = vadd.f32 %v2492, %v2505
    %2507 = vdwg.mxu0
    %2508 = vmatpush.bf16.msra.mxu0 %v1978
    %2509 = vmatpush.bf16.msra.mxu0 %v1972
    %2510 = vmatpush.bf16.msra.mxu0 %v1966
    %2511 = vmatpush.bf16.msra.mxu0 %v1960
    %2512 = vmatpush.bf16.msra.mxu0 %v1954
    %2513 = vmatpush.bf16.msra.mxu0 %v1948
    %2514 = vmatpush.bf16.msra.mxu0 %v1942
    %2515 = vmatpush.bf16.msra.mxu0 %v1936
    %2516 = vmatmul.bf16.gmra.mxu0 %v527
    %v2517 = vpop.f32.mrf.mxu0
    %v2518 = vadd.f32 %v2504, %v2517
    %v2519 = vpop.f32.mrf.mxu0
    %v2520 = vadd.f32 %v2506, %v2519
    %2521 = vdwg.mxu0
    %2522 = vmatpush.bf16.msra.mxu0 %v1739
    %2523 = vmatpush.bf16.msra.mxu0 %v1733
    %2524 = vmatpush.bf16.msra.mxu0 %v1727
    %2525 = vmatpush.bf16.msra.mxu0 %v1721
    %2526 = vmatpush.bf16.msra.mxu0 %v1715
    %2527 = vmatpush.bf16.msra.mxu0 %v1709
    %2528 = vmatpush.bf16.msra.mxu0 %v1703
    %2529 = vmatpush.bf16.msra.mxu0 %v1697
    %2530 = vmatmul.bf16.gmra.mxu0 %v522
    %v2531 = vpop.f32.mrf.mxu0
    %v2532 = vadd.f32 %v821, %v2531
    %v2533 = vpop.f32.mrf.mxu0
    %v2534 = vadd.f32 %v821, %v2533
    %2535 = vdwg.mxu0
    %2536 = vmatpush.bf16.msra.mxu0 %v1787
    %2537 = vmatpush.bf16.msra.mxu0 %v1781
    %2538 = vmatpush.bf16.msra.mxu0 %v1775
    %2539 = vmatpush.bf16.msra.mxu0 %v1769
    %2540 = vmatpush.bf16.msra.mxu0 %v1763
    %2541 = vmatpush.bf16.msra.mxu0 %v1757
    %2542 = vmatpush.bf16.msra.mxu0 %v1751
    %2543 = vmatpush.bf16.msra.mxu0 %v1745
    %2544 = vmatmul.bf16.gmra.mxu0 %v523
    %v2545 = vpop.f32.mrf.mxu0
    %v2546 = vadd.f32 %v2532, %v2545
    %v2547 = vpop.f32.mrf.mxu0
    %v2548 = vadd.f32 %v2534, %v2547
    %2549 = vdwg.mxu0
    %2550 = vmatpush.bf16.msra.mxu0 %v1835
    %2551 = vmatpush.bf16.msra.mxu0 %v1829
    %2552 = vmatpush.bf16.msra.mxu0 %v1823
    %2553 = vmatpush.bf16.msra.mxu0 %v1817
    %2554 = vmatpush.bf16.msra.mxu0 %v1811
    %2555 = vmatpush.bf16.msra.mxu0 %v1805
    %2556 = vmatpush.bf16.msra.mxu0 %v1799
    %2557 = vmatpush.bf16.msra.mxu0 %v1793
    %2558 = vmatmul.bf16.gmra.mxu0 %v524
    %v2559 = vpop.f32.mrf.mxu0
    %v2560 = vadd.f32 %v2546, %v2559
    %v2561 = vpop.f32.mrf.mxu0
    %v2562 = vadd.f32 %v2548, %v2561
    %2563 = vdwg.mxu0
    %2564 = vmatpush.bf16.msra.mxu0 %v1883
    %2565 = vmatpush.bf16.msra.mxu0 %v1877
    %2566 = vmatpush.bf16.msra.mxu0 %v1871
    %2567 = vmatpush.bf16.msra.mxu0 %v1865
    %2568 = vmatpush.bf16.msra.mxu0 %v1859
    %2569 = vmatpush.bf16.msra.mxu0 %v1853
    %2570 = vmatpush.bf16.msra.mxu0 %v1847
    %2571 = vmatpush.bf16.msra.mxu0 %v1841
    %2572 = vmatmul.bf16.gmra.mxu0 %v525
    %v2573 = vpop.f32.mrf.mxu0
    %v2574 = vadd.f32 %v2560, %v2573
    %v2575 = vpop.f32.mrf.mxu0
    %v2576 = vadd.f32 %v2562, %v2575
    %2577 = vdwg.mxu0
    %2578 = vmatpush.bf16.msra.mxu0 %v1931
    %2579 = vmatpush.bf16.msra.mxu0 %v1925
    %2580 = vmatpush.bf16.msra.mxu0 %v1919
    %2581 = vmatpush.bf16.msra.mxu0 %v1913
    %2582 = vmatpush.bf16.msra.mxu0 %v1907
    %2583 = vmatpush.bf16.msra.mxu0 %v1901
    %2584 = vmatpush.bf16.msra.mxu0 %v1895
    %2585 = vmatpush.bf16.msra.mxu0 %v1889
    %2586 = vmatmul.bf16.gmra.mxu0 %v526
    %v2587 = vpop.f32.mrf.mxu0
    %v2588 = vadd.f32 %v2574, %v2587
    %v2589 = vpop.f32.mrf.mxu0
    %v2590 = vadd.f32 %v2576, %v2589
    %2591 = vdwg.mxu0
    %2592 = vmatpush.bf16.msra.mxu0 %v1979
    %2593 = vmatpush.bf16.msra.mxu0 %v1973
    %2594 = vmatpush.bf16.msra.mxu0 %v1967
    %2595 = vmatpush.bf16.msra.mxu0 %v1961
    %2596 = vmatpush.bf16.msra.mxu0 %v1955
    %2597 = vmatpush.bf16.msra.mxu0 %v1949
    %2598 = vmatpush.bf16.msra.mxu0 %v1943
    %2599 = vmatpush.bf16.msra.mxu0 %v1937
    %2600 = vmatmul.bf16.gmra.mxu0 %v527
    %v2601 = vpop.f32.mrf.mxu0
    %v2602 = vadd.f32 %v2588, %v2601
    %v2603 = vpop.f32.mrf.mxu0
    %v2604 = vadd.f32 %v2590, %v2603
    %2605 = vdwg.mxu0
    %2606 = vmatpush.bf16.msra.mxu0 %v1740
    %2607 = vmatpush.bf16.msra.mxu0 %v1734
    %2608 = vmatpush.bf16.msra.mxu0 %v1728
    %2609 = vmatpush.bf16.msra.mxu0 %v1722
    %2610 = vmatpush.bf16.msra.mxu0 %v1716
    %2611 = vmatpush.bf16.msra.mxu0 %v1710
    %2612 = vmatpush.bf16.msra.mxu0 %v1704
    %2613 = vmatpush.bf16.msra.mxu0 %v1698
    %2614 = vmatmul.bf16.gmra.mxu0 %v522
    %v2615 = vpop.f32.mrf.mxu0
    %v2616 = vadd.f32 %v822, %v2615
    %v2617 = vpop.f32.mrf.mxu0
    %v2618 = vadd.f32 %v822, %v2617
    %2619 = vdwg.mxu0
    %2620 = vmatpush.bf16.msra.mxu0 %v1788
    %2621 = vmatpush.bf16.msra.mxu0 %v1782
    %2622 = vmatpush.bf16.msra.mxu0 %v1776
    %2623 = vmatpush.bf16.msra.mxu0 %v1770
    %2624 = vmatpush.bf16.msra.mxu0 %v1764
    %2625 = vmatpush.bf16.msra.mxu0 %v1758
    %2626 = vmatpush.bf16.msra.mxu0 %v1752
    %2627 = vmatpush.bf16.msra.mxu0 %v1746
    %2628 = vmatmul.bf16.gmra.mxu0 %v523
    %v2629 = vpop.f32.mrf.mxu0
    %v2630 = vadd.f32 %v2616, %v2629
    %v2631 = vpop.f32.mrf.mxu0
    %v2632 = vadd.f32 %v2618, %v2631
    %2633 = vdwg.mxu0
    %2634 = vmatpush.bf16.msra.mxu0 %v1836
    %2635 = vmatpush.bf16.msra.mxu0 %v1830
    %2636 = vmatpush.bf16.msra.mxu0 %v1824
    %2637 = vmatpush.bf16.msra.mxu0 %v1818
    %2638 = vmatpush.bf16.msra.mxu0 %v1812
    %2639 = vmatpush.bf16.msra.mxu0 %v1806
    %2640 = vmatpush.bf16.msra.mxu0 %v1800
    %2641 = vmatpush.bf16.msra.mxu0 %v1794
    %2642 = vmatmul.bf16.gmra.mxu0 %v524
    %v2643 = vpop.f32.mrf.mxu0
    %v2644 = vadd.f32 %v2630, %v2643
    %v2645 = vpop.f32.mrf.mxu0
    %v2646 = vadd.f32 %v2632, %v2645
    %2647 = vdwg.mxu0
    %2648 = vmatpush.bf16.msra.mxu0 %v1884
    %2649 = vmatpush.bf16.msra.mxu0 %v1878
    %2650 = vmatpush.bf16.msra.mxu0 %v1872
    %2651 = vmatpush.bf16.msra.mxu0 %v1866
    %2652 = vmatpush.bf16.msra.mxu0 %v1860
    %2653 = vmatpush.bf16.msra.mxu0 %v1854
    %2654 = vmatpush.bf16.msra.mxu0 %v1848
    %2655 = vmatpush.bf16.msra.mxu0 %v1842
    %2656 = vmatmul.bf16.gmra.mxu0 %v525
    %v2657 = vpop.f32.mrf.mxu0
    %v2658 = vadd.f32 %v2644, %v2657
    %v2659 = vpop.f32.mrf.mxu0
    %v2660 = vadd.f32 %v2646, %v2659
    %2661 = vdwg.mxu0
    %2662 = vmatpush.bf16.msra.mxu0 %v1932
    %2663 = vmatpush.bf16.msra.mxu0 %v1926
    %2664 = vmatpush.bf16.msra.mxu0 %v1920
    %2665 = vmatpush.bf16.msra.mxu0 %v1914
    %2666 = vmatpush.bf16.msra.mxu0 %v1908
    %2667 = vmatpush.bf16.msra.mxu0 %v1902
    %2668 = vmatpush.bf16.msra.mxu0 %v1896
    %2669 = vmatpush.bf16.msra.mxu0 %v1890
    %2670 = vmatmul.bf16.gmra.mxu0 %v526
    %v2671 = vpop.f32.mrf.mxu0
    %v2672 = vadd.f32 %v2658, %v2671
    %v2673 = vpop.f32.mrf.mxu0
    %v2674 = vadd.f32 %v2660, %v2673
    %2675 = vdwg.mxu0
    %2676 = vmatpush.bf16.msra.mxu0 %v1980
    %2677 = vmatpush.bf16.msra.mxu0 %v1974
    %2678 = vmatpush.bf16.msra.mxu0 %v1968
    %2679 = vmatpush.bf16.msra.mxu0 %v1962
    %2680 = vmatpush.bf16.msra.mxu0 %v1956
    %2681 = vmatpush.bf16.msra.mxu0 %v1950
    %2682 = vmatpush.bf16.msra.mxu0 %v1944
    %2683 = vmatpush.bf16.msra.mxu0 %v1938
    %2684 = vmatmul.bf16.gmra.mxu0 %v527
    %v2685 = vpop.f32.mrf.mxu0
    %v2686 = vadd.f32 %v2672, %v2685
    %v2687 = vpop.f32.mrf.mxu0
    %v2688 = vadd.f32 %v2674, %v2687
    %2689 = vdwg.mxu0
    %2690 = vmatpush.bf16.msra.mxu0 %v1741
    %2691 = vmatpush.bf16.msra.mxu0 %v1735
    %2692 = vmatpush.bf16.msra.mxu0 %v1729
    %2693 = vmatpush.bf16.msra.mxu0 %v1723
    %2694 = vmatpush.bf16.msra.mxu0 %v1717
    %2695 = vmatpush.bf16.msra.mxu0 %v1711
    %2696 = vmatpush.bf16.msra.mxu0 %v1705
    %2697 = vmatpush.bf16.msra.mxu0 %v1699
    %2698 = vmatmul.bf16.gmra.mxu0 %v522
    %v2699 = vpop.f32.mrf.mxu0
    %v2700 = vadd.f32 %v823, %v2699
    %v2701 = vpop.f32.mrf.mxu0
    %v2702 = vadd.f32 %v823, %v2701
    %2703 = vdwg.mxu0
    %2704 = vmatpush.bf16.msra.mxu0 %v1789
    %2705 = vmatpush.bf16.msra.mxu0 %v1783
    %2706 = vmatpush.bf16.msra.mxu0 %v1777
    %2707 = vmatpush.bf16.msra.mxu0 %v1771
    %2708 = vmatpush.bf16.msra.mxu0 %v1765
    %2709 = vmatpush.bf16.msra.mxu0 %v1759
    %2710 = vmatpush.bf16.msra.mxu0 %v1753
    %2711 = vmatpush.bf16.msra.mxu0 %v1747
    %2712 = vmatmul.bf16.gmra.mxu0 %v523
    %v2713 = vpop.f32.mrf.mxu0
    %v2714 = vadd.f32 %v2700, %v2713
    %v2715 = vpop.f32.mrf.mxu0
    %v2716 = vadd.f32 %v2702, %v2715
    %2717 = vdwg.mxu0
    %2718 = vmatpush.bf16.msra.mxu0 %v1837
    %2719 = vmatpush.bf16.msra.mxu0 %v1831
    %2720 = vmatpush.bf16.msra.mxu0 %v1825
    %2721 = vmatpush.bf16.msra.mxu0 %v1819
    %2722 = vmatpush.bf16.msra.mxu0 %v1813
    %2723 = vmatpush.bf16.msra.mxu0 %v1807
    %2724 = vmatpush.bf16.msra.mxu0 %v1801
    %2725 = vmatpush.bf16.msra.mxu0 %v1795
    %2726 = vmatmul.bf16.gmra.mxu0 %v524
    %v2727 = vpop.f32.mrf.mxu0
    %v2728 = vadd.f32 %v2714, %v2727
    %v2729 = vpop.f32.mrf.mxu0
    %v2730 = vadd.f32 %v2716, %v2729
    %2731 = vdwg.mxu0
    %2732 = vmatpush.bf16.msra.mxu0 %v1885
    %2733 = vmatpush.bf16.msra.mxu0 %v1879
    %2734 = vmatpush.bf16.msra.mxu0 %v1873
    %2735 = vmatpush.bf16.msra.mxu0 %v1867
    %2736 = vmatpush.bf16.msra.mxu0 %v1861
    %2737 = vmatpush.bf16.msra.mxu0 %v1855
    %2738 = vmatpush.bf16.msra.mxu0 %v1849
    %2739 = vmatpush.bf16.msra.mxu0 %v1843
    %2740 = vmatmul.bf16.gmra.mxu0 %v525
    %v2741 = vpop.f32.mrf.mxu0
    %v2742 = vadd.f32 %v2728, %v2741
    %v2743 = vpop.f32.mrf.mxu0
    %v2744 = vadd.f32 %v2730, %v2743
    %2745 = vdwg.mxu0
    %2746 = vmatpush.bf16.msra.mxu0 %v1933
    %2747 = vmatpush.bf16.msra.mxu0 %v1927
    %2748 = vmatpush.bf16.msra.mxu0 %v1921
    %2749 = vmatpush.bf16.msra.mxu0 %v1915
    %2750 = vmatpush.bf16.msra.mxu0 %v1909
    %2751 = vmatpush.bf16.msra.mxu0 %v1903
    %2752 = vmatpush.bf16.msra.mxu0 %v1897
    %2753 = vmatpush.bf16.msra.mxu0 %v1891
    %2754 = vmatmul.bf16.gmra.mxu0 %v526
    %v2755 = vpop.f32.mrf.mxu0
    %v2756 = vadd.f32 %v2742, %v2755
    %v2757 = vpop.f32.mrf.mxu0
    %v2758 = vadd.f32 %v2744, %v2757
    %2759 = vdwg.mxu0
    %2760 = vmatpush.bf16.msra.mxu0 %v1981
    %2761 = vmatpush.bf16.msra.mxu0 %v1975
    %2762 = vmatpush.bf16.msra.mxu0 %v1969
    %2763 = vmatpush.bf16.msra.mxu0 %v1963
    %2764 = vmatpush.bf16.msra.mxu0 %v1957
    %2765 = vmatpush.bf16.msra.mxu0 %v1951
    %2766 = vmatpush.bf16.msra.mxu0 %v1945
    %2767 = vmatpush.bf16.msra.mxu0 %v1939
    %2768 = vmatmul.bf16.gmra.mxu0 %v527
    %v2769 = vpop.f32.mrf.mxu0
    %v2770 = vadd.f32 %v2756, %v2769
    %v2771 = vpop.f32.mrf.mxu0
    %v2772 = vadd.f32 %v2758, %v2771
    %2773 = vdwg.mxu0
    %v2774 = vpack.c.bf16 %v2352, %v2350
    %v2775 = vpack.c.bf16 %v2436, %v2434
    %v2776 = vpack.c.bf16 %v2520, %v2518
    %v2777 = vpack.c.bf16 %v2604, %v2602
    %v2778 = vpack.c.bf16 %v2688, %v2686
    %v2779 = vpack.c.bf16 %v2772, %v2770
    %v2780 = vunpack.c.l.bf16 %v2774
    %v2781 = vunpack.c.l.bf16 %v2775
    %v2782 = vunpack.c.l.bf16 %v2776
    %v2783 = vunpack.c.l.bf16 %v2777
    %v2784 = vunpack.c.l.bf16 %v2778
    %v2785 = vunpack.c.l.bf16 %v2779
    %v2786 = vunpack.c.h.bf16 %v2774
    %v2787 = vunpack.c.h.bf16 %v2775
    %v2788 = vunpack.c.h.bf16 %v2776
    %v2789 = vunpack.c.h.bf16 %v2777
    %v2790 = vunpack.c.h.bf16 %v2778
    %v2791 = vunpack.c.h.bf16 %v2779
    %v2792 = vtanh.pop %v2780
    %v2793 = vtanh.pop %v2781
    %v2794 = vtanh.pop %v2782
    %v2795 = vtanh.pop %v2783
    %v2796 = vtanh.pop %v2784
    %v2797 = vtanh.pop %v2785
    %v2798 = vtanh.pop %v2786
    %v2799 = vtanh.pop %v2787
    %v2800 = vtanh.pop %v2788
    %v2801 = vtanh.pop %v2789
    %v2802 = vtanh.pop %v2790
    %v2803 = vtanh.pop %v2791
    %v2804 = vpack.c.bf16 %v2798, %v2792
    %v2805 = vpack.c.bf16 %v2799, %v2793
    %v2806 = vpack.c.bf16 %v2800, %v2794
    %v2807 = vpack.c.bf16 %v2801, %v2795
    %v2808 = vpack.c.bf16 %v2802, %v2796
    %v2809 = vpack.c.bf16 %v2803, %v2797
    %v2810 = vld [vmem:[#allocation8] sm:$0xff]
    %v2811 = vld [vmem:[#allocation8 + $0x8] sm:$0xff]
    %v2812 = vld [vmem:[#allocation8 + $0x10] sm:$0xff]
    %v2813 = vld [vmem:[#allocation8 + $0x18] sm:$0xff]
    %v2814 = vld [vmem:[#allocation8 + $0x20] sm:$0xff]
    %v2815 = vld [vmem:[#allocation8 + $0x28] sm:$0xff]
    %v2816 = vld [vmem:[#allocation8 + $0x30] sm:$0xff]
    %v2817 = vld [vmem:[#allocation8 + $0x38] sm:$0xff]
    %v2818 = vld [vmem:[#allocation8 + $0x40] sm:$0xff]
    %v2819 = vld [vmem:[#allocation8 + $0x48] sm:$0xff]
    %v2820 = vld [vmem:[#allocation8 + $0x50] sm:$0xff]
    %v2821 = vld [vmem:[#allocation8 + $0x58] sm:$0xff]
    %v2822 = vld [vmem:[#allocation8 + $0x60] sm:$0xff]
    %v2823 = vld [vmem:[#allocation8 + $0x68] sm:$0xff]
    %v2824 = vld [vmem:[#allocation8 + $0x70] sm:$0xff]
    %v2825 = vld [vmem:[#allocation8 + $0x78] sm:$0xff]
    %v2826 = vld [vmem:[#allocation8 + $0x80] sm:$0xff]
    %v2827 = vld [vmem:[#allocation8 + $0x88] sm:$0xff]
    %v2828 = vld [vmem:[#allocation8 + $0x90] sm:$0xff]
    %v2829 = vld [vmem:[#allocation8 + $0x98] sm:$0xff]
    %v2830 = vld [vmem:[#allocation8 + $0xa0] sm:$0xff]
    %v2831 = vld [vmem:[#allocation8 + $0xa8] sm:$0xff]
    %v2832 = vld [vmem:[#allocation8 + $0xb0] sm:$0xff]
    %v2833 = vld [vmem:[#allocation8 + $0xb8] sm:$0xff]
    %v2834 = vld [vmem:[#allocation8 + $0xc0] sm:$0xff]
    %v2835 = vld [vmem:[#allocation8 + $0xc8] sm:$0xff]
    %v2836 = vld [vmem:[#allocation8 + $0xd0] sm:$0xff]
    %v2837 = vld [vmem:[#allocation8 + $0xd8] sm:$0xff]
    %v2838 = vld [vmem:[#allocation8 + $0xe0] sm:$0xff]
    %v2839 = vld [vmem:[#allocation8 + $0xe8] sm:$0xff]
    %v2840 = vld [vmem:[#allocation8 + $0xf0] sm:$0xff]
    %v2841 = vld [vmem:[#allocation8 + $0xf8] sm:$0xff]
    %v2842 = vld [vmem:[#allocation8 + $0x100] sm:$0xff]
    %v2843 = vld [vmem:[#allocation8 + $0x108] sm:$0xff]
    %v2844 = vld [vmem:[#allocation8 + $0x110] sm:$0xff]
    %v2845 = vld [vmem:[#allocation8 + $0x118] sm:$0xff]
    %v2846 = vld [vmem:[#allocation8 + $0x120] sm:$0xff]
    %v2847 = vld [vmem:[#allocation8 + $0x128] sm:$0xff]
    %v2848 = vld [vmem:[#allocation8 + $0x130] sm:$0xff]
    %v2849 = vld [vmem:[#allocation8 + $0x138] sm:$0xff]
    %v2850 = vld [vmem:[#allocation8 + $0x140] sm:$0xff]
    %v2851 = vld [vmem:[#allocation8 + $0x148] sm:$0xff]
    %v2852 = vld [vmem:[#allocation8 + $0x150] sm:$0xff]
    %v2853 = vld [vmem:[#allocation8 + $0x158] sm:$0xff]
    %v2854 = vld [vmem:[#allocation8 + $0x160] sm:$0xff]
    %v2855 = vld [vmem:[#allocation8 + $0x168] sm:$0xff]
    %v2856 = vld [vmem:[#allocation8 + $0x170] sm:$0xff]
    %v2857 = vld [vmem:[#allocation8 + $0x178] sm:$0xff]
    %v2858 = vld [vmem:[#allocation8 + $0x180] sm:$0xff]
    %v2859 = vld [vmem:[#allocation8 + $0x188] sm:$0xff]
    %v2860 = vld [vmem:[#allocation8 + $0x190] sm:$0xff]
    %v2861 = vld [vmem:[#allocation8 + $0x198] sm:$0xff]
    %v2862 = vld [vmem:[#allocation8 + $0x1a0] sm:$0xff]
    %v2863 = vld [vmem:[#allocation8 + $0x1a8] sm:$0xff]
    %v2864 = vld [vmem:[#allocation8 + $0x1b0] sm:$0xff]
    %v2865 = vld [vmem:[#allocation8 + $0x1b8] sm:$0xff]
    %v2866 = vld [vmem:[#allocation8 + $0x1c0] sm:$0xff]
    %v2867 = vld [vmem:[#allocation8 + $0x1c8] sm:$0xff]
    %v2868 = vld [vmem:[#allocation8 + $0x1d0] sm:$0xff]
    %v2869 = vld [vmem:[#allocation8 + $0x1d8] sm:$0xff]
    %v2870 = vld [vmem:[#allocation8 + $0x1e0] sm:$0xff]
    %v2871 = vld [vmem:[#allocation8 + $0x1e8] sm:$0xff]
    %v2872 = vld [vmem:[#allocation8 + $0x1f0] sm:$0xff]
    %v2873 = vld [vmem:[#allocation8 + $0x1f8] sm:$0xff]
    %v2874 = vld [vmem:[#allocation8 + $0x200] sm:$0xff]
    %v2875 = vld [vmem:[#allocation8 + $0x208] sm:$0xff]
    %v2876 = vld [vmem:[#allocation8 + $0x210] sm:$0xff]
    %v2877 = vld [vmem:[#allocation8 + $0x218] sm:$0xff]
    %v2878 = vld [vmem:[#allocation8 + $0x220] sm:$0xff]
    %v2879 = vld [vmem:[#allocation8 + $0x228] sm:$0xff]
    %v2880 = vld [vmem:[#allocation8 + $0x230] sm:$0xff]
    %v2881 = vld [vmem:[#allocation8 + $0x238] sm:$0xff]
    %v2882 = vld [vmem:[#allocation8 + $0x240] sm:$0xff]
    %v2883 = vld [vmem:[#allocation8 + $0x248] sm:$0xff]
    %v2884 = vld [vmem:[#allocation8 + $0x250] sm:$0xff]
    %v2885 = vld [vmem:[#allocation8 + $0x258] sm:$0xff]
    %v2886 = vld [vmem:[#allocation8 + $0x260] sm:$0xff]
    %v2887 = vld [vmem:[#allocation8 + $0x268] sm:$0xff]
    %v2888 = vld [vmem:[#allocation8 + $0x270] sm:$0xff]
    %v2889 = vld [vmem:[#allocation8 + $0x278] sm:$0xff]
    %v2890 = vld [vmem:[#allocation8 + $0x280] sm:$0xff]
    %v2891 = vld [vmem:[#allocation8 + $0x288] sm:$0xff]
    %v2892 = vld [vmem:[#allocation8 + $0x290] sm:$0xff]
    %v2893 = vld [vmem:[#allocation8 + $0x298] sm:$0xff]
    %v2894 = vld [vmem:[#allocation8 + $0x2a0] sm:$0xff]
    %v2895 = vld [vmem:[#allocation8 + $0x2a8] sm:$0xff]
    %v2896 = vld [vmem:[#allocation8 + $0x2b0] sm:$0xff]
    %v2897 = vld [vmem:[#allocation8 + $0x2b8] sm:$0xff]
    %v2898 = vld [vmem:[#allocation8 + $0x2c0] sm:$0xff]
    %v2899 = vld [vmem:[#allocation8 + $0x2c8] sm:$0xff]
    %v2900 = vld [vmem:[#allocation8 + $0x2d0] sm:$0xff]
    %v2901 = vld [vmem:[#allocation8 + $0x2d8] sm:$0xff]
    %v2902 = vld [vmem:[#allocation8 + $0x2e0] sm:$0xff]
    %v2903 = vld [vmem:[#allocation8 + $0x2e8] sm:$0xff]
    %v2904 = vld [vmem:[#allocation8 + $0x2f0] sm:$0xff]
    %v2905 = vld [vmem:[#allocation8 + $0x2f8] sm:$0xff]
    %v2906 = vld [vmem:[#allocation8 + $0x300] sm:$0xff]
    %v2907 = vld [vmem:[#allocation8 + $0x308] sm:$0xff]
    %v2908 = vld [vmem:[#allocation8 + $0x310] sm:$0xff]
    %v2909 = vld [vmem:[#allocation8 + $0x318] sm:$0xff]
    %v2910 = vld [vmem:[#allocation8 + $0x320] sm:$0xff]
    %v2911 = vld [vmem:[#allocation8 + $0x328] sm:$0xff]
    %v2912 = vld [vmem:[#allocation8 + $0x330] sm:$0xff]
    %v2913 = vld [vmem:[#allocation8 + $0x338] sm:$0xff]
    %v2914 = vld [vmem:[#allocation8 + $0x340] sm:$0xff]
    %v2915 = vld [vmem:[#allocation8 + $0x348] sm:$0xff]
    %v2916 = vld [vmem:[#allocation8 + $0x350] sm:$0xff]
    %v2917 = vld [vmem:[#allocation8 + $0x358] sm:$0xff]
    %v2918 = vld [vmem:[#allocation8 + $0x360] sm:$0xff]
    %v2919 = vld [vmem:[#allocation8 + $0x368] sm:$0xff]
    %v2920 = vld [vmem:[#allocation8 + $0x370] sm:$0xff]
    %v2921 = vld [vmem:[#allocation8 + $0x378] sm:$0xff]
    %v2922 = vld [vmem:[#allocation8 + $0x380] sm:$0xff]
    %v2923 = vld [vmem:[#allocation8 + $0x388] sm:$0xff]
    %v2924 = vld [vmem:[#allocation8 + $0x390] sm:$0xff]
    %v2925 = vld [vmem:[#allocation8 + $0x398] sm:$0xff]
    %v2926 = vld [vmem:[#allocation8 + $0x3a0] sm:$0xff]
    %v2927 = vld [vmem:[#allocation8 + $0x3a8] sm:$0xff]
    %v2928 = vld [vmem:[#allocation8 + $0x3b0] sm:$0xff]
    %v2929 = vld [vmem:[#allocation8 + $0x3b8] sm:$0xff]
    %v2930 = vld [vmem:[#allocation8 + $0x3c0] sm:$0xff]
    %v2931 = vld [vmem:[#allocation8 + $0x3c8] sm:$0xff]
    %v2932 = vld [vmem:[#allocation8 + $0x3d0] sm:$0xff]
    %v2933 = vld [vmem:[#allocation8 + $0x3d8] sm:$0xff]
    %v2934 = vld [vmem:[#allocation8 + $0x3e0] sm:$0xff]
    %v2935 = vld [vmem:[#allocation8 + $0x3e8] sm:$0xff]
    %v2936 = vld [vmem:[#allocation8 + $0x3f0] sm:$0xff]
    %v2937 = vld [vmem:[#allocation8 + $0x3f8] sm:$0xff]
    %v2938 = vld [vmem:[#allocation8 + $0x400] sm:$0xff]
    %v2939 = vld [vmem:[#allocation8 + $0x408] sm:$0xff]
    %v2940 = vld [vmem:[#allocation8 + $0x410] sm:$0xff]
    %v2941 = vld [vmem:[#allocation8 + $0x418] sm:$0xff]
    %v2942 = vld [vmem:[#allocation8 + $0x420] sm:$0xff]
    %v2943 = vld [vmem:[#allocation8 + $0x428] sm:$0xff]
    %v2944 = vld [vmem:[#allocation8 + $0x430] sm:$0xff]
    %v2945 = vld [vmem:[#allocation8 + $0x438] sm:$0xff]
    %v2946 = vld [vmem:[#allocation8 + $0x440] sm:$0xff]
    %v2947 = vld [vmem:[#allocation8 + $0x448] sm:$0xff]
    %v2948 = vld [vmem:[#allocation8 + $0x450] sm:$0xff]
    %v2949 = vld [vmem:[#allocation8 + $0x458] sm:$0xff]
    %v2950 = vld [vmem:[#allocation8 + $0x460] sm:$0xff]
    %v2951 = vld [vmem:[#allocation8 + $0x468] sm:$0xff]
    %v2952 = vld [vmem:[#allocation8 + $0x470] sm:$0xff]
    %v2953 = vld [vmem:[#allocation8 + $0x478] sm:$0xff]
    %v2954 = vld [vmem:[#allocation8 + $0x480] sm:$0xff]
    %v2955 = vld [vmem:[#allocation8 + $0x488] sm:$0xff]
    %v2956 = vld [vmem:[#allocation8 + $0x490] sm:$0xff]
    %v2957 = vld [vmem:[#allocation8 + $0x498] sm:$0xff]
    %v2958 = vld [vmem:[#allocation8 + $0x4a0] sm:$0xff]
    %v2959 = vld [vmem:[#allocation8 + $0x4a8] sm:$0xff]
    %v2960 = vld [vmem:[#allocation8 + $0x4b0] sm:$0xff]
    %v2961 = vld [vmem:[#allocation8 + $0x4b8] sm:$0xff]
    %v2962 = vld [vmem:[#allocation8 + $0x4c0] sm:$0xff]
    %v2963 = vld [vmem:[#allocation8 + $0x4c8] sm:$0xff]
    %v2964 = vld [vmem:[#allocation8 + $0x4d0] sm:$0xff]
    %v2965 = vld [vmem:[#allocation8 + $0x4d8] sm:$0xff]
    %v2966 = vld [vmem:[#allocation8 + $0x4e0] sm:$0xff]
    %v2967 = vld [vmem:[#allocation8 + $0x4e8] sm:$0xff]
    %v2968 = vld [vmem:[#allocation8 + $0x4f0] sm:$0xff]
    %v2969 = vld [vmem:[#allocation8 + $0x4f8] sm:$0xff]
    %v2970 = vld [vmem:[#allocation8 + $0x500] sm:$0xff]
    %v2971 = vld [vmem:[#allocation8 + $0x508] sm:$0xff]
    %v2972 = vld [vmem:[#allocation8 + $0x510] sm:$0xff]
    %v2973 = vld [vmem:[#allocation8 + $0x518] sm:$0xff]
    %v2974 = vld [vmem:[#allocation8 + $0x520] sm:$0xff]
    %v2975 = vld [vmem:[#allocation8 + $0x528] sm:$0xff]
    %v2976 = vld [vmem:[#allocation8 + $0x530] sm:$0xff]
    %v2977 = vld [vmem:[#allocation8 + $0x538] sm:$0xff]
    %v2978 = vld [vmem:[#allocation8 + $0x540] sm:$0xff]
    %v2979 = vld [vmem:[#allocation8 + $0x548] sm:$0xff]
    %v2980 = vld [vmem:[#allocation8 + $0x550] sm:$0xff]
    %v2981 = vld [vmem:[#allocation8 + $0x558] sm:$0xff]
    %v2982 = vld [vmem:[#allocation8 + $0x560] sm:$0xff]
    %v2983 = vld [vmem:[#allocation8 + $0x568] sm:$0xff]
    %v2984 = vld [vmem:[#allocation8 + $0x570] sm:$0xff]
    %v2985 = vld [vmem:[#allocation8 + $0x578] sm:$0xff]
    %v2986 = vld [vmem:[#allocation8 + $0x580] sm:$0xff]
    %v2987 = vld [vmem:[#allocation8 + $0x588] sm:$0xff]
    %v2988 = vld [vmem:[#allocation8 + $0x590] sm:$0xff]
    %v2989 = vld [vmem:[#allocation8 + $0x598] sm:$0xff]
    %v2990 = vld [vmem:[#allocation8 + $0x5a0] sm:$0xff]
    %v2991 = vld [vmem:[#allocation8 + $0x5a8] sm:$0xff]
    %v2992 = vld [vmem:[#allocation8 + $0x5b0] sm:$0xff]
    %v2993 = vld [vmem:[#allocation8 + $0x5b8] sm:$0xff]
    %v2994 = vld [vmem:[#allocation8 + $0x5c0] sm:$0xff]
    %v2995 = vld [vmem:[#allocation8 + $0x5c8] sm:$0xff]
    %v2996 = vld [vmem:[#allocation8 + $0x5d0] sm:$0xff]
    %v2997 = vld [vmem:[#allocation8 + $0x5d8] sm:$0xff]
    %v2998 = vld [vmem:[#allocation8 + $0x5e0] sm:$0xff]
    %v2999 = vld [vmem:[#allocation8 + $0x5e8] sm:$0xff]
    %v3000 = vld [vmem:[#allocation8 + $0x5f0] sm:$0xff]
    %v3001 = vld [vmem:[#allocation8 + $0x5f8] sm:$0xff]
    %v3002 = vld [vmem:[#allocation8 + $0x600] sm:$0xff]
    %v3003 = vld [vmem:[#allocation8 + $0x608] sm:$0xff]
    %v3004 = vld [vmem:[#allocation8 + $0x610] sm:$0xff]
    %v3005 = vld [vmem:[#allocation8 + $0x618] sm:$0xff]
    %v3006 = vld [vmem:[#allocation8 + $0x620] sm:$0xff]
    %v3007 = vld [vmem:[#allocation8 + $0x628] sm:$0xff]
    %v3008 = vld [vmem:[#allocation8 + $0x630] sm:$0xff]
    %v3009 = vld [vmem:[#allocation8 + $0x638] sm:$0xff]
    %v3010 = vld [vmem:[#allocation8 + $0x640] sm:$0xff]
    %v3011 = vld [vmem:[#allocation8 + $0x648] sm:$0xff]
    %v3012 = vld [vmem:[#allocation8 + $0x650] sm:$0xff]
    %v3013 = vld [vmem:[#allocation8 + $0x658] sm:$0xff]
    %v3014 = vld [vmem:[#allocation8 + $0x660] sm:$0xff]
    %v3015 = vld [vmem:[#allocation8 + $0x668] sm:$0xff]
    %v3016 = vld [vmem:[#allocation8 + $0x670] sm:$0xff]
    %v3017 = vld [vmem:[#allocation8 + $0x678] sm:$0xff]
    %v3018 = vld [vmem:[#allocation8 + $0x680] sm:$0xff]
    %v3019 = vld [vmem:[#allocation8 + $0x688] sm:$0xff]
    %v3020 = vld [vmem:[#allocation8 + $0x690] sm:$0xff]
    %v3021 = vld [vmem:[#allocation8 + $0x698] sm:$0xff]
    %v3022 = vld [vmem:[#allocation8 + $0x6a0] sm:$0xff]
    %v3023 = vld [vmem:[#allocation8 + $0x6a8] sm:$0xff]
    %v3024 = vld [vmem:[#allocation8 + $0x6b0] sm:$0xff]
    %v3025 = vld [vmem:[#allocation8 + $0x6b8] sm:$0xff]
    %v3026 = vld [vmem:[#allocation8 + $0x6c0] sm:$0xff]
    %v3027 = vld [vmem:[#allocation8 + $0x6c8] sm:$0xff]
    %v3028 = vld [vmem:[#allocation8 + $0x6d0] sm:$0xff]
    %v3029 = vld [vmem:[#allocation8 + $0x6d8] sm:$0xff]
    %v3030 = vld [vmem:[#allocation8 + $0x6e0] sm:$0xff]
    %v3031 = vld [vmem:[#allocation8 + $0x6e8] sm:$0xff]
    %v3032 = vld [vmem:[#allocation8 + $0x6f0] sm:$0xff]
    %v3033 = vld [vmem:[#allocation8 + $0x6f8] sm:$0xff]
    %v3034 = vld [vmem:[#allocation8 + $0x700] sm:$0xff]
    %v3035 = vld [vmem:[#allocation8 + $0x708] sm:$0xff]
    %v3036 = vld [vmem:[#allocation8 + $0x710] sm:$0xff]
    %v3037 = vld [vmem:[#allocation8 + $0x718] sm:$0xff]
    %v3038 = vld [vmem:[#allocation8 + $0x720] sm:$0xff]
    %v3039 = vld [vmem:[#allocation8 + $0x728] sm:$0xff]
    %v3040 = vld [vmem:[#allocation8 + $0x730] sm:$0xff]
    %v3041 = vld [vmem:[#allocation8 + $0x738] sm:$0xff]
    %v3042 = vld [vmem:[#allocation8 + $0x740] sm:$0xff]
    %v3043 = vld [vmem:[#allocation8 + $0x748] sm:$0xff]
    %v3044 = vld [vmem:[#allocation8 + $0x750] sm:$0xff]
    %v3045 = vld [vmem:[#allocation8 + $0x758] sm:$0xff]
    %v3046 = vld [vmem:[#allocation8 + $0x760] sm:$0xff]
    %v3047 = vld [vmem:[#allocation8 + $0x768] sm:$0xff]
    %v3048 = vld [vmem:[#allocation8 + $0x770] sm:$0xff]
    %v3049 = vld [vmem:[#allocation8 + $0x778] sm:$0xff]
    %v3050 = vld [vmem:[#allocation8 + $0x780] sm:$0xff]
    %v3051 = vld [vmem:[#allocation8 + $0x788] sm:$0xff]
    %v3052 = vld [vmem:[#allocation8 + $0x790] sm:$0xff]
    %v3053 = vld [vmem:[#allocation8 + $0x798] sm:$0xff]
    %v3054 = vld [vmem:[#allocation8 + $0x7a0] sm:$0xff]
    %v3055 = vld [vmem:[#allocation8 + $0x7a8] sm:$0xff]
    %v3056 = vld [vmem:[#allocation8 + $0x7b0] sm:$0xff]
    %v3057 = vld [vmem:[#allocation8 + $0x7b8] sm:$0xff]
    %v3058 = vld [vmem:[#allocation8 + $0x7c0] sm:$0xff]
    %v3059 = vld [vmem:[#allocation8 + $0x7c8] sm:$0xff]
    %v3060 = vld [vmem:[#allocation8 + $0x7d0] sm:$0xff]
    %v3061 = vld [vmem:[#allocation8 + $0x7d8] sm:$0xff]
    %v3062 = vld [vmem:[#allocation8 + $0x7e0] sm:$0xff]
    %v3063 = vld [vmem:[#allocation8 + $0x7e8] sm:$0xff]
    %v3064 = vld [vmem:[#allocation8 + $0x7f0] sm:$0xff]
    %v3065 = vld [vmem:[#allocation8 + $0x7f8] sm:$0xff]
    %v3066 = vld [vmem:[#allocation8 + $0x800] sm:$0xff]
    %v3067 = vld [vmem:[#allocation8 + $0x808] sm:$0xff]
    %v3068 = vld [vmem:[#allocation8 + $0x810] sm:$0xff]
    %v3069 = vld [vmem:[#allocation8 + $0x818] sm:$0xff]
    %v3070 = vld [vmem:[#allocation8 + $0x820] sm:$0xff]
    %v3071 = vld [vmem:[#allocation8 + $0x828] sm:$0xff]
    %v3072 = vld [vmem:[#allocation8 + $0x830] sm:$0xff]
    %v3073 = vld [vmem:[#allocation8 + $0x838] sm:$0xff]
    %v3074 = vld [vmem:[#allocation8 + $0x840] sm:$0xff]
    %v3075 = vld [vmem:[#allocation8 + $0x848] sm:$0xff]
    %v3076 = vld [vmem:[#allocation8 + $0x850] sm:$0xff]
    %v3077 = vld [vmem:[#allocation8 + $0x858] sm:$0xff]
    %v3078 = vld [vmem:[#allocation8 + $0x860] sm:$0xff]
    %v3079 = vld [vmem:[#allocation8 + $0x868] sm:$0xff]
    %v3080 = vld [vmem:[#allocation8 + $0x870] sm:$0xff]
    %v3081 = vld [vmem:[#allocation8 + $0x878] sm:$0xff]
    %v3082 = vld [vmem:[#allocation8 + $0x880] sm:$0xff]
    %v3083 = vld [vmem:[#allocation8 + $0x888] sm:$0xff]
    %v3084 = vld [vmem:[#allocation8 + $0x890] sm:$0xff]
    %v3085 = vld [vmem:[#allocation8 + $0x898] sm:$0xff]
    %v3086 = vld [vmem:[#allocation8 + $0x8a0] sm:$0xff]
    %v3087 = vld [vmem:[#allocation8 + $0x8a8] sm:$0xff]
    %v3088 = vld [vmem:[#allocation8 + $0x8b0] sm:$0xff]
    %v3089 = vld [vmem:[#allocation8 + $0x8b8] sm:$0xff]
    %v3090 = vld [vmem:[#allocation8 + $0x8c0] sm:$0xff]
    %v3091 = vld [vmem:[#allocation8 + $0x8c8] sm:$0xff]
    %v3092 = vld [vmem:[#allocation8 + $0x8d0] sm:$0xff]
    %v3093 = vld [vmem:[#allocation8 + $0x8d8] sm:$0xff]
    %v3094 = vld [vmem:[#allocation8 + $0x8e0] sm:$0xff]
    %v3095 = vld [vmem:[#allocation8 + $0x8e8] sm:$0xff]
    %v3096 = vld [vmem:[#allocation8 + $0x8f0] sm:$0xff]
    %v3097 = vld [vmem:[#allocation8 + $0x8f8] sm:$0xff]
    %v3098 = vld [vmem:[#allocation10] sm:$0x3f]
    %v3100 = vperm.slane %v3098, 0
    %v3101 = vperm.slane %v3098, 1
    %v3102 = vperm.slane %v3098, 2
    %v3103 = vperm.slane %v3098, 3
    %v3104 = vperm.slane %v3098, 4
    %v3105 = vperm.slane %v3098, 5
    %v3400 = vunpack.c.l.b16 %v2810
    %v3401 = vunpack.c.h.b16 %v2810
    %v3402 = vunpack.c.l.b16 %v2811
    %v3403 = vunpack.c.h.b16 %v2811
    %v3404 = vunpack.c.l.b16 %v2812
    %v3405 = vunpack.c.h.b16 %v2812
    %v3406 = vunpack.c.l.b16 %v2813
    %v3407 = vunpack.c.h.b16 %v2813
    %v3408 = vunpack.c.l.b16 %v2814
    %v3409 = vunpack.c.h.b16 %v2814
    %v3410 = vunpack.c.l.b16 %v2815
    %v3411 = vunpack.c.h.b16 %v2815
    %v3412 = vunpack.c.l.b16 %v2816
    %v3413 = vunpack.c.h.b16 %v2816
    %v3414 = vunpack.c.l.b16 %v2817
    %v3415 = vunpack.c.h.b16 %v2817
    %v3416 = vunpack.c.l.b16 %v2818
    %v3417 = vunpack.c.h.b16 %v2818
    %v3418 = vunpack.c.l.b16 %v2819
    %v3419 = vunpack.c.h.b16 %v2819
    %v3420 = vunpack.c.l.b16 %v2820
    %v3421 = vunpack.c.h.b16 %v2820
    %v3422 = vunpack.c.l.b16 %v2821
    %v3423 = vunpack.c.h.b16 %v2821
    %v3424 = vunpack.c.l.b16 %v2822
    %v3425 = vunpack.c.h.b16 %v2822
    %v3426 = vunpack.c.l.b16 %v2823
    %v3427 = vunpack.c.h.b16 %v2823
    %v3428 = vunpack.c.l.b16 %v2824
    %v3429 = vunpack.c.h.b16 %v2824
    %v3430 = vunpack.c.l.b16 %v2825
    %v3431 = vunpack.c.h.b16 %v2825
    %v3432 = vunpack.c.l.b16 %v2826
    %v3433 = vunpack.c.h.b16 %v2826
    %v3434 = vunpack.c.l.b16 %v2827
    %v3435 = vunpack.c.h.b16 %v2827
    %v3436 = vunpack.c.l.b16 %v2828
    %v3437 = vunpack.c.h.b16 %v2828
    %v3438 = vunpack.c.l.b16 %v2829
    %v3439 = vunpack.c.h.b16 %v2829
    %v3440 = vunpack.c.l.b16 %v2830
    %v3441 = vunpack.c.h.b16 %v2830
    %v3442 = vunpack.c.l.b16 %v2831
    %v3443 = vunpack.c.h.b16 %v2831
    %v3444 = vunpack.c.l.b16 %v2832
    %v3445 = vunpack.c.h.b16 %v2832
    %v3446 = vunpack.c.l.b16 %v2833
    %v3447 = vunpack.c.h.b16 %v2833
    %v3448 = vunpack.c.l.b16 %v2834
    %v3449 = vunpack.c.h.b16 %v2834
    %v3450 = vunpack.c.l.b16 %v2835
    %v3451 = vunpack.c.h.b16 %v2835
    %v3452 = vunpack.c.l.b16 %v2836
    %v3453 = vunpack.c.h.b16 %v2836
    %v3454 = vunpack.c.l.b16 %v2837
    %v3455 = vunpack.c.h.b16 %v2837
    %v3456 = vunpack.c.l.b16 %v2838
    %v3457 = vunpack.c.h.b16 %v2838
    %v3458 = vunpack.c.l.b16 %v2839
    %v3459 = vunpack.c.h.b16 %v2839
    %v3460 = vunpack.c.l.b16 %v2840
    %v3461 = vunpack.c.h.b16 %v2840
    %v3462 = vunpack.c.l.b16 %v2841
    %v3463 = vunpack.c.h.b16 %v2841
    %v3464 = vunpack.c.l.b16 %v2842
    %v3465 = vunpack.c.h.b16 %v2842
    %v3466 = vunpack.c.l.b16 %v2843
    %v3467 = vunpack.c.h.b16 %v2843
    %v3468 = vunpack.c.l.b16 %v2844
    %v3469 = vunpack.c.h.b16 %v2844
    %v3470 = vunpack.c.l.b16 %v2845
    %v3471 = vunpack.c.h.b16 %v2845
    %v3472 = vunpack.c.l.b16 %v2846
    %v3473 = vunpack.c.h.b16 %v2846
    %v3474 = vunpack.c.l.b16 %v2847
    %v3475 = vunpack.c.h.b16 %v2847
    %v3476 = vunpack.c.l.b16 %v2848
    %v3477 = vunpack.c.h.b16 %v2848
    %v3478 = vunpack.c.l.b16 %v2849
    %v3479 = vunpack.c.h.b16 %v2849
    %v3480 = vunpack.c.l.b16 %v2850
    %v3481 = vunpack.c.h.b16 %v2850
    %v3482 = vunpack.c.l.b16 %v2851
    %v3483 = vunpack.c.h.b16 %v2851
    %v3484 = vunpack.c.l.b16 %v2852
    %v3485 = vunpack.c.h.b16 %v2852
    %v3486 = vunpack.c.l.b16 %v2853
    %v3487 = vunpack.c.h.b16 %v2853
    %v3488 = vunpack.c.l.b16 %v2854
    %v3489 = vunpack.c.h.b16 %v2854
    %v3490 = vunpack.c.l.b16 %v2855
    %v3491 = vunpack.c.h.b16 %v2855
    %v3492 = vunpack.c.l.b16 %v2856
    %v3493 = vunpack.c.h.b16 %v2856
    %v3494 = vunpack.c.l.b16 %v2857
    %v3495 = vunpack.c.h.b16 %v2857
    %v3496 = vunpack.c.l.b16 %v2858
    %v3497 = vunpack.c.h.b16 %v2858
    %v3498 = vunpack.c.l.b16 %v2859
    %v3499 = vunpack.c.h.b16 %v2859
    %v3500 = vunpack.c.l.b16 %v2860
    %v3501 = vunpack.c.h.b16 %v2860
    %v3502 = vunpack.c.l.b16 %v2861
    %v3503 = vunpack.c.h.b16 %v2861
    %v3504 = vunpack.c.l.b16 %v2862
    %v3505 = vunpack.c.h.b16 %v2862
    %v3506 = vunpack.c.l.b16 %v2863
    %v3507 = vunpack.c.h.b16 %v2863
    %v3508 = vunpack.c.l.b16 %v2864
    %v3509 = vunpack.c.h.b16 %v2864
    %v3510 = vunpack.c.l.b16 %v2865
    %v3511 = vunpack.c.h.b16 %v2865
    %v3512 = vunpack.c.l.b16 %v2866
    %v3513 = vunpack.c.h.b16 %v2866
    %v3514 = vunpack.c.l.b16 %v2867
    %v3515 = vunpack.c.h.b16 %v2867
    %v3516 = vunpack.c.l.b16 %v2868
    %v3517 = vunpack.c.h.b16 %v2868
    %v3518 = vunpack.c.l.b16 %v2869
    %v3519 = vunpack.c.h.b16 %v2869
    %v3520 = vunpack.c.l.b16 %v2870
    %v3521 = vunpack.c.h.b16 %v2870
    %v3522 = vunpack.c.l.b16 %v2871
    %v3523 = vunpack.c.h.b16 %v2871
    %v3524 = vunpack.c.l.b16 %v2872
    %v3525 = vunpack.c.h.b16 %v2872
    %v3526 = vunpack.c.l.b16 %v2873
    %v3527 = vunpack.c.h.b16 %v2873
    %v3528 = vunpack.c.l.b16 %v2874
    %v3529 = vunpack.c.h.b16 %v2874
    %v3530 = vunpack.c.l.b16 %v2875
    %v3531 = vunpack.c.h.b16 %v2875
    %v3532 = vunpack.c.l.b16 %v2876
    %v3533 = vunpack.c.h.b16 %v2876
    %v3534 = vunpack.c.l.b16 %v2877
    %v3535 = vunpack.c.h.b16 %v2877
    %v3536 = vunpack.c.l.b16 %v2878
    %v3537 = vunpack.c.h.b16 %v2878
    %v3538 = vunpack.c.l.b16 %v2879
    %v3539 = vunpack.c.h.b16 %v2879
    %v3540 = vunpack.c.l.b16 %v2880
    %v3541 = vunpack.c.h.b16 %v2880
    %v3542 = vunpack.c.l.b16 %v2881
    %v3543 = vunpack.c.h.b16 %v2881
    %v3544 = vunpack.c.l.b16 %v2882
    %v3545 = vunpack.c.h.b16 %v2882
    %v3546 = vunpack.c.l.b16 %v2883
    %v3547 = vunpack.c.h.b16 %v2883
    %v3548 = vunpack.c.l.b16 %v2884
    %v3549 = vunpack.c.h.b16 %v2884
    %v3550 = vunpack.c.l.b16 %v2885
    %v3551 = vunpack.c.h.b16 %v2885
    %v3552 = vunpack.c.l.b16 %v2886
    %v3553 = vunpack.c.h.b16 %v2886
    %v3554 = vunpack.c.l.b16 %v2887
    %v3555 = vunpack.c.h.b16 %v2887
    %v3556 = vunpack.c.l.b16 %v2888
    %v3557 = vunpack.c.h.b16 %v2888
    %v3558 = vunpack.c.l.b16 %v2889
    %v3559 = vunpack.c.h.b16 %v2889
    %v3560 = vunpack.c.l.b16 %v2890
    %v3561 = vunpack.c.h.b16 %v2890
    %v3562 = vunpack.c.l.b16 %v2891
    %v3563 = vunpack.c.h.b16 %v2891
    %v3564 = vunpack.c.l.b16 %v2892
    %v3565 = vunpack.c.h.b16 %v2892
    %v3566 = vunpack.c.l.b16 %v2893
    %v3567 = vunpack.c.h.b16 %v2893
    %v3568 = vunpack.c.l.b16 %v2894
    %v3569 = vunpack.c.h.b16 %v2894
    %v3570 = vunpack.c.l.b16 %v2895
    %v3571 = vunpack.c.h.b16 %v2895
    %v3572 = vunpack.c.l.b16 %v2896
    %v3573 = vunpack.c.h.b16 %v2896
    %v3574 = vunpack.c.l.b16 %v2897
    %v3575 = vunpack.c.h.b16 %v2897
    %v3576 = vunpack.c.l.b16 %v2898
    %v3577 = vunpack.c.h.b16 %v2898
    %v3578 = vunpack.c.l.b16 %v2899
    %v3579 = vunpack.c.h.b16 %v2899
    %v3580 = vunpack.c.l.b16 %v2900
    %v3581 = vunpack.c.h.b16 %v2900
    %v3582 = vunpack.c.l.b16 %v2901
    %v3583 = vunpack.c.h.b16 %v2901
    %v3584 = vunpack.c.l.b16 %v2902
    %v3585 = vunpack.c.h.b16 %v2902
    %v3586 = vunpack.c.l.b16 %v2903
    %v3587 = vunpack.c.h.b16 %v2903
    %v3588 = vunpack.c.l.b16 %v2904
    %v3589 = vunpack.c.h.b16 %v2904
    %v3590 = vunpack.c.l.b16 %v2905
    %v3591 = vunpack.c.h.b16 %v2905
    %v3592 = vunpack.c.l.b16 %v2906
    %v3593 = vunpack.c.h.b16 %v2906
    %v3594 = vunpack.c.l.b16 %v2907
    %v3595 = vunpack.c.h.b16 %v2907
    %v3596 = vunpack.c.l.b16 %v2908
    %v3597 = vunpack.c.h.b16 %v2908
    %v3598 = vunpack.c.l.b16 %v2909
    %v3599 = vunpack.c.h.b16 %v2909
    %v3600 = vunpack.c.l.b16 %v2910
    %v3601 = vunpack.c.h.b16 %v2910
    %v3602 = vunpack.c.l.b16 %v2911
    %v3603 = vunpack.c.h.b16 %v2911
    %v3604 = vunpack.c.l.b16 %v2912
    %v3605 = vunpack.c.h.b16 %v2912
    %v3606 = vunpack.c.l.b16 %v2913
    %v3607 = vunpack.c.h.b16 %v2913
    %v3608 = vunpack.c.l.b16 %v2914
    %v3609 = vunpack.c.h.b16 %v2914
    %v3610 = vunpack.c.l.b16 %v2915
    %v3611 = vunpack.c.h.b16 %v2915
    %v3612 = vunpack.c.l.b16 %v2916
    %v3613 = vunpack.c.h.b16 %v2916
    %v3614 = vunpack.c.l.b16 %v2917
    %v3615 = vunpack.c.h.b16 %v2917
    %v3616 = vunpack.c.l.b16 %v2918
    %v3617 = vunpack.c.h.b16 %v2918
    %v3618 = vunpack.c.l.b16 %v2919
    %v3619 = vunpack.c.h.b16 %v2919
    %v3620 = vunpack.c.l.b16 %v2920
    %v3621 = vunpack.c.h.b16 %v2920
    %v3622 = vunpack.c.l.b16 %v2921
    %v3623 = vunpack.c.h.b16 %v2921
    %v3624 = vunpack.c.l.b16 %v2922
    %v3625 = vunpack.c.h.b16 %v2922
    %v3626 = vunpack.c.l.b16 %v2923
    %v3627 = vunpack.c.h.b16 %v2923
    %v3628 = vunpack.c.l.b16 %v2924
    %v3629 = vunpack.c.h.b16 %v2924
    %v3630 = vunpack.c.l.b16 %v2925
    %v3631 = vunpack.c.h.b16 %v2925
    %v3632 = vunpack.c.l.b16 %v2926
    %v3633 = vunpack.c.h.b16 %v2926
    %v3634 = vunpack.c.l.b16 %v2927
    %v3635 = vunpack.c.h.b16 %v2927
    %v3636 = vunpack.c.l.b16 %v2928
    %v3637 = vunpack.c.h.b16 %v2928
    %v3638 = vunpack.c.l.b16 %v2929
    %v3639 = vunpack.c.h.b16 %v2929
    %v3640 = vunpack.c.l.b16 %v2930
    %v3641 = vunpack.c.h.b16 %v2930
    %v3642 = vunpack.c.l.b16 %v2931
    %v3643 = vunpack.c.h.b16 %v2931
    %v3644 = vunpack.c.l.b16 %v2932
    %v3645 = vunpack.c.h.b16 %v2932
    %v3646 = vunpack.c.l.b16 %v2933
    %v3647 = vunpack.c.h.b16 %v2933
    %v3648 = vunpack.c.l.b16 %v2934
    %v3649 = vunpack.c.h.b16 %v2934
    %v3650 = vunpack.c.l.b16 %v2935
    %v3651 = vunpack.c.h.b16 %v2935
    %v3652 = vunpack.c.l.b16 %v2936
    %v3653 = vunpack.c.h.b16 %v2936
    %v3654 = vunpack.c.l.b16 %v2937
    %v3655 = vunpack.c.h.b16 %v2937
    %v3656 = vunpack.c.l.b16 %v2938
    %v3657 = vunpack.c.h.b16 %v2938
    %v3658 = vunpack.c.l.b16 %v2939
    %v3659 = vunpack.c.h.b16 %v2939
    %v3660 = vunpack.c.l.b16 %v2940
    %v3661 = vunpack.c.h.b16 %v2940
    %v3662 = vunpack.c.l.b16 %v2941
    %v3663 = vunpack.c.h.b16 %v2941
    %v3664 = vunpack.c.l.b16 %v2942
    %v3665 = vunpack.c.h.b16 %v2942
    %v3666 = vunpack.c.l.b16 %v2943
    %v3667 = vunpack.c.h.b16 %v2943
    %v3668 = vunpack.c.l.b16 %v2944
    %v3669 = vunpack.c.h.b16 %v2944
    %v3670 = vunpack.c.l.b16 %v2945
    %v3671 = vunpack.c.h.b16 %v2945
    %v3672 = vunpack.c.l.b16 %v2946
    %v3673 = vunpack.c.h.b16 %v2946
    %v3674 = vunpack.c.l.b16 %v2947
    %v3675 = vunpack.c.h.b16 %v2947
    %v3676 = vunpack.c.l.b16 %v2948
    %v3677 = vunpack.c.h.b16 %v2948
    %v3678 = vunpack.c.l.b16 %v2949
    %v3679 = vunpack.c.h.b16 %v2949
    %v3680 = vunpack.c.l.b16 %v2950
    %v3681 = vunpack.c.h.b16 %v2950
    %v3682 = vunpack.c.l.b16 %v2951
    %v3683 = vunpack.c.h.b16 %v2951
    %v3684 = vunpack.c.l.b16 %v2952
    %v3685 = vunpack.c.h.b16 %v2952
    %v3686 = vunpack.c.l.b16 %v2953
    %v3687 = vunpack.c.h.b16 %v2953
    %v3688 = vunpack.c.l.b16 %v2954
    %v3689 = vunpack.c.h.b16 %v2954
    %v3690 = vunpack.c.l.b16 %v2955
    %v3691 = vunpack.c.h.b16 %v2955
    %v3692 = vunpack.c.l.b16 %v2956
    %v3693 = vunpack.c.h.b16 %v2956
    %v3694 = vunpack.c.l.b16 %v2957
    %v3695 = vunpack.c.h.b16 %v2957
    %v3696 = vunpack.c.l.b16 %v2958
    %v3697 = vunpack.c.h.b16 %v2958
    %v3698 = vunpack.c.l.b16 %v2959
    %v3699 = vunpack.c.h.b16 %v2959
    %v3700 = vunpack.c.l.b16 %v2960
    %v3701 = vunpack.c.h.b16 %v2960
    %v3702 = vunpack.c.l.b16 %v2961
    %v3703 = vunpack.c.h.b16 %v2961
    %v3704 = vunpack.c.l.b16 %v2962
    %v3705 = vunpack.c.h.b16 %v2962
    %v3706 = vunpack.c.l.b16 %v2963
    %v3707 = vunpack.c.h.b16 %v2963
    %v3708 = vunpack.c.l.b16 %v2964
    %v3709 = vunpack.c.h.b16 %v2964
    %v3710 = vunpack.c.l.b16 %v2965
    %v3711 = vunpack.c.h.b16 %v2965
    %v3712 = vunpack.c.l.b16 %v2966
    %v3713 = vunpack.c.h.b16 %v2966
    %v3714 = vunpack.c.l.b16 %v2967
    %v3715 = vunpack.c.h.b16 %v2967
    %v3716 = vunpack.c.l.b16 %v2968
    %v3717 = vunpack.c.h.b16 %v2968
    %v3718 = vunpack.c.l.b16 %v2969
    %v3719 = vunpack.c.h.b16 %v2969
    %v3720 = vunpack.c.l.b16 %v2970
    %v3721 = vunpack.c.h.b16 %v2970
    %v3722 = vunpack.c.l.b16 %v2971
    %v3723 = vunpack.c.h.b16 %v2971
    %v3724 = vunpack.c.l.b16 %v2972
    %v3725 = vunpack.c.h.b16 %v2972
    %v3726 = vunpack.c.l.b16 %v2973
    %v3727 = vunpack.c.h.b16 %v2973
    %v3728 = vunpack.c.l.b16 %v2974
    %v3729 = vunpack.c.h.b16 %v2974
    %v3730 = vunpack.c.l.b16 %v2975
    %v3731 = vunpack.c.h.b16 %v2975
    %v3732 = vunpack.c.l.b16 %v2976
    %v3733 = vunpack.c.h.b16 %v2976
    %v3734 = vunpack.c.l.b16 %v2977
    %v3735 = vunpack.c.h.b16 %v2977
    %v3736 = vunpack.c.l.b16 %v2978
    %v3737 = vunpack.c.h.b16 %v2978
    %v3738 = vunpack.c.l.b16 %v2979
    %v3739 = vunpack.c.h.b16 %v2979
    %v3740 = vunpack.c.l.b16 %v2980
    %v3741 = vunpack.c.h.b16 %v2980
    %v3742 = vunpack.c.l.b16 %v2981
    %v3743 = vunpack.c.h.b16 %v2981
    %v3744 = vunpack.c.l.b16 %v2982
    %v3745 = vunpack.c.h.b16 %v2982
    %v3746 = vunpack.c.l.b16 %v2983
    %v3747 = vunpack.c.h.b16 %v2983
    %v3748 = vunpack.c.l.b16 %v2984
    %v3749 = vunpack.c.h.b16 %v2984
    %v3750 = vunpack.c.l.b16 %v2985
    %v3751 = vunpack.c.h.b16 %v2985
    %v3752 = vunpack.c.l.b16 %v2986
    %v3753 = vunpack.c.h.b16 %v2986
    %v3754 = vunpack.c.l.b16 %v2987
    %v3755 = vunpack.c.h.b16 %v2987
    %v3756 = vunpack.c.l.b16 %v2988
    %v3757 = vunpack.c.h.b16 %v2988
    %v3758 = vunpack.c.l.b16 %v2989
    %v3759 = vunpack.c.h.b16 %v2989
    %v3760 = vunpack.c.l.b16 %v2990
    %v3761 = vunpack.c.h.b16 %v2990
    %v3762 = vunpack.c.l.b16 %v2991
    %v3763 = vunpack.c.h.b16 %v2991
    %v3764 = vunpack.c.l.b16 %v2992
    %v3765 = vunpack.c.h.b16 %v2992
    %v3766 = vunpack.c.l.b16 %v2993
    %v3767 = vunpack.c.h.b16 %v2993
    %v3768 = vunpack.c.l.b16 %v2994
    %v3769 = vunpack.c.h.b16 %v2994
    %v3770 = vunpack.c.l.b16 %v2995
    %v3771 = vunpack.c.h.b16 %v2995
    %v3772 = vunpack.c.l.b16 %v2996
    %v3773 = vunpack.c.h.b16 %v2996
    %v3774 = vunpack.c.l.b16 %v2997
    %v3775 = vunpack.c.h.b16 %v2997
    %v3776 = vunpack.c.l.b16 %v2998
    %v3777 = vunpack.c.h.b16 %v2998
    %v3778 = vunpack.c.l.b16 %v2999
    %v3779 = vunpack.c.h.b16 %v2999
    %v3780 = vunpack.c.l.b16 %v3000
    %v3781 = vunpack.c.h.b16 %v3000
    %v3782 = vunpack.c.l.b16 %v3001
    %v3783 = vunpack.c.h.b16 %v3001
    %v3784 = vunpack.c.l.b16 %v3002
    %v3785 = vunpack.c.h.b16 %v3002
    %v3786 = vunpack.c.l.b16 %v3003
    %v3787 = vunpack.c.h.b16 %v3003
    %v3788 = vunpack.c.l.b16 %v3004
    %v3789 = vunpack.c.h.b16 %v3004
    %v3790 = vunpack.c.l.b16 %v3005
    %v3791 = vunpack.c.h.b16 %v3005
    %v3792 = vunpack.c.l.b16 %v3006
    %v3793 = vunpack.c.h.b16 %v3006
    %v3794 = vunpack.c.l.b16 %v3007
    %v3795 = vunpack.c.h.b16 %v3007
    %v3796 = vunpack.c.l.b16 %v3008
    %v3797 = vunpack.c.h.b16 %v3008
    %v3798 = vunpack.c.l.b16 %v3009
    %v3799 = vunpack.c.h.b16 %v3009
    %v3800 = vunpack.c.l.b16 %v3010
    %v3801 = vunpack.c.h.b16 %v3010
    %v3802 = vunpack.c.l.b16 %v3011
    %v3803 = vunpack.c.h.b16 %v3011
    %v3804 = vunpack.c.l.b16 %v3012
    %v3805 = vunpack.c.h.b16 %v3012
    %v3806 = vunpack.c.l.b16 %v3013
    %v3807 = vunpack.c.h.b16 %v3013
    %v3808 = vunpack.c.l.b16 %v3014
    %v3809 = vunpack.c.h.b16 %v3014
    %v3810 = vunpack.c.l.b16 %v3015
    %v3811 = vunpack.c.h.b16 %v3015
    %v3812 = vunpack.c.l.b16 %v3016
    %v3813 = vunpack.c.h.b16 %v3016
    %v3814 = vunpack.c.l.b16 %v3017
    %v3815 = vunpack.c.h.b16 %v3017
    %v3816 = vunpack.c.l.b16 %v3018
    %v3817 = vunpack.c.h.b16 %v3018
    %v3818 = vunpack.c.l.b16 %v3019
    %v3819 = vunpack.c.h.b16 %v3019
    %v3820 = vunpack.c.l.b16 %v3020
    %v3821 = vunpack.c.h.b16 %v3020
    %v3822 = vunpack.c.l.b16 %v3021
    %v3823 = vunpack.c.h.b16 %v3021
    %v3824 = vunpack.c.l.b16 %v3022
    %v3825 = vunpack.c.h.b16 %v3022
    %v3826 = vunpack.c.l.b16 %v3023
    %v3827 = vunpack.c.h.b16 %v3023
    %v3828 = vunpack.c.l.b16 %v3024
    %v3829 = vunpack.c.h.b16 %v3024
    %v3830 = vunpack.c.l.b16 %v3025
    %v3831 = vunpack.c.h.b16 %v3025
    %v3832 = vunpack.c.l.b16 %v3026
    %v3833 = vunpack.c.h.b16 %v3026
    %v3834 = vunpack.c.l.b16 %v3027
    %v3835 = vunpack.c.h.b16 %v3027
    %v3836 = vunpack.c.l.b16 %v3028
    %v3837 = vunpack.c.h.b16 %v3028
    %v3838 = vunpack.c.l.b16 %v3029
    %v3839 = vunpack.c.h.b16 %v3029
    %v3840 = vunpack.c.l.b16 %v3030
    %v3841 = vunpack.c.h.b16 %v3030
    %v3842 = vunpack.c.l.b16 %v3031
    %v3843 = vunpack.c.h.b16 %v3031
    %v3844 = vunpack.c.l.b16 %v3032
    %v3845 = vunpack.c.h.b16 %v3032
    %v3846 = vunpack.c.l.b16 %v3033
    %v3847 = vunpack.c.h.b16 %v3033
    %v3848 = vunpack.c.l.b16 %v3034
    %v3849 = vunpack.c.h.b16 %v3034
    %v3850 = vunpack.c.l.b16 %v3035
    %v3851 = vunpack.c.h.b16 %v3035
    %v3852 = vunpack.c.l.b16 %v3036
    %v3853 = vunpack.c.h.b16 %v3036
    %v3854 = vunpack.c.l.b16 %v3037
    %v3855 = vunpack.c.h.b16 %v3037
    %v3856 = vunpack.c.l.b16 %v3038
    %v3857 = vunpack.c.h.b16 %v3038
    %v3858 = vunpack.c.l.b16 %v3039
    %v3859 = vunpack.c.h.b16 %v3039
    %v3860 = vunpack.c.l.b16 %v3040
    %v3861 = vunpack.c.h.b16 %v3040
    %v3862 = vunpack.c.l.b16 %v3041
    %v3863 = vunpack.c.h.b16 %v3041
    %v3864 = vunpack.c.l.b16 %v3042
    %v3865 = vunpack.c.h.b16 %v3042
    %v3866 = vunpack.c.l.b16 %v3043
    %v3867 = vunpack.c.h.b16 %v3043
    %v3868 = vunpack.c.l.b16 %v3044
    %v3869 = vunpack.c.h.b16 %v3044
    %v3870 = vunpack.c.l.b16 %v3045
    %v3871 = vunpack.c.h.b16 %v3045
    %v3872 = vunpack.c.l.b16 %v3046
    %v3873 = vunpack.c.h.b16 %v3046
    %v3874 = vunpack.c.l.b16 %v3047
    %v3875 = vunpack.c.h.b16 %v3047
    %v3876 = vunpack.c.l.b16 %v3048
    %v3877 = vunpack.c.h.b16 %v3048
    %v3878 = vunpack.c.l.b16 %v3049
    %v3879 = vunpack.c.h.b16 %v3049
    %v3880 = vunpack.c.l.b16 %v3050
    %v3881 = vunpack.c.h.b16 %v3050
    %v3882 = vunpack.c.l.b16 %v3051
    %v3883 = vunpack.c.h.b16 %v3051
    %v3884 = vunpack.c.l.b16 %v3052
    %v3885 = vunpack.c.h.b16 %v3052
    %v3886 = vunpack.c.l.b16 %v3053
    %v3887 = vunpack.c.h.b16 %v3053
    %v3888 = vunpack.c.l.b16 %v3054
    %v3889 = vunpack.c.h.b16 %v3054
    %v3890 = vunpack.c.l.b16 %v3055
    %v3891 = vunpack.c.h.b16 %v3055
    %v3892 = vunpack.c.l.b16 %v3056
    %v3893 = vunpack.c.h.b16 %v3056
    %v3894 = vunpack.c.l.b16 %v3057
    %v3895 = vunpack.c.h.b16 %v3057
    %v3896 = vunpack.c.l.b16 %v3058
    %v3897 = vunpack.c.h.b16 %v3058
    %v3898 = vunpack.c.l.b16 %v3059
    %v3899 = vunpack.c.h.b16 %v3059
    %v3900 = vunpack.c.l.b16 %v3060
    %v3901 = vunpack.c.h.b16 %v3060
    %v3902 = vunpack.c.l.b16 %v3061
    %v3903 = vunpack.c.h.b16 %v3061
    %v3904 = vunpack.c.l.b16 %v3062
    %v3905 = vunpack.c.h.b16 %v3062
    %v3906 = vunpack.c.l.b16 %v3063
    %v3907 = vunpack.c.h.b16 %v3063
    %v3908 = vunpack.c.l.b16 %v3064
    %v3909 = vunpack.c.h.b16 %v3064
    %v3910 = vunpack.c.l.b16 %v3065
    %v3911 = vunpack.c.h.b16 %v3065
    %v3912 = vunpack.c.l.b16 %v3066
    %v3913 = vunpack.c.h.b16 %v3066
    %v3914 = vunpack.c.l.b16 %v3067
    %v3915 = vunpack.c.h.b16 %v3067
    %v3916 = vunpack.c.l.b16 %v3068
    %v3917 = vunpack.c.h.b16 %v3068
    %v3918 = vunpack.c.l.b16 %v3069
    %v3919 = vunpack.c.h.b16 %v3069
    %v3920 = vunpack.c.l.b16 %v3070
    %v3921 = vunpack.c.h.b16 %v3070
    %v3922 = vunpack.c.l.b16 %v3071
    %v3923 = vunpack.c.h.b16 %v3071
    %v3924 = vunpack.c.l.b16 %v3072
    %v3925 = vunpack.c.h.b16 %v3072
    %v3926 = vunpack.c.l.b16 %v3073
    %v3927 = vunpack.c.h.b16 %v3073
    %v3928 = vunpack.c.l.b16 %v3074
    %v3929 = vunpack.c.h.b16 %v3074
    %v3930 = vunpack.c.l.b16 %v3075
    %v3931 = vunpack.c.h.b16 %v3075
    %v3932 = vunpack.c.l.b16 %v3076
    %v3933 = vunpack.c.h.b16 %v3076
    %v3934 = vunpack.c.l.b16 %v3077
    %v3935 = vunpack.c.h.b16 %v3077
    %v3936 = vunpack.c.l.b16 %v3078
    %v3937 = vunpack.c.h.b16 %v3078
    %v3938 = vunpack.c.l.b16 %v3079
    %v3939 = vunpack.c.h.b16 %v3079
    %v3940 = vunpack.c.l.b16 %v3080
    %v3941 = vunpack.c.h.b16 %v3080
    %v3942 = vunpack.c.l.b16 %v3081
    %v3943 = vunpack.c.h.b16 %v3081
    %v3944 = vunpack.c.l.b16 %v3082
    %v3945 = vunpack.c.h.b16 %v3082
    %v3946 = vunpack.c.l.b16 %v3083
    %v3947 = vunpack.c.h.b16 %v3083
    %v3948 = vunpack.c.l.b16 %v3084
    %v3949 = vunpack.c.h.b16 %v3084
    %v3950 = vunpack.c.l.b16 %v3085
    %v3951 = vunpack.c.h.b16 %v3085
    %v3952 = vunpack.c.l.b16 %v3086
    %v3953 = vunpack.c.h.b16 %v3086
    %v3954 = vunpack.c.l.b16 %v3087
    %v3955 = vunpack.c.h.b16 %v3087
    %v3956 = vunpack.c.l.b16 %v3088
    %v3957 = vunpack.c.h.b16 %v3088
    %v3958 = vunpack.c.l.b16 %v3089
    %v3959 = vunpack.c.h.b16 %v3089
    %v3960 = vunpack.c.l.b16 %v3090
    %v3961 = vunpack.c.h.b16 %v3090
    %v3962 = vunpack.c.l.b16 %v3091
    %v3963 = vunpack.c.h.b16 %v3091
    %v3964 = vunpack.c.l.b16 %v3092
    %v3965 = vunpack.c.h.b16 %v3092
    %v3966 = vunpack.c.l.b16 %v3093
    %v3967 = vunpack.c.h.b16 %v3093
    %v3968 = vunpack.c.l.b16 %v3094
    %v3969 = vunpack.c.h.b16 %v3094
    %v3970 = vunpack.c.l.b16 %v3095
    %v3971 = vunpack.c.h.b16 %v3095
    %v3972 = vunpack.c.l.b16 %v3096
    %v3973 = vunpack.c.h.b16 %v3096
    %v3974 = vunpack.c.l.b16 %v3097
    %v3975 = vunpack.c.h.b16 %v3097
    %v3976 = vpack.c.b16 %v3406, %v3400
    %v3977 = vpack.c.b16 %v3407, %v3401
    %v3978 = vpack.c.b16 %v3408, %v3402
    %v3979 = vpack.c.b16 %v3409, %v3403
    %v3980 = vpack.c.b16 %v3410, %v3404
    %v3981 = vpack.c.b16 %v3411, %v3405
    %v3982 = vpack.c.b16 %v3418, %v3412
    %v3983 = vpack.c.b16 %v3419, %v3413
    %v3984 = vpack.c.b16 %v3420, %v3414
    %v3985 = vpack.c.b16 %v3421, %v3415
    %v3986 = vpack.c.b16 %v3422, %v3416
    %v3987 = vpack.c.b16 %v3423, %v3417
    %v3988 = vpack.c.b16 %v3430, %v3424
    %v3989 = vpack.c.b16 %v3431, %v3425
    %v3990 = vpack.c.b16 %v3432, %v3426
    %v3991 = vpack.c.b16 %v3433, %v3427
    %v3992 = vpack.c.b16 %v3434, %v3428
    %v3993 = vpack.c.b16 %v3435, %v3429
    %v3994 = vpack.c.b16 %v3442, %v3436
    %v3995 = vpack.c.b16 %v3443, %v3437
    %v3996 = vpack.c.b16 %v3444, %v3438
    %v3997 = vpack.c.b16 %v3445, %v3439
    %v3998 = vpack.c.b16 %v3446, %v3440
    %v3999 = vpack.c.b16 %v3447, %v3441
    %v4000 = vpack.c.b16 %v3454, %v3448
    %v4001 = vpack.c.b16 %v3455, %v3449
    %v4002 = vpack.c.b16 %v3456, %v3450
    %v4003 = vpack.c.b16 %v3457, %v3451
    %v4004 = vpack.c.b16 %v3458, %v3452
    %v4005 = vpack.c.b16 %v3459, %v3453
    %v4006 = vpack.c.b16 %v3466, %v3460
    %v4007 = vpack.c.b16 %v3467, %v3461
    %v4008 = vpack.c.b16 %v3468, %v3462
    %v4009 = vpack.c.b16 %v3469, %v3463
    %v4010 = vpack.c.b16 %v3470, %v3464
    %v4011 = vpack.c.b16 %v3471, %v3465
    %v4012 = vpack.c.b16 %v3478, %v3472
    %v4013 = vpack.c.b16 %v3479, %v3473
    %v4014 = vpack.c.b16 %v3480, %v3474
    %v4015 = vpack.c.b16 %v3481, %v3475
    %v4016 = vpack.c.b16 %v3482, %v3476
    %v4017 = vpack.c.b16 %v3483, %v3477
    %v4018 = vpack.c.b16 %v3490, %v3484
    %v4019 = vpack.c.b16 %v3491, %v3485
    %v4020 = vpack.c.b16 %v3492, %v3486
    %v4021 = vpack.c.b16 %v3493, %v3487
    %v4022 = vpack.c.b16 %v3494, %v3488
    %v4023 = vpack.c.b16 %v3495, %v3489
    %v4024 = vpack.c.b16 %v3502, %v3496
    %v4025 = vpack.c.b16 %v3503, %v3497
    %v4026 = vpack.c.b16 %v3504, %v3498
    %v4027 = vpack.c.b16 %v3505, %v3499
    %v4028 = vpack.c.b16 %v3506, %v3500
    %v4029 = vpack.c.b16 %v3507, %v3501
    %v4030 = vpack.c.b16 %v3514, %v3508
    %v4031 = vpack.c.b16 %v3515, %v3509
    %v4032 = vpack.c.b16 %v3516, %v3510
    %v4033 = vpack.c.b16 %v3517, %v3511
    %v4034 = vpack.c.b16 %v3518, %v3512
    %v4035 = vpack.c.b16 %v3519, %v3513
    %v4036 = vpack.c.b16 %v3526, %v3520
    %v4037 = vpack.c.b16 %v3527, %v3521
    %v4038 = vpack.c.b16 %v3528, %v3522
    %v4039 = vpack.c.b16 %v3529, %v3523
    %v4040 = vpack.c.b16 %v3530, %v3524
    %v4041 = vpack.c.b16 %v3531, %v3525
    %v4042 = vpack.c.b16 %v3538, %v3532
    %v4043 = vpack.c.b16 %v3539, %v3533
    %v4044 = vpack.c.b16 %v3540, %v3534
    %v4045 = vpack.c.b16 %v3541, %v3535
    %v4046 = vpack.c.b16 %v3542, %v3536
    %v4047 = vpack.c.b16 %v3543, %v3537
    %v4048 = vpack.c.b16 %v3550, %v3544
    %v4049 = vpack.c.b16 %v3551, %v3545
    %v4050 = vpack.c.b16 %v3552, %v3546
    %v4051 = vpack.c.b16 %v3553, %v3547
    %v4052 = vpack.c.b16 %v3554, %v3548
    %v4053 = vpack.c.b16 %v3555, %v3549
    %v4054 = vpack.c.b16 %v3562, %v3556
    %v4055 = vpack.c.b16 %v3563, %v3557
    %v4056 = vpack.c.b16 %v3564, %v3558
    %v4057 = vpack.c.b16 %v3565, %v3559
    %v4058 = vpack.c.b16 %v3566, %v3560
    %v4059 = vpack.c.b16 %v3567, %v3561
    %v4060 = vpack.c.b16 %v3574, %v3568
    %v4061 = vpack.c.b16 %v3575, %v3569
    %v4062 = vpack.c.b16 %v3576, %v3570
    %v4063 = vpack.c.b16 %v3577, %v3571
    %v4064 = vpack.c.b16 %v3578, %v3572
    %v4065 = vpack.c.b16 %v3579, %v3573
    %v4066 = vpack.c.b16 %v3586, %v3580
    %v4067 = vpack.c.b16 %v3587, %v3581
    %v4068 = vpack.c.b16 %v3588, %v3582
    %v4069 = vpack.c.b16 %v3589, %v3583
    %v4070 = vpack.c.b16 %v3590, %v3584
    %v4071 = vpack.c.b16 %v3591, %v3585
    %v4072 = vpack.c.b16 %v3598, %v3592
    %v4073 = vpack.c.b16 %v3599, %v3593
    %v4074 = vpack.c.b16 %v3600, %v3594
    %v4075 = vpack.c.b16 %v3601, %v3595
    %v4076 = vpack.c.b16 %v3602, %v3596
    %v4077 = vpack.c.b16 %v3603, %v3597
    %v4078 = vpack.c.b16 %v3610, %v3604
    %v4079 = vpack.c.b16 %v3611, %v3605
    %v4080 = vpack.c.b16 %v3612, %v3606
    %v4081 = vpack.c.b16 %v3613, %v3607
    %v4082 = vpack.c.b16 %v3614, %v3608
    %v4083 = vpack.c.b16 %v3615, %v3609
    %v4084 = vpack.c.b16 %v3622, %v3616
    %v4085 = vpack.c.b16 %v3623, %v3617
    %v4086 = vpack.c.b16 %v3624, %v3618
    %v4087 = vpack.c.b16 %v3625, %v3619
    %v4088 = vpack.c.b16 %v3626, %v3620
    %v4089 = vpack.c.b16 %v3627, %v3621
    %v4090 = vpack.c.b16 %v3634, %v3628
    %v4091 = vpack.c.b16 %v3635, %v3629
    %v4092 = vpack.c.b16 %v3636, %v3630
    %v4093 = vpack.c.b16 %v3637, %v3631
    %v4094 = vpack.c.b16 %v3638, %v3632
    %v4095 = vpack.c.b16 %v3639, %v3633
    %v4096 = vpack.c.b16 %v3646, %v3640
    %v4097 = vpack.c.b16 %v3647, %v3641
    %v4098 = vpack.c.b16 %v3648, %v3642
    %v4099 = vpack.c.b16 %v3649, %v3643
    %v4100 = vpack.c.b16 %v3650, %v3644
    %v4101 = vpack.c.b16 %v3651, %v3645
    %v4102 = vpack.c.b16 %v3658, %v3652
    %v4103 = vpack.c.b16 %v3659, %v3653
    %v4104 = vpack.c.b16 %v3660, %v3654
    %v4105 = vpack.c.b16 %v3661, %v3655
    %v4106 = vpack.c.b16 %v3662, %v3656
    %v4107 = vpack.c.b16 %v3663, %v3657
    %v4108 = vpack.c.b16 %v3670, %v3664
    %v4109 = vpack.c.b16 %v3671, %v3665
    %v4110 = vpack.c.b16 %v3672, %v3666
    %v4111 = vpack.c.b16 %v3673, %v3667
    %v4112 = vpack.c.b16 %v3674, %v3668
    %v4113 = vpack.c.b16 %v3675, %v3669
    %v4114 = vpack.c.b16 %v3682, %v3676
    %v4115 = vpack.c.b16 %v3683, %v3677
    %v4116 = vpack.c.b16 %v3684, %v3678
    %v4117 = vpack.c.b16 %v3685, %v3679
    %v4118 = vpack.c.b16 %v3686, %v3680
    %v4119 = vpack.c.b16 %v3687, %v3681
    %v4120 = vpack.c.b16 %v3694, %v3688
    %v4121 = vpack.c.b16 %v3695, %v3689
    %v4122 = vpack.c.b16 %v3696, %v3690
    %v4123 = vpack.c.b16 %v3697, %v3691
    %v4124 = vpack.c.b16 %v3698, %v3692
    %v4125 = vpack.c.b16 %v3699, %v3693
    %v4126 = vpack.c.b16 %v3706, %v3700
    %v4127 = vpack.c.b16 %v3707, %v3701
    %v4128 = vpack.c.b16 %v3708, %v3702
    %v4129 = vpack.c.b16 %v3709, %v3703
    %v4130 = vpack.c.b16 %v3710, %v3704
    %v4131 = vpack.c.b16 %v3711, %v3705
    %v4132 = vpack.c.b16 %v3718, %v3712
    %v4133 = vpack.c.b16 %v3719, %v3713
    %v4134 = vpack.c.b16 %v3720, %v3714
    %v4135 = vpack.c.b16 %v3721, %v3715
    %v4136 = vpack.c.b16 %v3722, %v3716
    %v4137 = vpack.c.b16 %v3723, %v3717
    %v4138 = vpack.c.b16 %v3730, %v3724
    %v4139 = vpack.c.b16 %v3731, %v3725
    %v4140 = vpack.c.b16 %v3732, %v3726
    %v4141 = vpack.c.b16 %v3733, %v3727
    %v4142 = vpack.c.b16 %v3734, %v3728
    %v4143 = vpack.c.b16 %v3735, %v3729
    %v4144 = vpack.c.b16 %v3742, %v3736
    %v4145 = vpack.c.b16 %v3743, %v3737
    %v4146 = vpack.c.b16 %v3744, %v3738
    %v4147 = vpack.c.b16 %v3745, %v3739
    %v4148 = vpack.c.b16 %v3746, %v3740
    %v4149 = vpack.c.b16 %v3747, %v3741
    %v4150 = vpack.c.b16 %v3754, %v3748
    %v4151 = vpack.c.b16 %v3755, %v3749
    %v4152 = vpack.c.b16 %v3756, %v3750
    %v4153 = vpack.c.b16 %v3757, %v3751
    %v4154 = vpack.c.b16 %v3758, %v3752
    %v4155 = vpack.c.b16 %v3759, %v3753
    %v4156 = vpack.c.b16 %v3766, %v3760
    %v4157 = vpack.c.b16 %v3767, %v3761
    %v4158 = vpack.c.b16 %v3768, %v3762
    %v4159 = vpack.c.b16 %v3769, %v3763
    %v4160 = vpack.c.b16 %v3770, %v3764
    %v4161 = vpack.c.b16 %v3771, %v3765
    %v4162 = vpack.c.b16 %v3778, %v3772
    %v4163 = vpack.c.b16 %v3779, %v3773
    %v4164 = vpack.c.b16 %v3780, %v3774
    %v4165 = vpack.c.b16 %v3781, %v3775
    %v4166 = vpack.c.b16 %v3782, %v3776
    %v4167 = vpack.c.b16 %v3783, %v3777
    %v4168 = vpack.c.b16 %v3790, %v3784
    %v4169 = vpack.c.b16 %v3791, %v3785
    %v4170 = vpack.c.b16 %v3792, %v3786
    %v4171 = vpack.c.b16 %v3793, %v3787
    %v4172 = vpack.c.b16 %v3794, %v3788
    %v4173 = vpack.c.b16 %v3795, %v3789
    %v4174 = vpack.c.b16 %v3802, %v3796
    %v4175 = vpack.c.b16 %v3803, %v3797
    %v4176 = vpack.c.b16 %v3804, %v3798
    %v4177 = vpack.c.b16 %v3805, %v3799
    %v4178 = vpack.c.b16 %v3806, %v3800
    %v4179 = vpack.c.b16 %v3807, %v3801
    %v4180 = vpack.c.b16 %v3814, %v3808
    %v4181 = vpack.c.b16 %v3815, %v3809
    %v4182 = vpack.c.b16 %v3816, %v3810
    %v4183 = vpack.c.b16 %v3817, %v3811
    %v4184 = vpack.c.b16 %v3818, %v3812
    %v4185 = vpack.c.b16 %v3819, %v3813
    %v4186 = vpack.c.b16 %v3826, %v3820
    %v4187 = vpack.c.b16 %v3827, %v3821
    %v4188 = vpack.c.b16 %v3828, %v3822
    %v4189 = vpack.c.b16 %v3829, %v3823
    %v4190 = vpack.c.b16 %v3830, %v3824
    %v4191 = vpack.c.b16 %v3831, %v3825
    %v4192 = vpack.c.b16 %v3838, %v3832
    %v4193 = vpack.c.b16 %v3839, %v3833
    %v4194 = vpack.c.b16 %v3840, %v3834
    %v4195 = vpack.c.b16 %v3841, %v3835
    %v4196 = vpack.c.b16 %v3842, %v3836
    %v4197 = vpack.c.b16 %v3843, %v3837
    %v4198 = vpack.c.b16 %v3850, %v3844
    %v4199 = vpack.c.b16 %v3851, %v3845
    %v4200 = vpack.c.b16 %v3852, %v3846
    %v4201 = vpack.c.b16 %v3853, %v3847
    %v4202 = vpack.c.b16 %v3854, %v3848
    %v4203 = vpack.c.b16 %v3855, %v3849
    %v4204 = vpack.c.b16 %v3862, %v3856
    %v4205 = vpack.c.b16 %v3863, %v3857
    %v4206 = vpack.c.b16 %v3864, %v3858
    %v4207 = vpack.c.b16 %v3865, %v3859
    %v4208 = vpack.c.b16 %v3866, %v3860
    %v4209 = vpack.c.b16 %v3867, %v3861
    %v4210 = vpack.c.b16 %v3874, %v3868
    %v4211 = vpack.c.b16 %v3875, %v3869
    %v4212 = vpack.c.b16 %v3876, %v3870
    %v4213 = vpack.c.b16 %v3877, %v3871
    %v4214 = vpack.c.b16 %v3878, %v3872
    %v4215 = vpack.c.b16 %v3879, %v3873
    %v4216 = vpack.c.b16 %v3886, %v3880
    %v4217 = vpack.c.b16 %v3887, %v3881
    %v4218 = vpack.c.b16 %v3888, %v3882
    %v4219 = vpack.c.b16 %v3889, %v3883
    %v4220 = vpack.c.b16 %v3890, %v3884
    %v4221 = vpack.c.b16 %v3891, %v3885
    %v4222 = vpack.c.b16 %v3898, %v3892
    %v4223 = vpack.c.b16 %v3899, %v3893
    %v4224 = vpack.c.b16 %v3900, %v3894
    %v4225 = vpack.c.b16 %v3901, %v3895
    %v4226 = vpack.c.b16 %v3902, %v3896
    %v4227 = vpack.c.b16 %v3903, %v3897
    %v4228 = vpack.c.b16 %v3910, %v3904
    %v4229 = vpack.c.b16 %v3911, %v3905
    %v4230 = vpack.c.b16 %v3912, %v3906
    %v4231 = vpack.c.b16 %v3913, %v3907
    %v4232 = vpack.c.b16 %v3914, %v3908
    %v4233 = vpack.c.b16 %v3915, %v3909
    %v4234 = vpack.c.b16 %v3922, %v3916
    %v4235 = vpack.c.b16 %v3923, %v3917
    %v4236 = vpack.c.b16 %v3924, %v3918
    %v4237 = vpack.c.b16 %v3925, %v3919
    %v4238 = vpack.c.b16 %v3926, %v3920
    %v4239 = vpack.c.b16 %v3927, %v3921
    %v4240 = vpack.c.b16 %v3934, %v3928
    %v4241 = vpack.c.b16 %v3935, %v3929
    %v4242 = vpack.c.b16 %v3936, %v3930
    %v4243 = vpack.c.b16 %v3937, %v3931
    %v4244 = vpack.c.b16 %v3938, %v3932
    %v4245 = vpack.c.b16 %v3939, %v3933
    %v4246 = vpack.c.b16 %v3946, %v3940
    %v4247 = vpack.c.b16 %v3947, %v3941
    %v4248 = vpack.c.b16 %v3948, %v3942
    %v4249 = vpack.c.b16 %v3949, %v3943
    %v4250 = vpack.c.b16 %v3950, %v3944
    %v4251 = vpack.c.b16 %v3951, %v3945
    %v4252 = vpack.c.b16 %v3958, %v3952
    %v4253 = vpack.c.b16 %v3959, %v3953
    %v4254 = vpack.c.b16 %v3960, %v3954
    %v4255 = vpack.c.b16 %v3961, %v3955
    %v4256 = vpack.c.b16 %v3962, %v3956
    %v4257 = vpack.c.b16 %v3963, %v3957
    %v4258 = vpack.c.b16 %v3970, %v3964
    %v4259 = vpack.c.b16 %v3971, %v3965
    %v4260 = vpack.c.b16 %v3972, %v3966
    %v4261 = vpack.c.b16 %v3973, %v3967
    %v4262 = vpack.c.b16 %v3974, %v3968
    %v4263 = vpack.c.b16 %v3975, %v3969
    %4552 = vmatpush.bf16.msra.mxu0 %v4018
    %4553 = vmatpush.bf16.msra.mxu0 %v4012
    %4554 = vmatpush.bf16.msra.mxu0 %v4006
    %4555 = vmatpush.bf16.msra.mxu0 %v4000
    %4556 = vmatpush.bf16.msra.mxu0 %v3994
    %4557 = vmatpush.bf16.msra.mxu0 %v3988
    %4558 = vmatpush.bf16.msra.mxu0 %v3982
    %4559 = vmatpush.bf16.msra.mxu0 %v3976
    %4560 = vmatmul.bf16.gmra.mxu0 %v2804
    %v4561 = vpop.f32.mrf.mxu0
    %v4562 = vadd.f32 %v3100, %v4561
    %v4563 = vpop.f32.mrf.mxu0
    %v4564 = vadd.f32 %v3100, %v4563
    %4565 = vdwg.mxu0
    %4566 = vmatpush.bf16.msra.mxu0 %v4066
    %4567 = vmatpush.bf16.msra.mxu0 %v4060
    %4568 = vmatpush.bf16.msra.mxu0 %v4054
    %4569 = vmatpush.bf16.msra.mxu0 %v4048
    %4570 = vmatpush.bf16.msra.mxu0 %v4042
    %4571 = vmatpush.bf16.msra.mxu0 %v4036
    %4572 = vmatpush.bf16.msra.mxu0 %v4030
    %4573 = vmatpush.bf16.msra.mxu0 %v4024
    %4574 = vmatmul.bf16.gmra.mxu0 %v2805
    %v4575 = vpop.f32.mrf.mxu0
    %v4576 = vadd.f32 %v4562, %v4575
    %v4577 = vpop.f32.mrf.mxu0
    %v4578 = vadd.f32 %v4564, %v4577
    %4579 = vdwg.mxu0
    %4580 = vmatpush.bf16.msra.mxu0 %v4114
    %4581 = vmatpush.bf16.msra.mxu0 %v4108
    %4582 = vmatpush.bf16.msra.mxu0 %v4102
    %4583 = vmatpush.bf16.msra.mxu0 %v4096
    %4584 = vmatpush.bf16.msra.mxu0 %v4090
    %4585 = vmatpush.bf16.msra.mxu0 %v4084
    %4586 = vmatpush.bf16.msra.mxu0 %v4078
    %4587 = vmatpush.bf16.msra.mxu0 %v4072
    %4588 = vmatmul.bf16.gmra.mxu0 %v2806
    %v4589 = vpop.f32.mrf.mxu0
    %v4590 = vadd.f32 %v4576, %v4589
    %v4591 = vpop.f32.mrf.mxu0
    %v4592 = vadd.f32 %v4578, %v4591
    %4593 = vdwg.mxu0
    %4594 = vmatpush.bf16.msra.mxu0 %v4162
    %4595 = vmatpush.bf16.msra.mxu0 %v4156
    %4596 = vmatpush.bf16.msra.mxu0 %v4150
    %4597 = vmatpush.bf16.msra.mxu0 %v4144
    %4598 = vmatpush.bf16.msra.mxu0 %v4138
    %4599 = vmatpush.bf16.msra.mxu0 %v4132
    %4600 = vmatpush.bf16.msra.mxu0 %v4126
    %4601 = vmatpush.bf16.msra.mxu0 %v4120
    %4602 = vmatmul.bf16.gmra.mxu0 %v2807
    %v4603 = vpop.f32.mrf.mxu0
    %v4604 = vadd.f32 %v4590, %v4603
    %v4605 = vpop.f32.mrf.mxu0
    %v4606 = vadd.f32 %v4592, %v4605
    %4607 = vdwg.mxu0
    %4608 = vmatpush.bf16.msra.mxu0 %v4210
    %4609 = vmatpush.bf16.msra.mxu0 %v4204
    %4610 = vmatpush.bf16.msra.mxu0 %v4198
    %4611 = vmatpush.bf16.msra.mxu0 %v4192
    %4612 = vmatpush.bf16.msra.mxu0 %v4186
    %4613 = vmatpush.bf16.msra.mxu0 %v4180
    %4614 = vmatpush.bf16.msra.mxu0 %v4174
    %4615 = vmatpush.bf16.msra.mxu0 %v4168
    %4616 = vmatmul.bf16.gmra.mxu0 %v2808
    %v4617 = vpop.f32.mrf.mxu0
    %v4618 = vadd.f32 %v4604, %v4617
    %v4619 = vpop.f32.mrf.mxu0
    %v4620 = vadd.f32 %v4606, %v4619
    %4621 = vdwg.mxu0
    %4622 = vmatpush.bf16.msra.mxu0 %v4258
    %4623 = vmatpush.bf16.msra.mxu0 %v4252
    %4624 = vmatpush.bf16.msra.mxu0 %v4246
    %4625 = vmatpush.bf16.msra.mxu0 %v4240
    %4626 = vmatpush.bf16.msra.mxu0 %v4234
    %4627 = vmatpush.bf16.msra.mxu0 %v4228
    %4628 = vmatpush.bf16.msra.mxu0 %v4222
    %4629 = vmatpush.bf16.msra.mxu0 %v4216
    %4630 = vmatmul.bf16.gmra.mxu0 %v2809
    %v4631 = vpop.f32.mrf.mxu0
    %v4632 = vadd.f32 %v4618, %v4631
    %v4633 = vpop.f32.mrf.mxu0
    %v4634 = vadd.f32 %v4620, %v4633
    %4635 = vdwg.mxu0
    %4636 = vmatpush.bf16.msra.mxu0 %v4019
    %4637 = vmatpush.bf16.msra.mxu0 %v4013
    %4638 = vmatpush.bf16.msra.mxu0 %v4007
    %4639 = vmatpush.bf16.msra.mxu0 %v4001
    %4640 = vmatpush.bf16.msra.mxu0 %v3995
    %4641 = vmatpush.bf16.msra.mxu0 %v3989
    %4642 = vmatpush.bf16.msra.mxu0 %v3983
    %4643 = vmatpush.bf16.msra.mxu0 %v3977
    %4644 = vmatmul.bf16.gmra.mxu0 %v2804
    %v4645 = vpop.f32.mrf.mxu0
    %v4646 = vadd.f32 %v3101, %v4645
    %v4647 = vpop.f32.mrf.mxu0
    %v4648 = vadd.f32 %v3101, %v4647
    %4649 = vdwg.mxu0
    %4650 = vmatpush.bf16.msra.mxu0 %v4067
    %4651 = vmatpush.bf16.msra.mxu0 %v4061
    %4652 = vmatpush.bf16.msra.mxu0 %v4055
    %4653 = vmatpush.bf16.msra.mxu0 %v4049
    %4654 = vmatpush.bf16.msra.mxu0 %v4043
    %4655 = vmatpush.bf16.msra.mxu0 %v4037
    %4656 = vmatpush.bf16.msra.mxu0 %v4031
    %4657 = vmatpush.bf16.msra.mxu0 %v4025
    %4658 = vmatmul.bf16.gmra.mxu0 %v2805
    %v4659 = vpop.f32.mrf.mxu0
    %v4660 = vadd.f32 %v4646, %v4659
    %v4661 = vpop.f32.mrf.mxu0
    %v4662 = vadd.f32 %v4648, %v4661
    %4663 = vdwg.mxu0
    %4664 = vmatpush.bf16.msra.mxu0 %v4115
    %4665 = vmatpush.bf16.msra.mxu0 %v4109
    %4666 = vmatpush.bf16.msra.mxu0 %v4103
    %4667 = vmatpush.bf16.msra.mxu0 %v4097
    %4668 = vmatpush.bf16.msra.mxu0 %v4091
    %4669 = vmatpush.bf16.msra.mxu0 %v4085
    %4670 = vmatpush.bf16.msra.mxu0 %v4079
    %4671 = vmatpush.bf16.msra.mxu0 %v4073
    %4672 = vmatmul.bf16.gmra.mxu0 %v2806
    %v4673 = vpop.f32.mrf.mxu0
    %v4674 = vadd.f32 %v4660, %v4673
    %v4675 = vpop.f32.mrf.mxu0
    %v4676 = vadd.f32 %v4662, %v4675
    %4677 = vdwg.mxu0
    %4678 = vmatpush.bf16.msra.mxu0 %v4163
    %4679 = vmatpush.bf16.msra.mxu0 %v4157
    %4680 = vmatpush.bf16.msra.mxu0 %v4151
    %4681 = vmatpush.bf16.msra.mxu0 %v4145
    %4682 = vmatpush.bf16.msra.mxu0 %v4139
    %4683 = vmatpush.bf16.msra.mxu0 %v4133
    %4684 = vmatpush.bf16.msra.mxu0 %v4127
    %4685 = vmatpush.bf16.msra.mxu0 %v4121
    %4686 = vmatmul.bf16.gmra.mxu0 %v2807
    %v4687 = vpop.f32.mrf.mxu0
    %v4688 = vadd.f32 %v4674, %v4687
    %v4689 = vpop.f32.mrf.mxu0
    %v4690 = vadd.f32 %v4676, %v4689
    %4691 = vdwg.mxu0
    %4692 = vmatpush.bf16.msra.mxu0 %v4211
    %4693 = vmatpush.bf16.msra.mxu0 %v4205
    %4694 = vmatpush.bf16.msra.mxu0 %v4199
    %4695 = vmatpush.bf16.msra.mxu0 %v4193
    %4696 = vmatpush.bf16.msra.mxu0 %v4187
    %4697 = vmatpush.bf16.msra.mxu0 %v4181
    %4698 = vmatpush.bf16.msra.mxu0 %v4175
    %4699 = vmatpush.bf16.msra.mxu0 %v4169
    %4700 = vmatmul.bf16.gmra.mxu0 %v2808
    %v4701 = vpop.f32.mrf.mxu0
    %v4702 = vadd.f32 %v4688, %v4701
    %v4703 = vpop.f32.mrf.mxu0
    %v4704 = vadd.f32 %v4690, %v4703
    %4705 = vdwg.mxu0
    %4706 = vmatpush.bf16.msra.mxu0 %v4259
    %4707 = vmatpush.bf16.msra.mxu0 %v4253
    %4708 = vmatpush.bf16.msra.mxu0 %v4247
    %4709 = vmatpush.bf16.msra.mxu0 %v4241
    %4710 = vmatpush.bf16.msra.mxu0 %v4235
    %4711 = vmatpush.bf16.msra.mxu0 %v4229
    %4712 = vmatpush.bf16.msra.mxu0 %v4223
    %4713 = vmatpush.bf16.msra.mxu0 %v4217
    %4714 = vmatmul.bf16.gmra.mxu0 %v2809
    %v4715 = vpop.f32.mrf.mxu0
    %v4716 = vadd.f32 %v4702, %v4715
    %v4717 = vpop.f32.mrf.mxu0
    %v4718 = vadd.f32 %v4704, %v4717
    %4719 = vdwg.mxu0
    %4720 = vmatpush.bf16.msra.mxu0 %v4020
    %4721 = vmatpush.bf16.msra.mxu0 %v4014
    %4722 = vmatpush.bf16.msra.mxu0 %v4008
    %4723 = vmatpush.bf16.msra.mxu0 %v4002
    %4724 = vmatpush.bf16.msra.mxu0 %v3996
    %4725 = vmatpush.bf16.msra.mxu0 %v3990
    %4726 = vmatpush.bf16.msra.mxu0 %v3984
    %4727 = vmatpush.bf16.msra.mxu0 %v3978
    %4728 = vmatmul.bf16.gmra.mxu0 %v2804
    %v4729 = vpop.f32.mrf.mxu0
    %v4730 = vadd.f32 %v3102, %v4729
    %v4731 = vpop.f32.mrf.mxu0
    %v4732 = vadd.f32 %v3102, %v4731
    %4733 = vdwg.mxu0
    %4734 = vmatpush.bf16.msra.mxu0 %v4068
    %4735 = vmatpush.bf16.msra.mxu0 %v4062
    %4736 = vmatpush.bf16.msra.mxu0 %v4056
    %4737 = vmatpush.bf16.msra.mxu0 %v4050
    %4738 = vmatpush.bf16.msra.mxu0 %v4044
    %4739 = vmatpush.bf16.msra.mxu0 %v4038
    %4740 = vmatpush.bf16.msra.mxu0 %v4032
    %4741 = vmatpush.bf16.msra.mxu0 %v4026
    %4742 = vmatmul.bf16.gmra.mxu0 %v2805
    %v4743 = vpop.f32.mrf.mxu0
    %v4744 = vadd.f32 %v4730, %v4743
    %v4745 = vpop.f32.mrf.mxu0
    %v4746 = vadd.f32 %v4732, %v4745
    %4747 = vdwg.mxu0
    %4748 = vmatpush.bf16.msra.mxu0 %v4116
    %4749 = vmatpush.bf16.msra.mxu0 %v4110
    %4750 = vmatpush.bf16.msra.mxu0 %v4104
    %4751 = vmatpush.bf16.msra.mxu0 %v4098
    %4752 = vmatpush.bf16.msra.mxu0 %v4092
    %4753 = vmatpush.bf16.msra.mxu0 %v4086
    %4754 = vmatpush.bf16.msra.mxu0 %v4080
    %4755 = vmatpush.bf16.msra.mxu0 %v4074
    %4756 = vmatmul.bf16.gmra.mxu0 %v2806
    %v4757 = vpop.f32.mrf.mxu0
    %v4758 = vadd.f32 %v4744, %v4757
    %v4759 = vpop.f32.mrf.mxu0
    %v4760 = vadd.f32 %v4746, %v4759
    %4761 = vdwg.mxu0
    %4762 = vmatpush.bf16.msra.mxu0 %v4164
    %4763 = vmatpush.bf16.msra.mxu0 %v4158
    %4764 = vmatpush.bf16.msra.mxu0 %v4152
    %4765 = vmatpush.bf16.msra.mxu0 %v4146
    %4766 = vmatpush.bf16.msra.mxu0 %v4140
    %4767 = vmatpush.bf16.msra.mxu0 %v4134
    %4768 = vmatpush.bf16.msra.mxu0 %v4128
    %4769 = vmatpush.bf16.msra.mxu0 %v4122
    %4770 = vmatmul.bf16.gmra.mxu0 %v2807
    %v4771 = vpop.f32.mrf.mxu0
    %v4772 = vadd.f32 %v4758, %v4771
    %v4773 = vpop.f32.mrf.mxu0
    %v4774 = vadd.f32 %v4760, %v4773
    %4775 = vdwg.mxu0
    %4776 = vmatpush.bf16.msra.mxu0 %v4212
    %4777 = vmatpush.bf16.msra.mxu0 %v4206
    %4778 = vmatpush.bf16.msra.mxu0 %v4200
    %4779 = vmatpush.bf16.msra.mxu0 %v4194
    %4780 = vmatpush.bf16.msra.mxu0 %v4188
    %4781 = vmatpush.bf16.msra.mxu0 %v4182
    %4782 = vmatpush.bf16.msra.mxu0 %v4176
    %4783 = vmatpush.bf16.msra.mxu0 %v4170
    %4784 = vmatmul.bf16.gmra.mxu0 %v2808
    %v4785 = vpop.f32.mrf.mxu0
    %v4786 = vadd.f32 %v4772, %v4785
    %v4787 = vpop.f32.mrf.mxu0
    %v4788 = vadd.f32 %v4774, %v4787
    %4789 = vdwg.mxu0
    %4790 = vmatpush.bf16.msra.mxu0 %v4260
    %4791 = vmatpush.bf16.msra.mxu0 %v4254
    %4792 = vmatpush.bf16.msra.mxu0 %v4248
    %4793 = vmatpush.bf16.msra.mxu0 %v4242
    %4794 = vmatpush.bf16.msra.mxu0 %v4236
    %4795 = vmatpush.bf16.msra.mxu0 %v4230
    %4796 = vmatpush.bf16.msra.mxu0 %v4224
    %4797 = vmatpush.bf16.msra.mxu0 %v4218
    %4798 = vmatmul.bf16.gmra.mxu0 %v2809
    %v4799 = vpop.f32.mrf.mxu0
    %v4800 = vadd.f32 %v4786, %v4799
    %v4801 = vpop.f32.mrf.mxu0
    %v4802 = vadd.f32 %v4788, %v4801
    %4803 = vdwg.mxu0
    %4804 = vmatpush.bf16.msra.mxu0 %v4021
    %4805 = vmatpush.bf16.msra.mxu0 %v4015
    %4806 = vmatpush.bf16.msra.mxu0 %v4009
    %4807 = vmatpush.bf16.msra.mxu0 %v4003
    %4808 = vmatpush.bf16.msra.mxu0 %v3997
    %4809 = vmatpush.bf16.msra.mxu0 %v3991
    %4810 = vmatpush.bf16.msra.mxu0 %v3985
    %4811 = vmatpush.bf16.msra.mxu0 %v3979
    %4812 = vmatmul.bf16.gmra.mxu0 %v2804
    %v4813 = vpop.f32.mrf.mxu0
    %v4814 = vadd.f32 %v3103, %v4813
    %v4815 = vpop.f32.mrf.mxu0
    %v4816 = vadd.f32 %v3103, %v4815
    %4817 = vdwg.mxu0
    %4818 = vmatpush.bf16.msra.mxu0 %v4069
    %4819 = vmatpush.bf16.msra.mxu0 %v4063
    %4820 = vmatpush.bf16.msra.mxu0 %v4057
    %4821 = vmatpush.bf16.msra.mxu0 %v4051
    %4822 = vmatpush.bf16.msra.mxu0 %v4045
    %4823 = vmatpush.bf16.msra.mxu0 %v4039
    %4824 = vmatpush.bf16.msra.mxu0 %v4033
    %4825 = vmatpush.bf16.msra.mxu0 %v4027
    %4826 = vmatmul.bf16.gmra.mxu0 %v2805
    %v4827 = vpop.f32.mrf.mxu0
    %v4828 = vadd.f32 %v4814, %v4827
    %v4829 = vpop.f32.mrf.mxu0
    %v4830 = vadd.f32 %v4816, %v4829
    %4831 = vdwg.mxu0
    %4832 = vmatpush.bf16.msra.mxu0 %v4117
    %4833 = vmatpush.bf16.msra.mxu0 %v4111
    %4834 = vmatpush.bf16.msra.mxu0 %v4105
    %4835 = vmatpush.bf16.msra.mxu0 %v4099
    %4836 = vmatpush.bf16.msra.mxu0 %v4093
    %4837 = vmatpush.bf16.msra.mxu0 %v4087
    %4838 = vmatpush.bf16.msra.mxu0 %v4081
    %4839 = vmatpush.bf16.msra.mxu0 %v4075
    %4840 = vmatmul.bf16.gmra.mxu0 %v2806
    %v4841 = vpop.f32.mrf.mxu0
    %v4842 = vadd.f32 %v4828, %v4841
    %v4843 = vpop.f32.mrf.mxu0
    %v4844 = vadd.f32 %v4830, %v4843
    %4845 = vdwg.mxu0
    %4846 = vmatpush.bf16.msra.mxu0 %v4165
    %4847 = vmatpush.bf16.msra.mxu0 %v4159
    %4848 = vmatpush.bf16.msra.mxu0 %v4153
    %4849 = vmatpush.bf16.msra.mxu0 %v4147
    %4850 = vmatpush.bf16.msra.mxu0 %v4141
    %4851 = vmatpush.bf16.msra.mxu0 %v4135
    %4852 = vmatpush.bf16.msra.mxu0 %v4129
    %4853 = vmatpush.bf16.msra.mxu0 %v4123
    %4854 = vmatmul.bf16.gmra.mxu0 %v2807
    %v4855 = vpop.f32.mrf.mxu0
    %v4856 = vadd.f32 %v4842, %v4855
    %v4857 = vpop.f32.mrf.mxu0
    %v4858 = vadd.f32 %v4844, %v4857
    %4859 = vdwg.mxu0
    %4860 = vmatpush.bf16.msra.mxu0 %v4213
    %4861 = vmatpush.bf16.msra.mxu0 %v4207
    %4862 = vmatpush.bf16.msra.mxu0 %v4201
    %4863 = vmatpush.bf16.msra.mxu0 %v4195
    %4864 = vmatpush.bf16.msra.mxu0 %v4189
    %4865 = vmatpush.bf16.msra.mxu0 %v4183
    %4866 = vmatpush.bf16.msra.mxu0 %v4177
    %4867 = vmatpush.bf16.msra.mxu0 %v4171
    %4868 = vmatmul.bf16.gmra.mxu0 %v2808
    %v4869 = vpop.f32.mrf.mxu0
    %v4870 = vadd.f32 %v4856, %v4869
    %v4871 = vpop.f32.mrf.mxu0
    %v4872 = vadd.f32 %v4858, %v4871
    %4873 = vdwg.mxu0
    %4874 = vmatpush.bf16.msra.mxu0 %v4261
    %4875 = vmatpush.bf16.msra.mxu0 %v4255
    %4876 = vmatpush.bf16.msra.mxu0 %v4249
    %4877 = vmatpush.bf16.msra.mxu0 %v4243
    %4878 = vmatpush.bf16.msra.mxu0 %v4237
    %4879 = vmatpush.bf16.msra.mxu0 %v4231
    %4880 = vmatpush.bf16.msra.mxu0 %v4225
    %4881 = vmatpush.bf16.msra.mxu0 %v4219
    %4882 = vmatmul.bf16.gmra.mxu0 %v2809
    %v4883 = vpop.f32.mrf.mxu0
    %v4884 = vadd.f32 %v4870, %v4883
    %v4885 = vpop.f32.mrf.mxu0
    %v4886 = vadd.f32 %v4872, %v4885
    %4887 = vdwg.mxu0
    %4888 = vmatpush.bf16.msra.mxu0 %v4022
    %4889 = vmatpush.bf16.msra.mxu0 %v4016
    %4890 = vmatpush.bf16.msra.mxu0 %v4010
    %4891 = vmatpush.bf16.msra.mxu0 %v4004
    %4892 = vmatpush.bf16.msra.mxu0 %v3998
    %4893 = vmatpush.bf16.msra.mxu0 %v3992
    %4894 = vmatpush.bf16.msra.mxu0 %v3986
    %4895 = vmatpush.bf16.msra.mxu0 %v3980
    %4896 = vmatmul.bf16.gmra.mxu0 %v2804
    %v4897 = vpop.f32.mrf.mxu0
    %v4898 = vadd.f32 %v3104, %v4897
    %v4899 = vpop.f32.mrf.mxu0
    %v4900 = vadd.f32 %v3104, %v4899
    %4901 = vdwg.mxu0
    %4902 = vmatpush.bf16.msra.mxu0 %v4070
    %4903 = vmatpush.bf16.msra.mxu0 %v4064
    %4904 = vmatpush.bf16.msra.mxu0 %v4058
    %4905 = vmatpush.bf16.msra.mxu0 %v4052
    %4906 = vmatpush.bf16.msra.mxu0 %v4046
    %4907 = vmatpush.bf16.msra.mxu0 %v4040
    %4908 = vmatpush.bf16.msra.mxu0 %v4034
    %4909 = vmatpush.bf16.msra.mxu0 %v4028
    %4910 = vmatmul.bf16.gmra.mxu0 %v2805
    %v4911 = vpop.f32.mrf.mxu0
    %v4912 = vadd.f32 %v4898, %v4911
    %v4913 = vpop.f32.mrf.mxu0
    %v4914 = vadd.f32 %v4900, %v4913
    %4915 = vdwg.mxu0
    %4916 = vmatpush.bf16.msra.mxu0 %v4118
    %4917 = vmatpush.bf16.msra.mxu0 %v4112
    %4918 = vmatpush.bf16.msra.mxu0 %v4106
    %4919 = vmatpush.bf16.msra.mxu0 %v4100
    %4920 = vmatpush.bf16.msra.mxu0 %v4094
    %4921 = vmatpush.bf16.msra.mxu0 %v4088
    %4922 = vmatpush.bf16.msra.mxu0 %v4082
    %4923 = vmatpush.bf16.msra.mxu0 %v4076
    %4924 = vmatmul.bf16.gmra.mxu0 %v2806
    %v4925 = vpop.f32.mrf.mxu0
    %v4926 = vadd.f32 %v4912, %v4925
    %v4927 = vpop.f32.mrf.mxu0
    %v4928 = vadd.f32 %v4914, %v4927
    %4929 = vdwg.mxu0
    %4930 = vmatpush.bf16.msra.mxu0 %v4166
    %4931 = vmatpush.bf16.msra.mxu0 %v4160
    %4932 = vmatpush.bf16.msra.mxu0 %v4154
    %4933 = vmatpush.bf16.msra.mxu0 %v4148
    %4934 = vmatpush.bf16.msra.mxu0 %v4142
    %4935 = vmatpush.bf16.msra.mxu0 %v4136
    %4936 = vmatpush.bf16.msra.mxu0 %v4130
    %4937 = vmatpush.bf16.msra.mxu0 %v4124
    %4938 = vmatmul.bf16.gmra.mxu0 %v2807
    %v4939 = vpop.f32.mrf.mxu0
    %v4940 = vadd.f32 %v4926, %v4939
    %v4941 = vpop.f32.mrf.mxu0
    %v4942 = vadd.f32 %v4928, %v4941
    %4943 = vdwg.mxu0
    %4944 = vmatpush.bf16.msra.mxu0 %v4214
    %4945 = vmatpush.bf16.msra.mxu0 %v4208
    %4946 = vmatpush.bf16.msra.mxu0 %v4202
    %4947 = vmatpush.bf16.msra.mxu0 %v4196
    %4948 = vmatpush.bf16.msra.mxu0 %v4190
    %4949 = vmatpush.bf16.msra.mxu0 %v4184
    %4950 = vmatpush.bf16.msra.mxu0 %v4178
    %4951 = vmatpush.bf16.msra.mxu0 %v4172
    %4952 = vmatmul.bf16.gmra.mxu0 %v2808
    %v4953 = vpop.f32.mrf.mxu0
    %v4954 = vadd.f32 %v4940, %v4953
    %v4955 = vpop.f32.mrf.mxu0
    %v4956 = vadd.f32 %v4942, %v4955
    %4957 = vdwg.mxu0
    %4958 = vmatpush.bf16.msra.mxu0 %v4262
    %4959 = vmatpush.bf16.msra.mxu0 %v4256
    %4960 = vmatpush.bf16.msra.mxu0 %v4250
    %4961 = vmatpush.bf16.msra.mxu0 %v4244
    %4962 = vmatpush.bf16.msra.mxu0 %v4238
    %4963 = vmatpush.bf16.msra.mxu0 %v4232
    %4964 = vmatpush.bf16.msra.mxu0 %v4226
    %4965 = vmatpush.bf16.msra.mxu0 %v4220
    %4966 = vmatmul.bf16.gmra.mxu0 %v2809
    %v4967 = vpop.f32.mrf.mxu0
    %v4968 = vadd.f32 %v4954, %v4967
    %v4969 = vpop.f32.mrf.mxu0
    %v4970 = vadd.f32 %v4956, %v4969
    %4971 = vdwg.mxu0
    %4972 = vmatpush.bf16.msra.mxu0 %v4023
    %4973 = vmatpush.bf16.msra.mxu0 %v4017
    %4974 = vmatpush.bf16.msra.mxu0 %v4011
    %4975 = vmatpush.bf16.msra.mxu0 %v4005
    %4976 = vmatpush.bf16.msra.mxu0 %v3999
    %4977 = vmatpush.bf16.msra.mxu0 %v3993
    %4978 = vmatpush.bf16.msra.mxu0 %v3987
    %4979 = vmatpush.bf16.msra.mxu0 %v3981
    %4980 = vmatmul.bf16.gmra.mxu0 %v2804
    %v4981 = vpop.f32.mrf.mxu0
    %v4982 = vadd.f32 %v3105, %v4981
    %v4983 = vpop.f32.mrf.mxu0
    %v4984 = vadd.f32 %v3105, %v4983
    %4985 = vdwg.mxu0
    %4986 = vmatpush.bf16.msra.mxu0 %v4071
    %4987 = vmatpush.bf16.msra.mxu0 %v4065
    %4988 = vmatpush.bf16.msra.mxu0 %v4059
    %4989 = vmatpush.bf16.msra.mxu0 %v4053
    %4990 = vmatpush.bf16.msra.mxu0 %v4047
    %4991 = vmatpush.bf16.msra.mxu0 %v4041
    %4992 = vmatpush.bf16.msra.mxu0 %v4035
    %4993 = vmatpush.bf16.msra.mxu0 %v4029
    %4994 = vmatmul.bf16.gmra.mxu0 %v2805
    %v4995 = vpop.f32.mrf.mxu0
    %v4996 = vadd.f32 %v4982, %v4995
    %v4997 = vpop.f32.mrf.mxu0
    %v4998 = vadd.f32 %v4984, %v4997
    %4999 = vdwg.mxu0
    %5000 = vmatpush.bf16.msra.mxu0 %v4119
    %5001 = vmatpush.bf16.msra.mxu0 %v4113
    %5002 = vmatpush.bf16.msra.mxu0 %v4107
    %5003 = vmatpush.bf16.msra.mxu0 %v4101
    %5004 = vmatpush.bf16.msra.mxu0 %v4095
    %5005 = vmatpush.bf16.msra.mxu0 %v4089
    %5006 = vmatpush.bf16.msra.mxu0 %v4083
    %5007 = vmatpush.bf16.msra.mxu0 %v4077
    %5008 = vmatmul.bf16.gmra.mxu0 %v2806
    %v5009 = vpop.f32.mrf.mxu0
    %v5010 = vadd.f32 %v4996, %v5009
    %v5011 = vpop.f32.mrf.mxu0
    %v5012 = vadd.f32 %v4998, %v5011
    %5013 = vdwg.mxu0
    %5014 = vmatpush.bf16.msra.mxu0 %v4167
    %5015 = vmatpush.bf16.msra.mxu0 %v4161
    %5016 = vmatpush.bf16.msra.mxu0 %v4155
    %5017 = vmatpush.bf16.msra.mxu0 %v4149
    %5018 = vmatpush.bf16.msra.mxu0 %v4143
    %5019 = vmatpush.bf16.msra.mxu0 %v4137
    %5020 = vmatpush.bf16.msra.mxu0 %v4131
    %5021 = vmatpush.bf16.msra.mxu0 %v4125
    %5022 = vmatmul.bf16.gmra.mxu0 %v2807
    %v5023 = vpop.f32.mrf.mxu0
    %v5024 = vadd.f32 %v5010, %v5023
    %v5025 = vpop.f32.mrf.mxu0
    %v5026 = vadd.f32 %v5012, %v5025
    %5027 = vdwg.mxu0
    %5028 = vmatpush.bf16.msra.mxu0 %v4215
    %5029 = vmatpush.bf16.msra.mxu0 %v4209
    %5030 = vmatpush.bf16.msra.mxu0 %v4203
    %5031 = vmatpush.bf16.msra.mxu0 %v4197
    %5032 = vmatpush.bf16.msra.mxu0 %v4191
    %5033 = vmatpush.bf16.msra.mxu0 %v4185
    %5034 = vmatpush.bf16.msra.mxu0 %v4179
    %5035 = vmatpush.bf16.msra.mxu0 %v4173
    %5036 = vmatmul.bf16.gmra.mxu0 %v2808
    %v5037 = vpop.f32.mrf.mxu0
    %v5038 = vadd.f32 %v5024, %v5037
    %v5039 = vpop.f32.mrf.mxu0
    %v5040 = vadd.f32 %v5026, %v5039
    %5041 = vdwg.mxu0
    %5042 = vmatpush.bf16.msra.mxu0 %v4263
    %5043 = vmatpush.bf16.msra.mxu0 %v4257
    %5044 = vmatpush.bf16.msra.mxu0 %v4251
    %5045 = vmatpush.bf16.msra.mxu0 %v4245
    %5046 = vmatpush.bf16.msra.mxu0 %v4239
    %5047 = vmatpush.bf16.msra.mxu0 %v4233
    %5048 = vmatpush.bf16.msra.mxu0 %v4227
    %5049 = vmatpush.bf16.msra.mxu0 %v4221
    %5050 = vmatmul.bf16.gmra.mxu0 %v2809
    %v5051 = vpop.f32.mrf.mxu0
    %v5052 = vadd.f32 %v5038, %v5051
    %v5053 = vpop.f32.mrf.mxu0
    %v5054 = vadd.f32 %v5040, %v5053
    %5055 = vdwg.mxu0
    %v5056 = vmax.f32 %v4632, 0.0
    %v5057 = vmax.f32 %v4716, 0.0
    %v5058 = vmax.f32 %v4800, 0.0
    %v5059 = vmax.f32 %v4884, 0.0
    %v5060 = vmax.f32 %v4968, 0.0
    %v5061 = vmax.f32 %v5052, 0.0
    %v5062 = vmax.f32 %v4634, 0.0
    %v5063 = vmax.f32 %v4718, 0.0
    %v5064 = vmax.f32 %v4802, 0.0
    %v5065 = vmax.f32 %v4886, 0.0
    %v5066 = vmax.f32 %v4970, 0.0
    %v5067 = vmax.f32 %v5054, 0.0
    %v5068 = vpack.c.bf16 %v5062, %v5056
    %v5069 = vpack.c.bf16 %v5063, %v5057
    %v5070 = vpack.c.bf16 %v5064, %v5058
    %v5071 = vpack.c.bf16 %v5065, %v5059
    %v5072 = vpack.c.bf16 %v5066, %v5060
    %v5073 = vpack.c.bf16 %v5067, %v5061
    %v5074 = vld [vmem:[#allocation11] sm:$0xf]
    %v5075 = vld [vmem:[#allocation11 + $0x4] sm:$0xf]
    %v5076 = vld [vmem:[#allocation11 + $0x8] sm:$0xf]
    %v5077 = vld [vmem:[#allocation11 + $0xc] sm:$0xf]
    %v5078 = vld [vmem:[#allocation11 + $0x10] sm:$0xf]
    %v5079 = vld [vmem:[#allocation11 + $0x14] sm:$0xf]
    %v5080 = vld [vmem:[#allocation11 + $0x18] sm:$0xf]
    %v5081 = vld [vmem:[#allocation11 + $0x1c] sm:$0xf]
    %v5082 = vld [vmem:[#allocation11 + $0x20] sm:$0xf]
    %v5083 = vld [vmem:[#allocation11 + $0x24] sm:$0xf]
    %v5084 = vld [vmem:[#allocation11 + $0x28] sm:$0xf]
    %v5085 = vld [vmem:[#allocation11 + $0x2c] sm:$0xf]
    %v5086 = vld [vmem:[#allocation11 + $0x30] sm:$0xf]
    %v5087 = vld [vmem:[#allocation11 + $0x34] sm:$0xf]
    %v5088 = vld [vmem:[#allocation11 + $0x38] sm:$0xf]
    %v5089 = vld [vmem:[#allocation11 + $0x3c] sm:$0xf]
    %v5090 = vld [vmem:[#allocation11 + $0x40] sm:$0xf]
    %v5091 = vld [vmem:[#allocation11 + $0x44] sm:$0xf]
    %v5092 = vld [vmem:[#allocation11 + $0x48] sm:$0xf]
    %v5093 = vld [vmem:[#allocation11 + $0x4c] sm:$0xf]
    %v5094 = vld [vmem:[#allocation11 + $0x50] sm:$0xf]
    %v5095 = vld [vmem:[#allocation11 + $0x54] sm:$0xf]
    %v5096 = vld [vmem:[#allocation11 + $0x58] sm:$0xf]
    %v5097 = vld [vmem:[#allocation11 + $0x5c] sm:$0xf]
    %v5098 = vld [vmem:[#allocation11 + $0x60] sm:$0xf]
    %v5099 = vld [vmem:[#allocation11 + $0x64] sm:$0xf]
    %v5100 = vld [vmem:[#allocation11 + $0x68] sm:$0xf]
    %v5101 = vld [vmem:[#allocation11 + $0x6c] sm:$0xf]
    %v5102 = vld [vmem:[#allocation11 + $0x70] sm:$0xf]
    %v5103 = vld [vmem:[#allocation11 + $0x74] sm:$0xf]
    %v5104 = vld [vmem:[#allocation11 + $0x78] sm:$0xf]
    %v5105 = vld [vmem:[#allocation11 + $0x7c] sm:$0xf]
    %v5106 = vld [vmem:[#allocation11 + $0x80] sm:$0xf]
    %v5107 = vld [vmem:[#allocation11 + $0x84] sm:$0xf]
    %v5108 = vld [vmem:[#allocation11 + $0x88] sm:$0xf]
    %v5109 = vld [vmem:[#allocation11 + $0x8c] sm:$0xf]
    %v5110 = vld [vmem:[#allocation11 + $0x90] sm:$0xf]
    %v5111 = vld [vmem:[#allocation11 + $0x94] sm:$0xf]
    %v5112 = vld [vmem:[#allocation11 + $0x98] sm:$0xf]
    %v5113 = vld [vmem:[#allocation11 + $0x9c] sm:$0xf]
    %v5114 = vld [vmem:[#allocation11 + $0xa0] sm:$0xf]
    %v5115 = vld [vmem:[#allocation11 + $0xa4] sm:$0xf]
    %v5116 = vld [vmem:[#allocation11 + $0xa8] sm:$0xf]
    %v5117 = vld [vmem:[#allocation11 + $0xac] sm:$0xf]
    %v5118 = vld [vmem:[#allocation11 + $0xb0] sm:$0xf]
    %v5119 = vld [vmem:[#allocation11 + $0xb4] sm:$0xf]
    %v5120 = vld [vmem:[#allocation11 + $0xb8] sm:$0xf]
    %v5121 = vld [vmem:[#allocation11 + $0xbc] sm:$0xf]
    %v5122 = vld [vmem:[#allocation11 + $0xc0] sm:$0xf]
    %v5123 = vld [vmem:[#allocation11 + $0xc4] sm:$0xf]
    %v5124 = vld [vmem:[#allocation11 + $0xc8] sm:$0xf]
    %v5125 = vld [vmem:[#allocation11 + $0xcc] sm:$0xf]
    %v5126 = vld [vmem:[#allocation11 + $0xd0] sm:$0xf]
    %v5127 = vld [vmem:[#allocation11 + $0xd4] sm:$0xf]
    %v5128 = vld [vmem:[#allocation11 + $0xd8] sm:$0xf]
    %v5129 = vld [vmem:[#allocation11 + $0xdc] sm:$0xf]
    %v5130 = vld [vmem:[#allocation11 + $0xe0] sm:$0xf]
    %v5131 = vld [vmem:[#allocation11 + $0xe4] sm:$0xf]
    %v5132 = vld [vmem:[#allocation11 + $0xe8] sm:$0xf]
    %v5133 = vld [vmem:[#allocation11 + $0xec] sm:$0xf]
    %v5134 = vld [vmem:[#allocation11 + $0xf0] sm:$0xf]
    %v5135 = vld [vmem:[#allocation11 + $0xf4] sm:$0xf]
    %v5136 = vld [vmem:[#allocation11 + $0xf8] sm:$0xf]
    %v5137 = vld [vmem:[#allocation11 + $0xfc] sm:$0xf]
    %v5138 = vld [vmem:[#allocation11 + $0x100] sm:$0xf]
    %v5139 = vld [vmem:[#allocation11 + $0x104] sm:$0xf]
    %v5140 = vld [vmem:[#allocation11 + $0x108] sm:$0xf]
    %v5141 = vld [vmem:[#allocation11 + $0x10c] sm:$0xf]
    %v5142 = vld [vmem:[#allocation11 + $0x110] sm:$0xf]
    %v5143 = vld [vmem:[#allocation11 + $0x114] sm:$0xf]
    %v5144 = vld [vmem:[#allocation11 + $0x118] sm:$0xf]
    %v5145 = vld [vmem:[#allocation11 + $0x11c] sm:$0xf]
    %v5146 = vld [vmem:[#allocation11 + $0x120] sm:$0xf]
    %v5147 = vld [vmem:[#allocation11 + $0x124] sm:$0xf]
    %v5148 = vld [vmem:[#allocation11 + $0x128] sm:$0xf]
    %v5149 = vld [vmem:[#allocation11 + $0x12c] sm:$0xf]
    %v5150 = vld [vmem:[#allocation11 + $0x130] sm:$0xf]
    %v5151 = vld [vmem:[#allocation11 + $0x134] sm:$0xf]
    %v5152 = vld [vmem:[#allocation11 + $0x138] sm:$0xf]
    %v5153 = vld [vmem:[#allocation11 + $0x13c] sm:$0xf]
    %v5154 = vld [vmem:[#allocation11 + $0x140] sm:$0xf]
    %v5155 = vld [vmem:[#allocation11 + $0x144] sm:$0xf]
    %v5156 = vld [vmem:[#allocation11 + $0x148] sm:$0xf]
    %v5157 = vld [vmem:[#allocation11 + $0x14c] sm:$0xf]
    %v5158 = vld [vmem:[#allocation11 + $0x150] sm:$0xf]
    %v5159 = vld [vmem:[#allocation11 + $0x154] sm:$0xf]
    %v5160 = vld [vmem:[#allocation11 + $0x158] sm:$0xf]
    %v5161 = vld [vmem:[#allocation11 + $0x15c] sm:$0xf]
    %v5162 = vld [vmem:[#allocation11 + $0x160] sm:$0xf]
    %v5163 = vld [vmem:[#allocation11 + $0x164] sm:$0xf]
    %v5164 = vld [vmem:[#allocation11 + $0x168] sm:$0xf]
    %v5165 = vld [vmem:[#allocation11 + $0x16c] sm:$0xf]
    %v5166 = vld [vmem:[#allocation11 + $0x170] sm:$0xf]
    %v5167 = vld [vmem:[#allocation11 + $0x174] sm:$0xf]
    %v5168 = vld [vmem:[#allocation11 + $0x178] sm:$0xf]
    %v5169 = vld [vmem:[#allocation11 + $0x17c] sm:$0xf]
    %v5170 = vld [vmem:[#allocation13] sm:$0x1]
    %v5172 = vperm.slane %v5170, 0
    %v5270 = vunpack.c.l.b16 %v5074
    %v5271 = vunpack.c.l.b16 %v5075
    %v5272 = vunpack.c.l.b16 %v5076
    %v5273 = vunpack.c.l.b16 %v5077
    %v5274 = vunpack.c.l.b16 %v5078
    %v5275 = vunpack.c.l.b16 %v5079
    %v5276 = vunpack.c.l.b16 %v5080
    %v5277 = vunpack.c.l.b16 %v5081
    %v5278 = vunpack.c.l.b16 %v5082
    %v5279 = vunpack.c.l.b16 %v5083
    %v5280 = vunpack.c.l.b16 %v5084
    %v5281 = vunpack.c.l.b16 %v5085
    %v5282 = vunpack.c.l.b16 %v5086
    %v5283 = vunpack.c.l.b16 %v5087
    %v5284 = vunpack.c.l.b16 %v5088
    %v5285 = vunpack.c.l.b16 %v5089
    %v5286 = vunpack.c.l.b16 %v5090
    %v5287 = vunpack.c.l.b16 %v5091
    %v5288 = vunpack.c.l.b16 %v5092
    %v5289 = vunpack.c.l.b16 %v5093
    %v5290 = vunpack.c.l.b16 %v5094
    %v5291 = vunpack.c.l.b16 %v5095
    %v5292 = vunpack.c.l.b16 %v5096
    %v5293 = vunpack.c.l.b16 %v5097
    %v5294 = vunpack.c.l.b16 %v5098
    %v5295 = vunpack.c.l.b16 %v5099
    %v5296 = vunpack.c.l.b16 %v5100
    %v5297 = vunpack.c.l.b16 %v5101
    %v5298 = vunpack.c.l.b16 %v5102
    %v5299 = vunpack.c.l.b16 %v5103
    %v5300 = vunpack.c.l.b16 %v5104
    %v5301 = vunpack.c.l.b16 %v5105
    %v5302 = vunpack.c.l.b16 %v5106
    %v5303 = vunpack.c.l.b16 %v5107
    %v5304 = vunpack.c.l.b16 %v5108
    %v5305 = vunpack.c.l.b16 %v5109
    %v5306 = vunpack.c.l.b16 %v5110
    %v5307 = vunpack.c.l.b16 %v5111
    %v5308 = vunpack.c.l.b16 %v5112
    %v5309 = vunpack.c.l.b16 %v5113
    %v5310 = vunpack.c.l.b16 %v5114
    %v5311 = vunpack.c.l.b16 %v5115
    %v5312 = vunpack.c.l.b16 %v5116
    %v5313 = vunpack.c.l.b16 %v5117
    %v5314 = vunpack.c.l.b16 %v5118
    %v5315 = vunpack.c.l.b16 %v5119
    %v5316 = vunpack.c.l.b16 %v5120
    %v5317 = vunpack.c.l.b16 %v5121
    %v5318 = vunpack.c.l.b16 %v5122
    %v5319 = vunpack.c.l.b16 %v5123
    %v5320 = vunpack.c.l.b16 %v5124
    %v5321 = vunpack.c.l.b16 %v5125
    %v5322 = vunpack.c.l.b16 %v5126
    %v5323 = vunpack.c.l.b16 %v5127
    %v5324 = vunpack.c.l.b16 %v5128
    %v5325 = vunpack.c.l.b16 %v5129
    %v5326 = vunpack.c.l.b16 %v5130
    %v5327 = vunpack.c.l.b16 %v5131
    %v5328 = vunpack.c.l.b16 %v5132
    %v5329 = vunpack.c.l.b16 %v5133
    %v5330 = vunpack.c.l.b16 %v5134
    %v5331 = vunpack.c.l.b16 %v5135
    %v5332 = vunpack.c.l.b16 %v5136
    %v5333 = vunpack.c.l.b16 %v5137
    %v5334 = vunpack.c.l.b16 %v5138
    %v5335 = vunpack.c.l.b16 %v5139
    %v5336 = vunpack.c.l.b16 %v5140
    %v5337 = vunpack.c.l.b16 %v5141
    %v5338 = vunpack.c.l.b16 %v5142
    %v5339 = vunpack.c.l.b16 %v5143
    %v5340 = vunpack.c.l.b16 %v5144
    %v5341 = vunpack.c.l.b16 %v5145
    %v5342 = vunpack.c.l.b16 %v5146
    %v5343 = vunpack.c.l.b16 %v5147
    %v5344 = vunpack.c.l.b16 %v5148
    %v5345 = vunpack.c.l.b16 %v5149
    %v5346 = vunpack.c.l.b16 %v5150
    %v5347 = vunpack.c.l.b16 %v5151
    %v5348 = vunpack.c.l.b16 %v5152
    %v5349 = vunpack.c.l.b16 %v5153
    %v5350 = vunpack.c.l.b16 %v5154
    %v5351 = vunpack.c.l.b16 %v5155
    %v5352 = vunpack.c.l.b16 %v5156
    %v5353 = vunpack.c.l.b16 %v5157
    %v5354 = vunpack.c.l.b16 %v5158
    %v5355 = vunpack.c.l.b16 %v5159
    %v5356 = vunpack.c.l.b16 %v5160
    %v5357 = vunpack.c.l.b16 %v5161
    %v5358 = vunpack.c.l.b16 %v5162
    %v5359 = vunpack.c.l.b16 %v5163
    %v5360 = vunpack.c.l.b16 %v5164
    %v5361 = vunpack.c.l.b16 %v5165
    %v5362 = vunpack.c.l.b16 %v5166
    %v5363 = vunpack.c.l.b16 %v5167
    %v5364 = vunpack.c.l.b16 %v5168
    %v5365 = vunpack.c.l.b16 %v5169
    %v5366 = vpack.c.b16 %v5271, %v5270
    %v5367 = vpack.c.b16 %v5273, %v5272
    %v5368 = vpack.c.b16 %v5275, %v5274
    %v5369 = vpack.c.b16 %v5277, %v5276
    %v5370 = vpack.c.b16 %v5279, %v5278
    %v5371 = vpack.c.b16 %v5281, %v5280
    %v5372 = vpack.c.b16 %v5283, %v5282
    %v5373 = vpack.c.b16 %v5285, %v5284
    %v5374 = vpack.c.b16 %v5287, %v5286
    %v5375 = vpack.c.b16 %v5289, %v5288
    %v5376 = vpack.c.b16 %v5291, %v5290
    %v5377 = vpack.c.b16 %v5293, %v5292
    %v5378 = vpack.c.b16 %v5295, %v5294
    %v5379 = vpack.c.b16 %v5297, %v5296
    %v5380 = vpack.c.b16 %v5299, %v5298
    %v5381 = vpack.c.b16 %v5301, %v5300
    %v5382 = vpack.c.b16 %v5303, %v5302
    %v5383 = vpack.c.b16 %v5305, %v5304
    %v5384 = vpack.c.b16 %v5307, %v5306
    %v5385 = vpack.c.b16 %v5309, %v5308
    %v5386 = vpack.c.b16 %v5311, %v5310
    %v5387 = vpack.c.b16 %v5313, %v5312
    %v5388 = vpack.c.b16 %v5315, %v5314
    %v5389 = vpack.c.b16 %v5317, %v5316
    %v5390 = vpack.c.b16 %v5319, %v5318
    %v5391 = vpack.c.b16 %v5321, %v5320
    %v5392 = vpack.c.b16 %v5323, %v5322
    %v5393 = vpack.c.b16 %v5325, %v5324
    %v5394 = vpack.c.b16 %v5327, %v5326
    %v5395 = vpack.c.b16 %v5329, %v5328
    %v5396 = vpack.c.b16 %v5331, %v5330
    %v5397 = vpack.c.b16 %v5333, %v5332
    %v5398 = vpack.c.b16 %v5335, %v5334
    %v5399 = vpack.c.b16 %v5337, %v5336
    %v5400 = vpack.c.b16 %v5339, %v5338
    %v5401 = vpack.c.b16 %v5341, %v5340
    %v5402 = vpack.c.b16 %v5343, %v5342
    %v5403 = vpack.c.b16 %v5345, %v5344
    %v5404 = vpack.c.b16 %v5347, %v5346
    %v5405 = vpack.c.b16 %v5349, %v5348
    %v5406 = vpack.c.b16 %v5351, %v5350
    %v5407 = vpack.c.b16 %v5353, %v5352
    %v5408 = vpack.c.b16 %v5355, %v5354
    %v5409 = vpack.c.b16 %v5357, %v5356
    %v5410 = vpack.c.b16 %v5359, %v5358
    %v5411 = vpack.c.b16 %v5361, %v5360
    %v5412 = vpack.c.b16 %v5363, %v5362
    %v5413 = vpack.c.b16 %v5365, %v5364
    %5462 = vmatpush.bf16.msra.mxu0 %v5373
    %5463 = vmatpush.bf16.msra.mxu0 %v5372
    %5464 = vmatpush.bf16.msra.mxu0 %v5371
    %5465 = vmatpush.bf16.msra.mxu0 %v5370
    %5466 = vmatpush.bf16.msra.mxu0 %v5369
    %5467 = vmatpush.bf16.msra.mxu0 %v5368
    %5468 = vmatpush.bf16.msra.mxu0 %v5367
    %5469 = vmatpush.bf16.msra.mxu0 %v5366
    %5470 = vmatmul.bf16.gmra.mxu0 %v5068
    %v5471 = vpop.f32.mrf.mxu0
    %v5472 = vadd.f32 %v5172, %v5471
    %v5473 = vpop.f32.mrf.mxu0
    %v5474 = vadd.f32 %v5172, %v5473
    %5475 = vdwg.mxu0
    %5476 = vmatpush.bf16.msra.mxu0 %v5381
    %5477 = vmatpush.bf16.msra.mxu0 %v5380
    %5478 = vmatpush.bf16.msra.mxu0 %v5379
    %5479 = vmatpush.bf16.msra.mxu0 %v5378
    %5480 = vmatpush.bf16.msra.mxu0 %v5377
    %5481 = vmatpush.bf16.msra.mxu0 %v5376
    %5482 = vmatpush.bf16.msra.mxu0 %v5375
    %5483 = vmatpush.bf16.msra.mxu0 %v5374
    %5484 = vmatmul.bf16.gmra.mxu0 %v5069
    %v5485 = vpop.f32.mrf.mxu0
    %v5486 = vadd.f32 %v5472, %v5485
    %v5487 = vpop.f32.mrf.mxu0
    %v5488 = vadd.f32 %v5474, %v5487
    %5489 = vdwg.mxu0
    %5490 = vmatpush.bf16.msra.mxu0 %v5389
    %5491 = vmatpush.bf16.msra.mxu0 %v5388
    %5492 = vmatpush.bf16.msra.mxu0 %v5387
    %5493 = vmatpush.bf16.msra.mxu0 %v5386
    %5494 = vmatpush.bf16.msra.mxu0 %v5385
    %5495 = vmatpush.bf16.msra.mxu0 %v5384
    %5496 = vmatpush.bf16.msra.mxu0 %v5383
    %5497 = vmatpush.bf16.msra.mxu0 %v5382
    %5498 = vmatmul.bf16.gmra.mxu0 %v5070
    %v5499 = vpop.f32.mrf.mxu0
    %v5500 = vadd.f32 %v5486, %v5499
    %v5501 = vpop.f32.mrf.mxu0
    %v5502 = vadd.f32 %v5488, %v5501
    %5503 = vdwg.mxu0
    %5504 = vmatpush.bf16.msra.mxu0 %v5397
    %5505 = vmatpush.bf16.msra.mxu0 %v5396
    %5506 = vmatpush.bf16.msra.mxu0 %v5395
    %5507 = vmatpush.bf16.msra.mxu0 %v5394
    %5508 = vmatpush.bf16.msra.mxu0 %v5393
    %5509 = vmatpush.bf16.msra.mxu0 %v5392
    %5510 = vmatpush.bf16.msra.mxu0 %v5391
    %5511 = vmatpush.bf16.msra.mxu0 %v5390
    %5512 = vmatmul.bf16.gmra.mxu0 %v5071
    %v5513 = vpop.f32.mrf.mxu0
    %v5514 = vadd.f32 %v5500, %v5513
    %v5515 = vpop.f32.mrf.mxu0
    %v5516 = vadd.f32 %v5502, %v5515
    %5517 = vdwg.mxu0
    %5518 = vmatpush.bf16.msra.mxu0 %v5405
    %5519 = vmatpush.bf16.msra.mxu0 %v5404
    %5520 = vmatpush.bf16.msra.mxu0 %v5403
    %5521 = vmatpush.bf16.msra.mxu0 %v5402
    %5522 = vmatpush.bf16.msra.mxu0 %v5401
    %5523 = vmatpush.bf16.msra.mxu0 %v5400
    %5524 = vmatpush.bf16.msra.mxu0 %v5399
    %5525 = vmatpush.bf16.msra.mxu0 %v5398
    %5526 = vmatmul.bf16.gmra.mxu0 %v5072
    %v5527 = vpop.f32.mrf.mxu0
    %v5528 = vadd.f32 %v5514, %v5527
    %v5529 = vpop.f32.mrf.mxu0
    %v5530 = vadd.f32 %v5516, %v5529
    %5531 = vdwg.mxu0
    %5532 = vmatpush.bf16.msra.mxu0 %v5413
    %5533 = vmatpush.bf16.msra.mxu0 %v5412
    %5534 = vmatpush.bf16.msra.mxu0 %v5411
    %5535 = vmatpush.bf16.msra.mxu0 %v5410
    %5536 = vmatpush.bf16.msra.mxu0 %v5409
    %5537 = vmatpush.bf16.msra.mxu0 %v5408
    %5538 = vmatpush.bf16.msra.mxu0 %v5407
    %5539 = vmatpush.bf16.msra.mxu0 %v5406
    %5540 = vmatmul.bf16.gmra.mxu0 %v5073
    %v5541 = vpop.f32.mrf.mxu0
    %v5542 = vadd.f32 %v5528, %v5541
    %v5543 = vpop.f32.mrf.mxu0
    %v5544 = vadd.f32 %v5530, %v5543
    %5545 = vdwg.mxu0
    %5546 = vmax.xlane.f32.xlu0 %v5542
    %v5547 = vpop.xlane.xlu0 %5546
    %5548 = vmax.xlane.f32.xlu0 %v5544
    %v5549 = vpop.xlane.xlu0 %5548
    %v5550 = vsub.f32 %v5542, %v5547
    %v5551 = vsub.f32 %v5544, %v5549
    %v5552 = vmul.f32 %v5550, 1.442695
    %v5553 = vpow.pop %v5552
    %v5554 = vmul.f32 %v5551, 1.442695
    %v5555 = vpow.pop %v5554
    %vm5556 = vcmp.lt.s32.totalorder %v136, 4
    %v5557 = vsel %vm5556, %v5553, 0.0
    %v5558 = vsel %vm5556, %v5555, 0.0
    %5559 = vadd.xlane.f32.xlu0 %v5557
    %v5560 = vpop.xlane.xlu0 %5559
    %5561 = vadd.xlane.f32.xlu0 %v5558
    %v5562 = vpop.xlane.xlu0 %5561
    %v5563 = vrcp.pop %v5560
    %v5564 = vmul.f32 %v5560, %v5563
    %v5565 = vsub.f32 1.0, %v5564
    %v5566 = vmul.f32 %v5563, %v5565
    %v5567 = vadd.f32 %v5563, %v5566
    %vm5568 = vweird.f32 %v5560
    %vm5569 = vweird.f32 %v5563
    %vm5570 = vmor %vm5568, %vm5569
    %v5571 = vsel %vm5570, %v5563, %v5567
    %v5572 = vand.u32 2147483647, %v5560
    %vm5573 = vcmp.eq.f32.partialorder %v5572, 8.507059e+37
    %v5574 = vand.u32 %v5560, 2147483648
    %v5575 = vor.u32 1.1754944e-38, %v5574
    %v5576 = vsel %vm5573, %v5575, %v5571
    %v5577 = vmul.f32 %v5553, %v5576
    %v5578 = vrcp.pop %v5562
    %v5579 = vmul.f32 %v5562, %v5578
    %v5580 = vsub.f32 1.0, %v5579
    %v5581 = vmul.f32 %v5578, %v5580
    %v5582 = vadd.f32 %v5578, %v5581
    %vm5583 = vweird.f32 %v5562
    %vm5584 = vweird.f32 %v5578
    %vm5585 = vmor %vm5583, %vm5584
    %v5586 = vsel %vm5585, %v5578, %v5582
    %v5587 = vand.u32 2147483647, %v5562
    %vm5588 = vcmp.eq.f32.partialorder %v5587, 8.507059e+37
    %v5589 = vand.u32 %v5562, 2147483648
    %v5590 = vor.u32 1.1754944e-38, %v5589
    %v5591 = vsel %vm5588, %v5590, %v5586
    %v5592 = vmul.f32 %v5555, %v5591
    %v5593 = vsel %vm5556, %v5542, %v5577
    %v5594 = vsel %vm5556, %v5544, %v5592
    %5595 = vst [vmem:[#allocation14] sm:$0xff] %v5593
    %5596 = vst [vmem:[#allocation14 + $0x8] sm:$0xff] %v5594
    // Predicated region
    $region62: #{tpu_custom_call.1} parent=1 // pred_check
      _
    $region63: #{tpu_custom_call.1} parent=1 // pred_check_branch
      %5598 = sbr.rel (0) target = $region65
    $region64: #{tpu_custom_call.1} parent=1 // pred_region
      %5600 = vsyncadd [#allocation4], 0
      %s5601 = sshll.u32 [#allocation14], 4
      %s5602 = int_to_ptr.vmem [resolvable:$true] %s5601
      %s5603 = sshll.u32 %s8, 4
      %s5604 = int_to_ptr.hbm [resolvable:$true] %s5603
      %5609 = dma.vmem_to_hbm [thread:$0]  %s5602, 256, %s5604, [#allocation4], 128, 128, 8
    $region65: #{tpu_custom_call.1} parent=1 // pred_fallthru
      _
    // Predicated region
    $region66: #{tpu_custom_call.1} parent=1 // pred_check
      _
    $region67: #{tpu_custom_call.1} parent=1 // pred_check_branch
      %5611 = sbr.rel (0) target = $region69
    $region68: #{tpu_custom_call.1} parent=1 // pred_region
      %5613 = dma.done [#allocation4], 256
    $region69: #{tpu_custom_call.1} parent=1 // pred_fallthru
      _
    %5614 = vsyncpa [#allocation3], 1
    %5615 = vsyncpa [#allocation6], 1
    %5616 = vsyncpa [#allocation9], 1
    %5617 = vsyncpa [#allocation12], 1
    %5618 = vsyncpa [#allocation4], 1

</llo_original>
